<compile_context>
chip_gen: v5e
topology: v5e:2x2
jax: 0.10.0
libtpu: 0.0.40
codegen_flags: <defaults>
</compile_context>

<pallas_src>
import numpy as np
import jax
import jax.numpy as jnp
from jax.experimental import pallas as pl
from jax.experimental.pallas import tpu as pltpu


# Sublane-aligned start column of the "interior" inside the padded scratch
# buffers (column _CO-1 and _CO+W are the zero halo; columns < _CO-1 unused).
_CO = 8


# ----------------------------------------------------------------------------
# Kernel helpers
# ----------------------------------------------------------------------------
def _im2col_3x3(src, H, W, C, r0, c0):
    """3x3 im2col: returns (H*W, 9*C), columns ordered (kh, kw, channel).

    `src` may be a VMEM ref (static slices load only the window) or a value.
    Window (kh, kw) covers rows [r0+kh, r0+kh+H) x cols [c0+kw, c0+kw+W).
    """
    cols = []
    for kh in range(3):
        for kw in range(3):
            cols.append(src[r0 + kh:r0 + kh + H,
                            c0 + kw:c0 + kw + W, :].reshape(H * W, C))
    return jnp.concatenate(cols, axis=-1)


# ----------------------------------------------------------------------------
# Fused decoder kernel (one batch element per grid step).
# ----------------------------------------------------------------------------
def _decoder_kernel(x_ref, w1_ref, b1_ref, w3_ref, wr1_ref,
                    w1c_ref, bt1_ref, w2c_ref, bt2_ref,
                    out_ref, pad_b, pad_p):
    f32 = jnp.float32
    cdt = w1_ref.dtype                       # matmul operand dtype (bf16/f32)
    CO = _CO

    H = x_ref.shape[1] - 2
    W = x_ref.shape[2] - 2
    cin = x_ref.shape[3]
    HW = H * W
    nh = w1_ref.shape[1]                     # num_hiddens
    L = w3_ref.shape[0]                      # num_residual_layers
    C1 = w1c_ref.shape[1]                    # 4 * (num_hiddens // 2)
    PW = pad_b.shape[1]
    RW = PW - (CO + W)

    # Zero only the halo of the padded scratch buffers (interior is fully
    # overwritten before every read).  Done every grid step so each megacore
    # core sees a zeroed halo; all stores are sublane-aligned slabs.
    for ref, C in ((pad_b, nh), (pad_p, C1)):
        ref[0, :, :] = jnp.zeros((PW, C), f32)
        ref[H + 1, :, :] = jnp.zeros((PW, C), f32)
        ref[1:H + 1, 0:CO, :] = jnp.zeros((H, CO, C), f32)
        ref[1:H + 1, CO + W:PW, :] = jnp.zeros((H, RW, C), f32)

    # ---- conv_1: 3x3 pad=1 as a single im2col matmul (K = 9*cin) + bias ----
    xin = x_ref[0]                                        # (H+2, W+2, cin)
    a0 = _im2col_3x3(xin, H, W, cin, 0, 0).astype(cdt)    # (HW, 9*cin)
    x = jnp.dot(a0, w1_ref[...], preferred_element_type=f32) + b1_ref[...]

    def stage_relu_im2col(v):
        """ReLU, stage into the padded VMEM buffer, return (HW, 9*nh) im2col."""
        pad_b[1:1 + H, CO:CO + W, :] = jnp.maximum(v, 0.0).reshape(H, W, nh)
        return _im2col_3x3(pad_b, H, W, nh, 0, CO - 1).astype(cdt)

    # ---- residual stack: x += Conv1x1(ReLU(Conv3x3(ReLU(x)))) --------------
    for l in range(L):
        a3 = stage_relu_im2col(x)                         # (HW, 9*nh)
        h = jnp.maximum(jnp.dot(a3, w3_ref[l], preferred_element_type=f32),
                        0.0)
        x = x + jnp.dot(h.astype(cdt), wr1_ref[l], preferred_element_type=f32)

    # ---- final stack ReLU + conv_trans_1: all 4 polyphase outputs folded
    #      into the matmul N dim (K = 9*nh, N = 4*nh2); bias + ReLU fused ----
    a1 = stage_relu_im2col(x)
    ph = jnp.maximum(
        jnp.dot(a1, w1c_ref[...], preferred_element_type=f32) + bt1_ref[...],
        0.0)                                              # (HW, 4*nh2)
    pad_p[1:1 + H, CO:CO + W, :] = ph.reshape(H, W, C1)

    # ---- conv_trans_2: 16 composed output phases folded into N
    #      (K = 36*nh2, N = 16*out_ch); single lane-dense output store -------
    a2 = _im2col_3x3(pad_p, H, W, C1, 0, CO - 1).astype(cdt)
    y = jnp.dot(a2, w2c_ref[...], preferred_element_type=f32) + bt2_ref[...]
    out_ref[0, :, :] = y.astype(out_ref.dtype)            # (HW, 16*out_ch)


# ----------------------------------------------------------------------------
# Wrapper: one fused pallas_call for the whole decoder.
# ----------------------------------------------------------------------------
def decoder_forward_pallas(prep, x_nchw):
    x = jnp.transpose(x_nchw, (0, 2, 3, 1)).astype(jnp.float32)   # NCHW->NHWC
    B, H, W, cin = x.shape
    assert W % 8 == 0, "width must be a multiple of 8 for aligned staging"
    x_pad = jnp.pad(x, ((0, 0), (1, 1), (1, 1), (0, 0)))          # tiny pad

    nh = prep["w1"].shape[1]
    C1 = prep["w1c"].shape[1]                  # 4 * nh2
    out_ch = prep["w2c"].shape[1] // 16
    PW = ((_CO + W + 1) + 7) // 8 * 8          # padded scratch width

    def whole(arr):
        n = arr.ndim
        return pl.BlockSpec(arr.shape, lambda b, n=n: (0,) * n)

    out = pl.pallas_call(
        _decoder_kernel,
        out_shape=jax.ShapeDtypeStruct((B, H * W, 16 * out_ch), jnp.float32),
        grid=(B,),
        in_specs=[
            pl.BlockSpec((1, H + 2, W + 2, cin), lambda b: (b, 0, 0, 0)),
            whole(prep["w1"]), whole(prep["b1"]),
            whole(prep["w3"]), whole(prep["wr1"]),
            whole(prep["w1c"]), whole(prep["bt1"]),
            whole(prep["w2c"]), whole(prep["bt2"]),
        ],
        out_specs=pl.BlockSpec((1, H * W, 16 * out_ch), lambda b: (b, 0, 0)),
        scratch_shapes=[
            pltpu.VMEM((H + 2, PW, nh), jnp.float32),   # padded activation buf
            pltpu.VMEM((H + 2, PW, C1), jnp.float32),   # padded ct1 phase slab
        ],
        compiler_params=pltpu.CompilerParams(
            dimension_semantics=("parallel",),
            vmem_limit_bytes=32 * 1024 * 1024),
    )(x_pad, prep["w1"], prep["b1"], prep["w3"], prep["wr1"],
      prep["w1c"], prep["bt1"], prep["w2c"], prep["bt2"])

    # (B, HW, 16*out_ch) -> (B, H, W, qr, qc, C) -> NCHW (B, C, 4H, 4W)
    out = out.reshape(B, H, W, 4, 4, out_ch)
    out = jnp.transpose(out, (0, 5, 1, 3, 2, 4)).reshape(B, out_ch, 4 * H, 4 * W)
    return out


# ----------------------------------------------------------------------------
# Parameters: PyTorch-layout init + one-time kernel-layout preparation.
# ----------------------------------------------------------------------------
def init_decoder_params(key, in_ch, out_ch, num_hid, num_res_layers, num_res_hid):
    keys = jax.random.split(key, 6 + 2 * num_res_layers)
    k = iter(keys)
    scale = 0.1
    p = {}
    p["conv1_w"] = scale * jax.random.normal(next(k), (num_hid, in_ch, 3, 3), jnp.float32)
    p["conv1_b"] = scale * jax.random.normal(next(k), (num_hid,), jnp.float32)
    p["res"] = []
    for _ in range(num_res_layers):
        w3 = scale * jax.random.normal(next(k), (num_res_hid, num_hid, 3, 3), jnp.float32)
        w1 = scale * jax.random.normal(next(k), (num_hid, num_res_hid, 1, 1), jnp.float32)
        p["res"].append((w3, w1))
    p["ct1_w"] = scale * jax.random.normal(next(k), (num_hid, num_hid // 2, 4, 4), jnp.float32)
    p["ct1_b"] = scale * jax.random.normal(next(k), (num_hid // 2,), jnp.float32)
    p["ct2_w"] = scale * jax.random.normal(next(k), (num_hid // 2, out_ch, 4, 4), jnp.float32)
    p["ct2_b"] = scale * jax.random.normal(next(k), (out_ch,), jnp.float32)
    return p


def _poly_taps(w_iohw):
    """(Cin, Cout, 4, 4) ConvTranspose(4,2,1) weight -> polyphase taps.

    Output phase (r, c), tap (dh, dw) uses kernel element (3-r-2dh, 3-c-2dw):
        y[2i+r, 2j+c] = sum_{dh,dw} x[i+r+dh-1, j+c+dw-1] @ taps[(r,c,dh,dw)]
    """
    w = np.transpose(np.asarray(w_iohw, np.float32), (2, 3, 0, 1))  # (kh,kw,Ci,Co)
    sel = ((3, 1), (2, 0))
    return {(r, c, dh, dw): w[sel[r][dh], sel[c][dw]]
            for r in range(2) for c in range(2)
            for dh in range(2) for dw in range(2)}


def _ct1_composite(w_iohw):
    """Composite (9*Cin, 4*Cout) weight: 3x3 im2col of the (padded) input
    produces all 4 ct1 output phases in one matmul; rows (kh,kw,Cin),
    columns (r,c,Cout) -> phase p = 2r+c occupies column block p."""
    Cin, Cout = w_iohw.shape[0], w_iohw.shape[1]
    taps = _poly_taps(w_iohw)
    Wc = np.zeros((3, 3, Cin, 2, 2, Cout), np.float32)
    for r in range(2):
        for c in range(2):
            for dh in range(2):
                for dw in range(2):
                    Wc[r + dh, c + dw, :, r, c, :] += taps[(r, c, dh, dw)]
    return Wc.reshape(9 * Cin, 4 * Cout)


def _ct2_composite(w_iohw):
    """Composite (36*Cin, 16*Cout) weight: 3x3 im2col of the padded ct1 phase
    slab (channels ordered (p1=2*r1+c1, Cin)) produces all 16 composed output
    phases q = 4*(2s+r2) + (2t+c2) in one matmul (structural zeros where a
    phase doesn't use a tap)."""
    Cin, Cout = w_iohw.shape[0], w_iohw.shape[1]
    taps = _poly_taps(w_iohw)
    Wc = np.zeros((3, 3, 2, 2, Cin, 2, 2, 2, 2, Cout), np.float32)
    for s in range(2):
        for r2 in range(2):
            for t in range(2):
                for c2 in range(2):
                    for dh in range(2):
                        for dw in range(2):
                            a = s + r2 + dh - 1
                            b = t + c2 + dw - 1
                            fa, r1 = a // 2, a % 2
                            fb, c1 = b // 2, b % 2
                            Wc[fa + 1, fb + 1, r1, c1, :,
                               s, r2, t, c2, :] += taps[(r2, c2, dh, dw)]
    return Wc.reshape(36 * Cin, 16 * Cout)


def prepare_params(raw, compute_dtype=jnp.bfloat16):
    """One-time relayout of PyTorch-style weights into kernel form.

    compute_dtype is the matmul-operand dtype (bf16 for full MXU rate;
    float32 keeps the original numerics).  Biases stay f32 (post-accum add).
    """
    cd = compute_dtype
    f32 = jnp.float32
    nh = raw["conv1_w"].shape[0]
    cin = raw["conv1_w"].shape[1]
    nh2 = raw["ct1_w"].shape[1]
    out_ch = raw["ct2_w"].shape[1]

    w1 = np.transpose(np.asarray(raw["conv1_w"]), (2, 3, 1, 0)).reshape(9 * cin, nh)
    prep = {
        "w1": jnp.asarray(w1, dtype=cd),
        "b1": jnp.asarray(np.asarray(raw["conv1_b"]).reshape(1, nh), dtype=f32),
    }
    w3s, wr1s = [], []
    for (w3, w1x1) in raw["res"]:
        w3s.append(np.transpose(np.asarray(w3), (2, 3, 1, 0)).reshape(9 * nh, -1))
        wr1s.append(np.transpose(np.asarray(w1x1)[:, :, 0, 0], (1, 0)))
    prep["w3"] = jnp.asarray(np.stack(w3s, 0), dtype=cd)      # (L, 9*nh, nrh)
    prep["wr1"] = jnp.asarray(np.stack(wr1s, 0), dtype=cd)    # (L, nrh, nh)

    prep["w1c"] = jnp.asarray(_ct1_composite(raw["ct1_w"]), dtype=cd)  # (9*nh, 4*nh2)
    prep["bt1"] = jnp.asarray(np.tile(np.asarray(raw["ct1_b"]), 4).reshape(1, 4 * nh2),
                              dtype=f32)
    prep["w2c"] = jnp.asarray(_ct2_composite(raw["ct2_w"]), dtype=cd)  # (36*nh2, 16*oc)
    prep["bt2"] = jnp.asarray(np.tile(np.asarray(raw["ct2_b"]), 16).reshape(1, 16 * out_ch),
                              dtype=f32)
    return prep


# ----------------------------------------------------------------------------
# Pure-JAX references.
# ----------------------------------------------------------------------------
def decoder_reference(raw, x_nchw):
    """Ground-truth reference: lax convs at HIGHEST precision (PyTorch semantics)."""
    P = jax.lax.Precision.HIGHEST
    dn = ("NHWC", "HWIO", "NHWC")

    def conv(x, w_oihw, pad):
        w = jnp.transpose(w_oihw, (2, 3, 1, 0))
        return jax.lax.conv_general_dilated(
            x, w, window_strides=(1, 1), padding=[(pad, pad), (pad, pad)],
            dimension_numbers=dn, precision=P)

    def convT(x, w_iohw):
        w = jnp.transpose(jnp.flip(w_iohw, (2, 3)), (2, 3, 0, 1))
        return jax.lax.conv_general_dilated(
            x, w, window_strides=(1, 1), padding=[(2, 2), (2, 2)],
            lhs_dilation=(2, 2), dimension_numbers=dn, precision=P)

    x = jnp.transpose(x_nchw, (0, 2, 3, 1)).astype(jnp.float32)
    x = conv(x, raw["conv1_w"], 1) + raw["conv1_b"]
    for (w3, w1) in raw["res"]:
        h = conv(jax.nn.relu(x), w3, 1)
        x = x + conv(jax.nn.relu(h), w1, 0)
    x = jax.nn.relu(x)
    x = jax.nn.relu(convT(x, raw["ct1_w"]) + raw["ct1_b"])
    x = convT(x, raw["ct2_w"]) + raw["ct2_b"]
    return jnp.transpose(x, (0, 3, 1, 2))


def decoder_emulation(prep, x_nchw):
    """Numerics-matched reference: same prepared/composite weights, same
    operand dtype and f32 accumulation as the kernel -> differences vs the
    kernel are only f32 accumulation order (~1e-5)."""
    f32 = jnp.float32
    cd = prep["w1"].dtype
    x = jnp.transpose(x_nchw, (0, 2, 3, 1)).astype(f32)
    B, H, W, _ = x.shape
    HW = H * W

    def im2col(xp):  # xp: (B, H+2, W+2, C) -> (B, HW, 9*C), cols (kh, kw, C)
        cols = [xp[:, kh:kh + H, kw:kw + W, :].reshape(B, HW, -1)
                for kh in range(3) for kw in range(3)]
        return jnp.concatenate(cols, axis=-1)

    def pad_hw(v):  # (B, HW, C) -> (B, H+2, W+2, C) zero-padded
        return jnp.pad(v.reshape(B, H, W, -1), ((0, 0), (1, 1), (1, 1), (0, 0)))

    def dot(a, w):
        return jnp.dot(a.astype(cd).reshape(B * HW, a.shape[-1]), w,
                       preferred_element_type=f32).reshape(B, HW, -1)

    a0 = im2col(jnp.pad(x, ((0, 0), (1, 1), (1, 1), (0, 0))))
    h = dot(a0, prep["w1"]) + prep["b1"]
    for l in range(prep["w3"].shape[0]):
        a3 = im2col(pad_hw(jnp.maximum(h, 0.0)))
        r = jnp.maximum(dot(a3, prep["w3"][l]), 0.0)
        h = h + dot(r, prep["wr1"][l])
    a1 = im2col(pad_hw(jnp.maximum(h, 0.0)))
    ph = jnp.maximum(dot(a1, prep["w1c"]) + prep["bt1"], 0.0)
    a2 = im2col(pad_hw(ph))
    y = dot(a2, prep["w2c"]) + prep["bt2"]               # (B, HW, 16*out_ch)
    out_ch = prep["w2c"].shape[1] // 16
    y = y.reshape(B, H, W, 4, 4, out_ch)
    return jnp.transpose(y, (0, 5, 1, 3, 2, 4)).reshape(B, out_ch, 4 * H, 4 * W)


# ----------------------------------------------------------------------------
if __name__ == "__main__":
    B, IN_CH, OUT_CH = 2, 8, 3
    NUM_HID, NUM_RES_LAYERS, NUM_RES_HID = 32, 2, 16
    H = W = 8

    key = jax.random.PRNGKey(0)
    kp, kx = jax.random.split(key)
    raw = init_decoder_params(kp, IN_CH, OUT_CH, NUM_HID, NUM_RES_LAYERS, NUM_RES_HID)
    x = jax.random.normal(kx, (B, IN_CH, H, W), jnp.float32)      # NCHW

    expected_shape = (B, OUT_CH, 4 * H, 4 * W)
    ref = jax.block_until_ready(decoder_reference(raw, x))
    assert ref.shape == expected_shape

    fwd = jax.jit(decoder_forward_pallas)
    emu = jax.jit(decoder_emulation)

    # --- primary (perf) configuration: bf16 matmul operands, f32 accumulation
    prep16 = prepare_params(raw, compute_dtype=jnp.bfloat16)
    out16 = jax.block_until_ready(fwd(prep16, x))
    assert out16.shape == expected_shape, (out16.shape, expected_shape)
    assert bool(jnp.all(jnp.isfinite(out16)))

    # Tight guard of all in-kernel index math / staging / output layout:
    # compare against the numerics-matched emulation (same bf16 operands).
    err_tight = float(jnp.max(jnp.abs(out16 - jax.block_until_ready(emu(prep16, x)))))
    assert err_tight < 1e-3, f"kernel vs numerics-matched emulation: {err_tight}"

    # Semantic guard against the true (PyTorch-equivalent) decoder; the bound
    # reflects bf16 operand rounding through 7 stacked matmuls.
    err_ref16 = float(jnp.max(jnp.abs(out16 - ref)))
    assert err_ref16 < 5e-2, f"bf16 kernel vs f32 conv reference: {err_ref16}"

    # --- f32-operand path (kept available for closer parity with PyTorch) ---
    prep32 = prepare_params(raw, compute_dtype=jnp.float32)
    out32 = jax.block_until_ready(fwd(prep32, x))
    err_ref32 = float(jnp.max(jnp.abs(out32 - ref)))
    assert err_ref32 < 5e-2, f"f32 kernel vs f32 conv reference: {err_ref32}"

    print("KERNEL_OK")
</pallas_src>

<mosaic_0001>
module attributes {stable_mosaic.version = 11 : i64} {
  func.func @_decoder_kernel(%arg0: i32, %arg1: memref<1x10x10x8xf32, #tpu.memory_space<vmem>>, %arg2: memref<72x32xbf16, #tpu.memory_space<vmem>>, %arg3: memref<1x32xf32, #tpu.memory_space<vmem>>, %arg4: memref<2x288x16xbf16, #tpu.memory_space<vmem>>, %arg5: memref<2x16x32xbf16, #tpu.memory_space<vmem>>, %arg6: memref<288x64xbf16, #tpu.memory_space<vmem>>, %arg7: memref<1x64xf32, #tpu.memory_space<vmem>>, %arg8: memref<576x48xbf16, #tpu.memory_space<vmem>>, %arg9: memref<1x48xf32, #tpu.memory_space<vmem>>, %arg10: memref<1x64x48xf32, #tpu.memory_space<vmem>>, %arg11: memref<10x24x32xf32, #tpu.memory_space<vmem>>, %arg12: memref<10x24x64xf32, #tpu.memory_space<vmem>>) attributes {dimension_semantics = [#tpu.dimension_semantics<parallel>], iteration_bounds = array<i64: 2>, scalar_prefetch = 0 : i64, scratch_operands = 2 : i64, tpu.core_type = #tpu.core_type<tc>, window_params = [{transform_indices = @transform_0, window_bounds = array<i64: 1, 10, 10, 8>}, {pipeline_mode = #tpu.pipeline_mode<synchronous>, transform_indices = @transform_1, window_bounds = array<i64: 72, 32>}, {pipeline_mode = #tpu.pipeline_mode<synchronous>, transform_indices = @transform_2, window_bounds = array<i64: 1, 32>}, {pipeline_mode = #tpu.pipeline_mode<synchronous>, transform_indices = @transform_3, window_bounds = array<i64: 2, 288, 16>}, {pipeline_mode = #tpu.pipeline_mode<synchronous>, transform_indices = @transform_4, window_bounds = array<i64: 2, 16, 32>}, {pipeline_mode = #tpu.pipeline_mode<synchronous>, transform_indices = @transform_5, window_bounds = array<i64: 288, 64>}, {pipeline_mode = #tpu.pipeline_mode<synchronous>, transform_indices = @transform_6, window_bounds = array<i64: 1, 64>}, {pipeline_mode = #tpu.pipeline_mode<synchronous>, transform_indices = @transform_7, window_bounds = array<i64: 576, 48>}, {pipeline_mode = #tpu.pipeline_mode<synchronous>, transform_indices = @transform_8, window_bounds = array<i64: 1, 48>}, {transform_indices = @transform_9, window_bounds = array<i64: 1, 64, 48>}]} {
    %cst = arith.constant 0.000000e+00 : f32
    %0 = vector.broadcast %cst : f32 to vector<24x32xf32>
    %c0 = arith.constant 0 : index
    %c0_0 = arith.constant 0 : index
    %c0_1 = arith.constant 0 : index
    %1 = vector.load %arg11[%c0, %c0_0, %c0_1] : memref<10x24x32xf32, #tpu.memory_space<vmem>>, vector<1x24x32xf32>
    %2 = vector.shape_cast %1 : vector<1x24x32xf32> to vector<24x32xf32>
    %3 = vector.shape_cast %0 : vector<24x32xf32> to vector<1x24x32xf32>
    tpu.vector_store %arg11[%c0, %c0_0, %c0_1], %3 {strides = array<i32>} : memref<10x24x32xf32, #tpu.memory_space<vmem>>, vector<1x24x32xf32>,
    %cst_2 = arith.constant 0.000000e+00 : f32
    %4 = vector.broadcast %cst_2 : f32 to vector<24x32xf32>
    %c9 = arith.constant 9 : index
    %c0_3 = arith.constant 0 : index
    %c0_4 = arith.constant 0 : index
    %5 = vector.load %arg11[%c9, %c0_3, %c0_4] : memref<10x24x32xf32, #tpu.memory_space<vmem>>, vector<1x24x32xf32>
    %6 = vector.shape_cast %5 : vector<1x24x32xf32> to vector<24x32xf32>
    %7 = vector.shape_cast %4 : vector<24x32xf32> to vector<1x24x32xf32>
    tpu.vector_store %arg11[%c9, %c0_3, %c0_4], %7 {strides = array<i32>} : memref<10x24x32xf32, #tpu.memory_space<vmem>>, vector<1x24x32xf32>,
    %cst_5 = arith.constant 0.000000e+00 : f32
    %8 = vector.broadcast %cst_5 : f32 to vector<8x8x32xf32>
    %c1 = arith.constant 1 : index
    %c0_6 = arith.constant 0 : index
    %c0_7 = arith.constant 0 : index
    %9 = vector.load %arg11[%c1, %c0_6, %c0_7] : memref<10x24x32xf32, #tpu.memory_space<vmem>>, vector<8x8x32xf32>
    tpu.vector_store %arg11[%c1, %c0_6, %c0_7], %8 {strides = array<i32>} : memref<10x24x32xf32, #tpu.memory_space<vmem>>, vector<8x8x32xf32>,
    %cst_8 = arith.constant 0.000000e+00 : f32
    %10 = vector.broadcast %cst_8 : f32 to vector<8x8x32xf32>
    %c1_9 = arith.constant 1 : index
    %c16 = arith.constant 16 : index
    %c0_10 = arith.constant 0 : index
    %11 = vector.load %arg11[%c1_9, %c16, %c0_10] : memref<10x24x32xf32, #tpu.memory_space<vmem>>, vector<8x8x32xf32>
    tpu.vector_store %arg11[%c1_9, %c16, %c0_10], %10 {strides = array<i32>} : memref<10x24x32xf32, #tpu.memory_space<vmem>>, vector<8x8x32xf32>,
    %cst_11 = arith.constant 0.000000e+00 : f32
    %12 = vector.broadcast %cst_11 : f32 to vector<24x64xf32>
    %c0_12 = arith.constant 0 : index
    %c0_13 = arith.constant 0 : index
    %c0_14 = arith.constant 0 : index
    %13 = vector.load %arg12[%c0_12, %c0_13, %c0_14] : memref<10x24x64xf32, #tpu.memory_space<vmem>>, vector<1x24x64xf32>
    %14 = vector.shape_cast %13 : vector<1x24x64xf32> to vector<24x64xf32>
    %15 = vector.shape_cast %12 : vector<24x64xf32> to vector<1x24x64xf32>
    tpu.vector_store %arg12[%c0_12, %c0_13, %c0_14], %15 {strides = array<i32>} : memref<10x24x64xf32, #tpu.memory_space<vmem>>, vector<1x24x64xf32>,
    %cst_15 = arith.constant 0.000000e+00 : f32
    %16 = vector.broadcast %cst_15 : f32 to vector<24x64xf32>
    %c9_16 = arith.constant 9 : index
    %c0_17 = arith.constant 0 : index
    %c0_18 = arith.constant 0 : index
    %17 = vector.load %arg12[%c9_16, %c0_17, %c0_18] : memref<10x24x64xf32, #tpu.memory_space<vmem>>, vector<1x24x64xf32>
    %18 = vector.shape_cast %17 : vector<1x24x64xf32> to vector<24x64xf32>
    %19 = vector.shape_cast %16 : vector<24x64xf32> to vector<1x24x64xf32>
    tpu.vector_store %arg12[%c9_16, %c0_17, %c0_18], %19 {strides = array<i32>} : memref<10x24x64xf32, #tpu.memory_space<vmem>>, vector<1x24x64xf32>,
    %cst_19 = arith.constant 0.000000e+00 : f32
    %20 = vector.broadcast %cst_19 : f32 to vector<8x8x64xf32>
    %c1_20 = arith.constant 1 : index
    %c0_21 = arith.constant 0 : index
    %c0_22 = arith.constant 0 : index
    %21 = vector.load %arg12[%c1_20, %c0_21, %c0_22] : memref<10x24x64xf32, #tpu.memory_space<vmem>>, vector<8x8x64xf32>
    tpu.vector_store %arg12[%c1_20, %c0_21, %c0_22], %20 {strides = array<i32>} : memref<10x24x64xf32, #tpu.memory_space<vmem>>, vector<8x8x64xf32>,
    %cst_23 = arith.constant 0.000000e+00 : f32
    %22 = vector.broadcast %cst_23 : f32 to vector<8x8x64xf32>
    %c1_24 = arith.constant 1 : index
    %c16_25 = arith.constant 16 : index
    %c0_26 = arith.constant 0 : index
    %23 = vector.load %arg12[%c1_24, %c16_25, %c0_26] : memref<10x24x64xf32, #tpu.memory_space<vmem>>, vector<8x8x64xf32>
    tpu.vector_store %arg12[%c1_24, %c16_25, %c0_26], %22 {strides = array<i32>} : memref<10x24x64xf32, #tpu.memory_space<vmem>>, vector<8x8x64xf32>,
    %c0_27 = arith.constant 0 : index
    %c0_28 = arith.constant 0 : index
    %c0_29 = arith.constant 0 : index
    %c0_30 = arith.constant 0 : index
    %24 = vector.load %arg1[%c0_27, %c0_28, %c0_29, %c0_30] : memref<1x10x10x8xf32, #tpu.memory_space<vmem>>, vector<1x10x10x8xf32>
    %25 = vector.shape_cast %24 : vector<1x10x10x8xf32> to vector<10x10x8xf32>
    %26 = vector.extract_strided_slice %25 {offsets = [0, 0, 0], sizes = [8, 8, 8], strides = [1, 1, 1]} : vector<10x10x8xf32> to vector<8x8x8xf32>
    %27 = vector.shape_cast %26 : vector<8x8x8xf32> to vector<64x8xf32>
    %28 = vector.extract_strided_slice %25 {offsets = [0, 1, 0], sizes = [8, 8, 8], strides = [1, 1, 1]} : vector<10x10x8xf32> to vector<8x8x8xf32>
    %29 = vector.shape_cast %28 : vector<8x8x8xf32> to vector<64x8xf32>
    %30 = vector.extract_strided_slice %25 {offsets = [0, 2, 0], sizes = [8, 8, 8], strides = [1, 1, 1]} : vector<10x10x8xf32> to vector<8x8x8xf32>
    %31 = vector.shape_cast %30 : vector<8x8x8xf32> to vector<64x8xf32>
    %32 = vector.extract_strided_slice %25 {offsets = [1, 0, 0], sizes = [8, 8, 8], strides = [1, 1, 1]} : vector<10x10x8xf32> to vector<8x8x8xf32>
    %33 = vector.shape_cast %32 : vector<8x8x8xf32> to vector<64x8xf32>
    %34 = vector.extract_strided_slice %25 {offsets = [1, 1, 0], sizes = [8, 8, 8], strides = [1, 1, 1]} : vector<10x10x8xf32> to vector<8x8x8xf32>
    %35 = vector.shape_cast %34 : vector<8x8x8xf32> to vector<64x8xf32>
    %36 = vector.extract_strided_slice %25 {offsets = [1, 2, 0], sizes = [8, 8, 8], strides = [1, 1, 1]} : vector<10x10x8xf32> to vector<8x8x8xf32>
    %37 = vector.shape_cast %36 : vector<8x8x8xf32> to vector<64x8xf32>
    %38 = vector.extract_strided_slice %25 {offsets = [2, 0, 0], sizes = [8, 8, 8], strides = [1, 1, 1]} : vector<10x10x8xf32> to vector<8x8x8xf32>
    %39 = vector.shape_cast %38 : vector<8x8x8xf32> to vector<64x8xf32>
    %40 = vector.extract_strided_slice %25 {offsets = [2, 1, 0], sizes = [8, 8, 8], strides = [1, 1, 1]} : vector<10x10x8xf32> to vector<8x8x8xf32>
    %41 = vector.shape_cast %40 : vector<8x8x8xf32> to vector<64x8xf32>
    %42 = vector.extract_strided_slice %25 {offsets = [2, 2, 0], sizes = [8, 8, 8], strides = [1, 1, 1]} : vector<10x10x8xf32> to vector<8x8x8xf32>
    %43 = vector.shape_cast %42 : vector<8x8x8xf32> to vector<64x8xf32>
    %44 = tpu.concatenate %27, %29, %31, %33, %35, %37, %39, %41, %43 in 1 : vector<64x8xf32>, vector<64x8xf32>, vector<64x8xf32>, vector<64x8xf32>, vector<64x8xf32>, vector<64x8xf32>, vector<64x8xf32>, vector<64x8xf32>, vector<64x8xf32> -> vector<64x72xf32>
    %45 = arith.truncf %44 : vector<64x72xf32> to vector<64x72xbf16>
    %c0_31 = arith.constant 0 : index
    %c0_32 = arith.constant 0 : index
    %46 = vector.load %arg2[%c0_31, %c0_32] : memref<72x32xbf16, #tpu.memory_space<vmem>>, vector<72x32xbf16>
    %cst_33 = arith.constant dense<0.000000e+00> : vector<64x32xf32>
    %47 = tpu.matmul %45, %46, %cst_33 {dimension_numbers = #tpu.dot_dimension_numbers<[1], [0], [0], [1], [0, 0, 1, 1], [], []>} : vector<64x72xbf16>, vector<72x32xbf16>, vector<64x32xf32> -> vector<64x32xf32>
    %c0_34 = arith.constant 0 : index
    %c0_35 = arith.constant 0 : index
    %48 = vector.load %arg3[%c0_34, %c0_35] : memref<1x32xf32, #tpu.memory_space<vmem>>, vector<1x32xf32>
    %49 = vector.broadcast %48 : vector<1x32xf32> to vector<64x32xf32>
    %50 = arith.addf %47, %49 : vector<64x32xf32>
    %cst_36 = arith.constant 0.000000e+00 : f32
    %51 = vector.broadcast %cst_36 : f32 to vector<64x32xf32>
    %52 = arith.maximumf %50, %51 : vector<64x32xf32>
    %53 = vector.shape_cast %52 : vector<64x32xf32> to vector<8x8x32xf32>
    %c1_37 = arith.constant 1 : index
    %c8 = arith.constant 8 : index
    %c0_38 = arith.constant 0 : index
    %54 = vector.load %arg11[%c1_37, %c8, %c0_38] : memref<10x24x32xf32, #tpu.memory_space<vmem>>, vector<8x8x32xf32>
    tpu.vector_store %arg11[%c1_37, %c8, %c0_38], %53 {strides = array<i32>} : memref<10x24x32xf32, #tpu.memory_space<vmem>>, vector<8x8x32xf32>,
    %c0_39 = arith.constant 0 : index
    %c7 = arith.constant 7 : index
    %c0_40 = arith.constant 0 : index
    %55 = vector.load %arg11[%c0_39, %c7, %c0_40] : memref<10x24x32xf32, #tpu.memory_space<vmem>>, vector<8x8x32xf32>
    %56 = vector.shape_cast %55 : vector<8x8x32xf32> to vector<64x32xf32>
    %c0_41 = arith.constant 0 : index
    %c8_42 = arith.constant 8 : index
    %c0_43 = arith.constant 0 : index
    %57 = vector.load %arg11[%c0_41, %c8_42, %c0_43] : memref<10x24x32xf32, #tpu.memory_space<vmem>>, vector<8x8x32xf32>
    %58 = vector.shape_cast %57 : vector<8x8x32xf32> to vector<64x32xf32>
    %c0_44 = arith.constant 0 : index
    %c9_45 = arith.constant 9 : index
    %c0_46 = arith.constant 0 : index
    %59 = vector.load %arg11[%c0_44, %c9_45, %c0_46] : memref<10x24x32xf32, #tpu.memory_space<vmem>>, vector<8x8x32xf32>
    %60 = vector.shape_cast %59 : vector<8x8x32xf32> to vector<64x32xf32>
    %c1_47 = arith.constant 1 : index
    %c7_48 = arith.constant 7 : index
    %c0_49 = arith.constant 0 : index
    %61 = vector.load %arg11[%c1_47, %c7_48, %c0_49] : memref<10x24x32xf32, #tpu.memory_space<vmem>>, vector<8x8x32xf32>
    %62 = vector.shape_cast %61 : vector<8x8x32xf32> to vector<64x32xf32>
    %c1_50 = arith.constant 1 : index
    %c8_51 = arith.constant 8 : index
    %c0_52 = arith.constant 0 : index
    %63 = vector.load %arg11[%c1_50, %c8_51, %c0_52] : memref<10x24x32xf32, #tpu.memory_space<vmem>>, vector<8x8x32xf32>
    %64 = vector.shape_cast %63 : vector<8x8x32xf32> to vector<64x32xf32>
    %c1_53 = arith.constant 1 : index
    %c9_54 = arith.constant 9 : index
    %c0_55 = arith.constant 0 : index
    %65 = vector.load %arg11[%c1_53, %c9_54, %c0_55] : memref<10x24x32xf32, #tpu.memory_space<vmem>>, vector<8x8x32xf32>
    %66 = vector.shape_cast %65 : vector<8x8x32xf32> to vector<64x32xf32>
    %c2 = arith.constant 2 : index
    %c7_56 = arith.constant 7 : index
    %c0_57 = arith.constant 0 : index
    %67 = vector.load %arg11[%c2, %c7_56, %c0_57] : memref<10x24x32xf32, #tpu.memory_space<vmem>>, vector<8x8x32xf32>
    %68 = vector.shape_cast %67 : vector<8x8x32xf32> to vector<64x32xf32>
    %c2_58 = arith.constant 2 : index
    %c8_59 = arith.constant 8 : index
    %c0_60 = arith.constant 0 : index
    %69 = vector.load %arg11[%c2_58, %c8_59, %c0_60] : memref<10x24x32xf32, #tpu.memory_space<vmem>>, vector<8x8x32xf32>
    %70 = vector.shape_cast %69 : vector<8x8x32xf32> to vector<64x32xf32>
    %c2_61 = arith.constant 2 : index
    %c9_62 = arith.constant 9 : index
    %c0_63 = arith.constant 0 : index
    %71 = vector.load %arg11[%c2_61, %c9_62, %c0_63] : memref<10x24x32xf32, #tpu.memory_space<vmem>>, vector<8x8x32xf32>
    %72 = vector.shape_cast %71 : vector<8x8x32xf32> to vector<64x32xf32>
    %73 = tpu.concatenate %56, %58, %60, %62, %64, %66, %68, %70, %72 in 1 : vector<64x32xf32>, vector<64x32xf32>, vector<64x32xf32>, vector<64x32xf32>, vector<64x32xf32>, vector<64x32xf32>, vector<64x32xf32>, vector<64x32xf32>, vector<64x32xf32> -> vector<64x288xf32>
    %74 = arith.truncf %73 : vector<64x288xf32> to vector<64x288xbf16>
    %c0_64 = arith.constant 0 : index
    %c0_65 = arith.constant 0 : index
    %c0_66 = arith.constant 0 : index
    %75 = vector.load %arg4[%c0_64, %c0_65, %c0_66] : memref<2x288x16xbf16, #tpu.memory_space<vmem>>, vector<1x288x16xbf16>
    %76 = vector.shape_cast %75 : vector<1x288x16xbf16> to vector<288x16xbf16>
    %cst_67 = arith.constant dense<0.000000e+00> : vector<64x16xf32>
    %77 = tpu.matmul %74, %76, %cst_67 {dimension_numbers = #tpu.dot_dimension_numbers<[1], [0], [0], [1], [0, 0, 1, 1], [], []>} : vector<64x288xbf16>, vector<288x16xbf16>, vector<64x16xf32> -> vector<64x16xf32>
    %cst_68 = arith.constant 0.000000e+00 : f32
    %78 = vector.broadcast %cst_68 : f32 to vector<64x16xf32>
    %79 = arith.maximumf %77, %78 : vector<64x16xf32>
    %80 = arith.truncf %79 : vector<64x16xf32> to vector<64x16xbf16>
    %c0_69 = arith.constant 0 : index
    %c0_70 = arith.constant 0 : index
    %c0_71 = arith.constant 0 : index
    %81 = vector.load %arg5[%c0_69, %c0_70, %c0_71] : memref<2x16x32xbf16, #tpu.memory_space<vmem>>, vector<1x16x32xbf16>
    %82 = vector.shape_cast %81 : vector<1x16x32xbf16> to vector<16x32xbf16>
    %cst_72 = arith.constant dense<0.000000e+00> : vector<64x32xf32>
    %83 = tpu.matmul %80, %82, %cst_72 {dimension_numbers = #tpu.dot_dimension_numbers<[1], [0], [0], [1], [0, 0, 1, 1], [], []>} : vector<64x16xbf16>, vector<16x32xbf16>, vector<64x32xf32> -> vector<64x32xf32>
    %84 = arith.addf %50, %83 : vector<64x32xf32>
    %cst_73 = arith.constant 0.000000e+00 : f32
    %85 = vector.broadcast %cst_73 : f32 to vector<64x32xf32>
    %86 = arith.maximumf %84, %85 : vector<64x32xf32>
    %87 = vector.shape_cast %86 : vector<64x32xf32> to vector<8x8x32xf32>
    %c1_74 = arith.constant 1 : index
    %c8_75 = arith.constant 8 : index
    %c0_76 = arith.constant 0 : index
    %88 = vector.load %arg11[%c1_74, %c8_75, %c0_76] : memref<10x24x32xf32, #tpu.memory_space<vmem>>, vector<8x8x32xf32>
    tpu.vector_store %arg11[%c1_74, %c8_75, %c0_76], %87 {strides = array<i32>} : memref<10x24x32xf32, #tpu.memory_space<vmem>>, vector<8x8x32xf32>,
    %c0_77 = arith.constant 0 : index
    %c7_78 = arith.constant 7 : index
    %c0_79 = arith.constant 0 : index
    %89 = vector.load %arg11[%c0_77, %c7_78, %c0_79] : memref<10x24x32xf32, #tpu.memory_space<vmem>>, vector<8x8x32xf32>
    %90 = vector.shape_cast %89 : vector<8x8x32xf32> to vector<64x32xf32>
    %c0_80 = arith.constant 0 : index
    %c8_81 = arith.constant 8 : index
    %c0_82 = arith.constant 0 : index
    %91 = vector.load %arg11[%c0_80, %c8_81, %c0_82] : memref<10x24x32xf32, #tpu.memory_space<vmem>>, vector<8x8x32xf32>
    %92 = vector.shape_cast %91 : vector<8x8x32xf32> to vector<64x32xf32>
    %c0_83 = arith.constant 0 : index
    %c9_84 = arith.constant 9 : index
    %c0_85 = arith.constant 0 : index
    %93 = vector.load %arg11[%c0_83, %c9_84, %c0_85] : memref<10x24x32xf32, #tpu.memory_space<vmem>>, vector<8x8x32xf32>
    %94 = vector.shape_cast %93 : vector<8x8x32xf32> to vector<64x32xf32>
    %c1_86 = arith.constant 1 : index
    %c7_87 = arith.constant 7 : index
    %c0_88 = arith.constant 0 : index
    %95 = vector.load %arg11[%c1_86, %c7_87, %c0_88] : memref<10x24x32xf32, #tpu.memory_space<vmem>>, vector<8x8x32xf32>
    %96 = vector.shape_cast %95 : vector<8x8x32xf32> to vector<64x32xf32>
    %c1_89 = arith.constant 1 : index
    %c8_90 = arith.constant 8 : index
    %c0_91 = arith.constant 0 : index
    %97 = vector.load %arg11[%c1_89, %c8_90, %c0_91] : memref<10x24x32xf32, #tpu.memory_space<vmem>>, vector<8x8x32xf32>
    %98 = vector.shape_cast %97 : vector<8x8x32xf32> to vector<64x32xf32>
    %c1_92 = arith.constant 1 : index
    %c9_93 = arith.constant 9 : index
    %c0_94 = arith.constant 0 : index
    %99 = vector.load %arg11[%c1_92, %c9_93, %c0_94] : memref<10x24x32xf32, #tpu.memory_space<vmem>>, vector<8x8x32xf32>
    %100 = vector.shape_cast %99 : vector<8x8x32xf32> to vector<64x32xf32>
    %c2_95 = arith.constant 2 : index
    %c7_96 = arith.constant 7 : index
    %c0_97 = arith.constant 0 : index
    %101 = vector.load %arg11[%c2_95, %c7_96, %c0_97] : memref<10x24x32xf32, #tpu.memory_space<vmem>>, vector<8x8x32xf32>
    %102 = vector.shape_cast %101 : vector<8x8x32xf32> to vector<64x32xf32>
    %c2_98 = arith.constant 2 : index
    %c8_99 = arith.constant 8 : index
    %c0_100 = arith.constant 0 : index
    %103 = vector.load %arg11[%c2_98, %c8_99, %c0_100] : memref<10x24x32xf32, #tpu.memory_space<vmem>>, vector<8x8x32xf32>
    %104 = vector.shape_cast %103 : vector<8x8x32xf32> to vector<64x32xf32>
    %c2_101 = arith.constant 2 : index
    %c9_102 = arith.constant 9 : index
    %c0_103 = arith.constant 0 : index
    %105 = vector.load %arg11[%c2_101, %c9_102, %c0_103] : memref<10x24x32xf32, #tpu.memory_space<vmem>>, vector<8x8x32xf32>
    %106 = vector.shape_cast %105 : vector<8x8x32xf32> to vector<64x32xf32>
    %107 = tpu.concatenate %90, %92, %94, %96, %98, %100, %102, %104, %106 in 1 : vector<64x32xf32>, vector<64x32xf32>, vector<64x32xf32>, vector<64x32xf32>, vector<64x32xf32>, vector<64x32xf32>, vector<64x32xf32>, vector<64x32xf32>, vector<64x32xf32> -> vector<64x288xf32>
    %108 = arith.truncf %107 : vector<64x288xf32> to vector<64x288xbf16>
    %c1_104 = arith.constant 1 : index
    %c0_105 = arith.constant 0 : index
    %c0_106 = arith.constant 0 : index
    %109 = vector.load %arg4[%c1_104, %c0_105, %c0_106] : memref<2x288x16xbf16, #tpu.memory_space<vmem>>, vector<1x288x16xbf16>
    %110 = vector.shape_cast %109 : vector<1x288x16xbf16> to vector<288x16xbf16>
    %cst_107 = arith.constant dense<0.000000e+00> : vector<64x16xf32>
    %111 = tpu.matmul %108, %110, %cst_107 {dimension_numbers = #tpu.dot_dimension_numbers<[1], [0], [0], [1], [0, 0, 1, 1], [], []>} : vector<64x288xbf16>, vector<288x16xbf16>, vector<64x16xf32> -> vector<64x16xf32>
    %cst_108 = arith.constant 0.000000e+00 : f32
    %112 = vector.broadcast %cst_108 : f32 to vector<64x16xf32>
    %113 = arith.maximumf %111, %112 : vector<64x16xf32>
    %114 = arith.truncf %113 : vector<64x16xf32> to vector<64x16xbf16>
    %c1_109 = arith.constant 1 : index
    %c0_110 = arith.constant 0 : index
    %c0_111 = arith.constant 0 : index
    %115 = vector.load %arg5[%c1_109, %c0_110, %c0_111] : memref<2x16x32xbf16, #tpu.memory_space<vmem>>, vector<1x16x32xbf16>
    %116 = vector.shape_cast %115 : vector<1x16x32xbf16> to vector<16x32xbf16>
    %cst_112 = arith.constant dense<0.000000e+00> : vector<64x32xf32>
    %117 = tpu.matmul %114, %116, %cst_112 {dimension_numbers = #tpu.dot_dimension_numbers<[1], [0], [0], [1], [0, 0, 1, 1], [], []>} : vector<64x16xbf16>, vector<16x32xbf16>, vector<64x32xf32> -> vector<64x32xf32>
    %118 = arith.addf %84, %117 : vector<64x32xf32>
    %cst_113 = arith.constant 0.000000e+00 : f32
    %119 = vector.broadcast %cst_113 : f32 to vector<64x32xf32>
    %120 = arith.maximumf %118, %119 : vector<64x32xf32>
    %121 = vector.shape_cast %120 : vector<64x32xf32> to vector<8x8x32xf32>
    %c1_114 = arith.constant 1 : index
    %c8_115 = arith.constant 8 : index
    %c0_116 = arith.constant 0 : index
    %122 = vector.load %arg11[%c1_114, %c8_115, %c0_116] : memref<10x24x32xf32, #tpu.memory_space<vmem>>, vector<8x8x32xf32>
    tpu.vector_store %arg11[%c1_114, %c8_115, %c0_116], %121 {strides = array<i32>} : memref<10x24x32xf32, #tpu.memory_space<vmem>>, vector<8x8x32xf32>,
    %c0_117 = arith.constant 0 : index
    %c7_118 = arith.constant 7 : index
    %c0_119 = arith.constant 0 : index
    %123 = vector.load %arg11[%c0_117, %c7_118, %c0_119] : memref<10x24x32xf32, #tpu.memory_space<vmem>>, vector<8x8x32xf32>
    %124 = vector.shape_cast %123 : vector<8x8x32xf32> to vector<64x32xf32>
    %c0_120 = arith.constant 0 : index
    %c8_121 = arith.constant 8 : index
    %c0_122 = arith.constant 0 : index
    %125 = vector.load %arg11[%c0_120, %c8_121, %c0_122] : memref<10x24x32xf32, #tpu.memory_space<vmem>>, vector<8x8x32xf32>
    %126 = vector.shape_cast %125 : vector<8x8x32xf32> to vector<64x32xf32>
    %c0_123 = arith.constant 0 : index
    %c9_124 = arith.constant 9 : index
    %c0_125 = arith.constant 0 : index
    %127 = vector.load %arg11[%c0_123, %c9_124, %c0_125] : memref<10x24x32xf32, #tpu.memory_space<vmem>>, vector<8x8x32xf32>
    %128 = vector.shape_cast %127 : vector<8x8x32xf32> to vector<64x32xf32>
    %c1_126 = arith.constant 1 : index
    %c7_127 = arith.constant 7 : index
    %c0_128 = arith.constant 0 : index
    %129 = vector.load %arg11[%c1_126, %c7_127, %c0_128] : memref<10x24x32xf32, #tpu.memory_space<vmem>>, vector<8x8x32xf32>
    %130 = vector.shape_cast %129 : vector<8x8x32xf32> to vector<64x32xf32>
    %c1_129 = arith.constant 1 : index
    %c8_130 = arith.constant 8 : index
    %c0_131 = arith.constant 0 : index
    %131 = vector.load %arg11[%c1_129, %c8_130, %c0_131] : memref<10x24x32xf32, #tpu.memory_space<vmem>>, vector<8x8x32xf32>
    %132 = vector.shape_cast %131 : vector<8x8x32xf32> to vector<64x32xf32>
    %c1_132 = arith.constant 1 : index
    %c9_133 = arith.constant 9 : index
    %c0_134 = arith.constant 0 : index
    %133 = vector.load %arg11[%c1_132, %c9_133, %c0_134] : memref<10x24x32xf32, #tpu.memory_space<vmem>>, vector<8x8x32xf32>
    %134 = vector.shape_cast %133 : vector<8x8x32xf32> to vector<64x32xf32>
    %c2_135 = arith.constant 2 : index
    %c7_136 = arith.constant 7 : index
    %c0_137 = arith.constant 0 : index
    %135 = vector.load %arg11[%c2_135, %c7_136, %c0_137] : memref<10x24x32xf32, #tpu.memory_space<vmem>>, vector<8x8x32xf32>
    %136 = vector.shape_cast %135 : vector<8x8x32xf32> to vector<64x32xf32>
    %c2_138 = arith.constant 2 : index
    %c8_139 = arith.constant 8 : index
    %c0_140 = arith.constant 0 : index
    %137 = vector.load %arg11[%c2_138, %c8_139, %c0_140] : memref<10x24x32xf32, #tpu.memory_space<vmem>>, vector<8x8x32xf32>
    %138 = vector.shape_cast %137 : vector<8x8x32xf32> to vector<64x32xf32>
    %c2_141 = arith.constant 2 : index
    %c9_142 = arith.constant 9 : index
    %c0_143 = arith.constant 0 : index
    %139 = vector.load %arg11[%c2_141, %c9_142, %c0_143] : memref<10x24x32xf32, #tpu.memory_space<vmem>>, vector<8x8x32xf32>
    %140 = vector.shape_cast %139 : vector<8x8x32xf32> to vector<64x32xf32>
    %141 = tpu.concatenate %124, %126, %128, %130, %132, %134, %136, %138, %140 in 1 : vector<64x32xf32>, vector<64x32xf32>, vector<64x32xf32>, vector<64x32xf32>, vector<64x32xf32>, vector<64x32xf32>, vector<64x32xf32>, vector<64x32xf32>, vector<64x32xf32> -> vector<64x288xf32>
    %142 = arith.truncf %141 : vector<64x288xf32> to vector<64x288xbf16>
    %c0_144 = arith.constant 0 : index
    %c0_145 = arith.constant 0 : index
    %143 = vector.load %arg6[%c0_144, %c0_145] : memref<288x64xbf16, #tpu.memory_space<vmem>>, vector<288x64xbf16>
    %cst_146 = arith.constant dense<0.000000e+00> : vector<64x64xf32>
    %144 = tpu.matmul %142, %143, %cst_146 {dimension_numbers = #tpu.dot_dimension_numbers<[1], [0], [0], [1], [0, 0, 1, 1], [], []>} : vector<64x288xbf16>, vector<288x64xbf16>, vector<64x64xf32> -> vector<64x64xf32>
    %c0_147 = arith.constant 0 : index
    %c0_148 = arith.constant 0 : index
    %145 = vector.load %arg7[%c0_147, %c0_148] : memref<1x64xf32, #tpu.memory_space<vmem>>, vector<1x64xf32>
    %146 = vector.broadcast %145 : vector<1x64xf32> to vector<64x64xf32>
    %147 = arith.addf %144, %146 : vector<64x64xf32>
    %cst_149 = arith.constant 0.000000e+00 : f32
    %148 = vector.broadcast %cst_149 : f32 to vector<64x64xf32>
    %149 = arith.maximumf %147, %148 : vector<64x64xf32>
    %150 = vector.shape_cast %149 : vector<64x64xf32> to vector<8x8x64xf32>
    %c1_150 = arith.constant 1 : index
    %c8_151 = arith.constant 8 : index
    %c0_152 = arith.constant 0 : index
    %151 = vector.load %arg12[%c1_150, %c8_151, %c0_152] : memref<10x24x64xf32, #tpu.memory_space<vmem>>, vector<8x8x64xf32>
    tpu.vector_store %arg12[%c1_150, %c8_151, %c0_152], %150 {strides = array<i32>} : memref<10x24x64xf32, #tpu.memory_space<vmem>>, vector<8x8x64xf32>,
    %c0_153 = arith.constant 0 : index
    %c7_154 = arith.constant 7 : index
    %c0_155 = arith.constant 0 : index
    %152 = vector.load %arg12[%c0_153, %c7_154, %c0_155] : memref<10x24x64xf32, #tpu.memory_space<vmem>>, vector<8x8x64xf32>
    %153 = vector.shape_cast %152 : vector<8x8x64xf32> to vector<64x64xf32>
    %c0_156 = arith.constant 0 : index
    %c8_157 = arith.constant 8 : index
    %c0_158 = arith.constant 0 : index
    %154 = vector.load %arg12[%c0_156, %c8_157, %c0_158] : memref<10x24x64xf32, #tpu.memory_space<vmem>>, vector<8x8x64xf32>
    %155 = vector.shape_cast %154 : vector<8x8x64xf32> to vector<64x64xf32>
    %c0_159 = arith.constant 0 : index
    %c9_160 = arith.constant 9 : index
    %c0_161 = arith.constant 0 : index
    %156 = vector.load %arg12[%c0_159, %c9_160, %c0_161] : memref<10x24x64xf32, #tpu.memory_space<vmem>>, vector<8x8x64xf32>
    %157 = vector.shape_cast %156 : vector<8x8x64xf32> to vector<64x64xf32>
    %c1_162 = arith.constant 1 : index
    %c7_163 = arith.constant 7 : index
    %c0_164 = arith.constant 0 : index
    %158 = vector.load %arg12[%c1_162, %c7_163, %c0_164] : memref<10x24x64xf32, #tpu.memory_space<vmem>>, vector<8x8x64xf32>
    %159 = vector.shape_cast %158 : vector<8x8x64xf32> to vector<64x64xf32>
    %c1_165 = arith.constant 1 : index
    %c8_166 = arith.constant 8 : index
    %c0_167 = arith.constant 0 : index
    %160 = vector.load %arg12[%c1_165, %c8_166, %c0_167] : memref<10x24x64xf32, #tpu.memory_space<vmem>>, vector<8x8x64xf32>
    %161 = vector.shape_cast %160 : vector<8x8x64xf32> to vector<64x64xf32>
    %c1_168 = arith.constant 1 : index
    %c9_169 = arith.constant 9 : index
    %c0_170 = arith.constant 0 : index
    %162 = vector.load %arg12[%c1_168, %c9_169, %c0_170] : memref<10x24x64xf32, #tpu.memory_space<vmem>>, vector<8x8x64xf32>
    %163 = vector.shape_cast %162 : vector<8x8x64xf32> to vector<64x64xf32>
    %c2_171 = arith.constant 2 : index
    %c7_172 = arith.constant 7 : index
    %c0_173 = arith.constant 0 : index
    %164 = vector.load %arg12[%c2_171, %c7_172, %c0_173] : memref<10x24x64xf32, #tpu.memory_space<vmem>>, vector<8x8x64xf32>
    %165 = vector.shape_cast %164 : vector<8x8x64xf32> to vector<64x64xf32>
    %c2_174 = arith.constant 2 : index
    %c8_175 = arith.constant 8 : index
    %c0_176 = arith.constant 0 : index
    %166 = vector.load %arg12[%c2_174, %c8_175, %c0_176] : memref<10x24x64xf32, #tpu.memory_space<vmem>>, vector<8x8x64xf32>
    %167 = vector.shape_cast %166 : vector<8x8x64xf32> to vector<64x64xf32>
    %c2_177 = arith.constant 2 : index
    %c9_178 = arith.constant 9 : index
    %c0_179 = arith.constant 0 : index
    %168 = vector.load %arg12[%c2_177, %c9_178, %c0_179] : memref<10x24x64xf32, #tpu.memory_space<vmem>>, vector<8x8x64xf32>
    %169 = vector.shape_cast %168 : vector<8x8x64xf32> to vector<64x64xf32>
    %170 = tpu.concatenate %153, %155, %157, %159, %161, %163, %165, %167, %169 in 1 : vector<64x64xf32>, vector<64x64xf32>, vector<64x64xf32>, vector<64x64xf32>, vector<64x64xf32>, vector<64x64xf32>, vector<64x64xf32>, vector<64x64xf32>, vector<64x64xf32> -> vector<64x576xf32>
    %171 = arith.truncf %170 : vector<64x576xf32> to vector<64x576xbf16>
    %c0_180 = arith.constant 0 : index
    %c0_181 = arith.constant 0 : index
    %172 = vector.load %arg8[%c0_180, %c0_181] : memref<576x48xbf16, #tpu.memory_space<vmem>>, vector<576x48xbf16>
    %cst_182 = arith.constant dense<0.000000e+00> : vector<64x48xf32>
    %173 = tpu.matmul %171, %172, %cst_182 {dimension_numbers = #tpu.dot_dimension_numbers<[1], [0], [0], [1], [0, 0, 1, 1], [], []>} : vector<64x576xbf16>, vector<576x48xbf16>, vector<64x48xf32> -> vector<64x48xf32>
    %c0_183 = arith.constant 0 : index
    %c0_184 = arith.constant 0 : index
    %174 = vector.load %arg9[%c0_183, %c0_184] : memref<1x48xf32, #tpu.memory_space<vmem>>, vector<1x48xf32>
    %175 = vector.broadcast %174 : vector<1x48xf32> to vector<64x48xf32>
    %176 = arith.addf %173, %175 : vector<64x48xf32>
    %c0_185 = arith.constant 0 : index
    %c0_186 = arith.constant 0 : index
    %c0_187 = arith.constant 0 : index
    %177 = vector.load %arg10[%c0_185, %c0_186, %c0_187] : memref<1x64x48xf32, #tpu.memory_space<vmem>>, vector<1x64x48xf32>
    %178 = vector.shape_cast %177 : vector<1x64x48xf32> to vector<64x48xf32>
    %179 = vector.shape_cast %176 : vector<64x48xf32> to vector<1x64x48xf32>
    tpu.vector_store %arg10[%c0_185, %c0_186, %c0_187], %179 {strides = array<i32>} : memref<1x64x48xf32, #tpu.memory_space<vmem>>, vector<1x64x48xf32>,
    return
  }
  func.func @transform_0(%arg0: i32) -> (i32, i32, i32, i32) {
    %c0_i32 = arith.constant 0 : i32
    %c0_i32_0 = arith.constant 0 : i32
    %c0_i32_1 = arith.constant 0 : i32
    %c0_i32_2 = arith.constant 0 : i32
    return %arg0, %c0_i32, %c0_i32_0, %c0_i32_1 : i32, i32, i32, i32
  }
  func.func @transform_1(%arg0: i32) -> (i32, i32) {
    %c0_i32 = arith.constant 0 : i32
    %c0_i32_0 = arith.constant 0 : i32
    %c0_i32_1 = arith.constant 0 : i32
    return %c0_i32, %c0_i32_0 : i32, i32
  }
  func.func @transform_2(%arg0: i32) -> (i32, i32) {
    %c0_i32 = arith.constant 0 : i32
    %c0_i32_0 = arith.constant 0 : i32
    %c0_i32_1 = arith.constant 0 : i32
    return %c0_i32, %c0_i32_0 : i32, i32
  }
  func.func @transform_3(%arg0: i32) -> (i32, i32, i32) {
    %c0_i32 = arith.constant 0 : i32
    %c0_i32_0 = arith.constant 0 : i32
    %c0_i32_1 = arith.constant 0 : i32
    %c0_i32_2 = arith.constant 0 : i32
    return %c0_i32, %c0_i32_0, %c0_i32_1 : i32, i32, i32
  }
  func.func @transform_4(%arg0: i32) -> (i32, i32, i32) {
    %c0_i32 = arith.constant 0 : i32
    %c0_i32_0 = arith.constant 0 : i32
    %c0_i32_1 = arith.constant 0 : i32
    %c0_i32_2 = arith.constant 0 : i32
    return %c0_i32, %c0_i32_0, %c0_i32_1 : i32, i32, i32
  }
  func.func @transform_5(%arg0: i32) -> (i32, i32) {
    %c0_i32 = arith.constant 0 : i32
    %c0_i32_0 = arith.constant 0 : i32
    %c0_i32_1 = arith.constant 0 : i32
    return %c0_i32, %c0_i32_0 : i32, i32
  }
  func.func @transform_6(%arg0: i32) -> (i32, i32) {
    %c0_i32 = arith.constant 0 : i32
    %c0_i32_0 = arith.constant 0 : i32
    %c0_i32_1 = arith.constant 0 : i32
    return %c0_i32, %c0_i32_0 : i32, i32
  }
  func.func @transform_7(%arg0: i32) -> (i32, i32) {
    %c0_i32 = arith.constant 0 : i32
    %c0_i32_0 = arith.constant 0 : i32
    %c0_i32_1 = arith.constant 0 : i32
    return %c0_i32, %c0_i32_0 : i32, i32
  }
  func.func @transform_8(%arg0: i32) -> (i32, i32) {
    %c0_i32 = arith.constant 0 : i32
    %c0_i32_0 = arith.constant 0 : i32
    %c0_i32_1 = arith.constant 0 : i32
    return %c0_i32, %c0_i32_0 : i32, i32
  }
  func.func @transform_9(%arg0: i32) -> (i32, i32, i32) {
    %c0_i32 = arith.constant 0 : i32
    %c0_i32_0 = arith.constant 0 : i32
    %c0_i32_1 = arith.constant 0 : i32
    return %arg0, %c0_i32, %c0_i32_0 : i32, i32, i32
  }
}

</mosaic_0001>

<llo_original>
// kernel: decoder_forward_pallas.1
$region0: #{decoder_forward_pallas.1}
  #allocation0 [shape = 'u32[]', space=smem, size = 0x4, offset = 0x4, fixed_abs, tag = 'smem constant byte address 0x4 - core index']
  #allocation1 [shape = 'u32[72,128]{1,0:T(1,128)}', space=vmem, size = 0x9000, scoped, tag = 'internal scratch']
  #allocation2 [shape = 'f32[10,24,32]{2,1,0:T(8,128)}', space=vmem, size = 0x1e000, scoped, tag = 'scratch operand']
  #allocation3 [shape = 'f32[10,24,64]{2,1,0:T(8,128)}', space=vmem, size = 0x1e000, scoped, tag = 'scratch operand']
  %s0 = inlined_call_operand.vmem [shape: f32[2,10,10,8], index: 0, kind: input, shape index: {}]
  %s1 = inlined_call_operand.vmem [shape: bf16[72,32], index: 1, kind: input, shape index: {}]
  %s2 = inlined_call_operand.vmem [shape: f32[1,32], index: 2, kind: input, shape index: {}]
  %s3 = inlined_call_operand.vmem [shape: bf16[2,288,16], index: 3, kind: input, shape index: {}]
  %s4 = inlined_call_operand.vmem [shape: bf16[2,16,32], index: 4, kind: input, shape index: {}]
  %s5 = inlined_call_operand.vmem [shape: bf16[288,64], index: 5, kind: input, shape index: {}]
  %s6 = inlined_call_operand.vmem [shape: f32[1,64], index: 6, kind: input, shape index: {}]
  %s7 = inlined_call_operand.vmem [shape: bf16[576,48], index: 7, kind: input, shape index: {}]
  %s8 = inlined_call_operand.vmem [shape: f32[1,48], index: 8, kind: input, shape index: {}]
  %s9 = inlined_call_operand.vmem [shape: f32[2,64,48], index: 9, kind: output, shape index: {}]
  %s10 = sld [smem:[#allocation0]]
  $region69: #{decoder_forward_pallas.1} parent=0
    _
  %s12 = ssub.s32 1, %s10
  %s13 = scalar_select 0, %s12, %s10
  loop: start=0, step=1, limit=4
  $region2: #{decoder_forward_pallas.1} parent=0 // loop_pre_header
    _
  $region3: #{decoder_forward_pallas.1} parent=0 // loop_header
    %s15 = sphi 0, %s19
    %p16 = scmp.ge.s32.totalorder %s15, 4
    %s25 = sphi 0, %s27
    %s28 = sphi 0, %s25
    %s29 = sphi 0, %s28
    %s45 = sphi 0, %s29
    %s49 = sphi 0, %s49
    %s51 = sphi 0, %s49
    %s52 = sphi 0, %s51
    %s66 = sphi 0, %s52
    %s70 = sphi 0, %s70
    %s72 = sphi 0, %s70
    %s73 = sphi 0, %s72
    %s87 = sphi 0, %s73
    %s91 = sphi 0, %s91
    %s93 = sphi 0, %s91
    %s94 = sphi 0, %s93
    %s108 = sphi 0, %s94
    %s112 = sphi 0, %s112
    %s114 = sphi 0, %s112
    %s115 = sphi 0, %s114
    %s129 = sphi 0, %s115
    %s133 = sphi 0, %s133
    %s135 = sphi 0, %s133
    %s136 = sphi 0, %s135
    %s150 = sphi 0, %s136
    %s154 = sphi 0, %s154
    %s156 = sphi 0, %s154
    %s157 = sphi 0, %s156
    %s171 = sphi 0, %s157
    %s175 = sphi 0, %s175
    %s177 = sphi 0, %s175
    %s178 = sphi 0, %s177
    %s192 = sphi 0, %s178
    %s196 = sphi 0, %s196
    %s198 = sphi 0, %s196
    %s199 = sphi 0, %s198
    %s213 = sphi 0, %s199
    %s219 = sphi 0, %s221
    %s222 = sphi 0, %s219
    %s223 = sphi 0, %s222
    %s239 = sphi 0, %s223
  $region4: #{decoder_forward_pallas.1} parent=0 // loop_header_branch
    %18 = sbr.rel (%p16) target = $region8
  $region5: #{decoder_forward_pallas.1} parent=0 // loop_body
    %s20 = ssub.s32 %s15, 1
    %s21 = ssub.s32 %s15, 2
    %s22 = sadd.s32 %s15, 1
    %s23 = ssub.s32 %s15, %s22
    %p24 = scmp.eq.s32.totalorder %s23, 0
    %s26 = sadd.s32 %s25, 1
    %s27 = scalar_select %p24, %s25, %s26
    %p30 = pneg %p24
    %p31 = scmp.eq.s32.totalorder %s15, 1
    %p32 = por %p30, %p31
    %p33 = scmp.ne.s32.totalorder %s25, %s28
    %p34 = scmp.eq.s32.totalorder %s15, 0
    %p35 = por %p33, %p34
    %p36 = scmp.ne.s32.totalorder %s25, %s28
    %p37 = scmp.eq.s32.totalorder %s20, 1
    %p38 = por %p36, %p37
    %p39 = scmp.ne.s32.totalorder %s28, %s29
    %p40 = scmp.eq.s32.totalorder %s20, 0
    %p41 = por %p39, %p40
    %p42 = scmp.ne.s32.totalorder %s28, %s29
    %p43 = scmp.eq.s32.totalorder %s21, 1
    %p44 = por %p42, %p43
    %p46 = scmp.ne.s32.totalorder %s29, %s45
    %p47 = scmp.eq.s32.totalorder %s21, 0
    %p48 = por %p46, %p47
    %s50 = sadd.s32 %s49, 1
    %p53 = scmp.eq.s32.totalorder %s15, 1
    %p54 = scmp.ne.s32.totalorder %s49, %s51
    %p55 = scmp.eq.s32.totalorder %s15, 0
    %p56 = por %p54, %p55
    %p57 = scmp.ne.s32.totalorder %s49, %s51
    %p58 = scmp.eq.s32.totalorder %s20, 1
    %p59 = por %p57, %p58
    %p60 = scmp.ne.s32.totalorder %s51, %s52
    %p61 = scmp.eq.s32.totalorder %s20, 0
    %p62 = por %p60, %p61
    %p63 = scmp.ne.s32.totalorder %s51, %s52
    %p64 = scmp.eq.s32.totalorder %s21, 1
    %p65 = por %p63, %p64
    %p67 = scmp.ne.s32.totalorder %s52, %s66
    %p68 = scmp.eq.s32.totalorder %s21, 0
    %p69 = por %p67, %p68
    %s71 = sadd.s32 %s70, 1
    %p74 = scmp.eq.s32.totalorder %s15, 1
    %p75 = scmp.ne.s32.totalorder %s70, %s72
    %p76 = scmp.eq.s32.totalorder %s15, 0
    %p77 = por %p75, %p76
    %p78 = scmp.ne.s32.totalorder %s70, %s72
    %p79 = scmp.eq.s32.totalorder %s20, 1
    %p80 = por %p78, %p79
    %p81 = scmp.ne.s32.totalorder %s72, %s73
    %p82 = scmp.eq.s32.totalorder %s20, 0
    %p83 = por %p81, %p82
    %p84 = scmp.ne.s32.totalorder %s72, %s73
    %p85 = scmp.eq.s32.totalorder %s21, 1
    %p86 = por %p84, %p85
    %p88 = scmp.ne.s32.totalorder %s73, %s87
    %p89 = scmp.eq.s32.totalorder %s21, 0
    %p90 = por %p88, %p89
    %s92 = sadd.s32 %s91, 1
    %p95 = scmp.eq.s32.totalorder %s15, 1
    %p96 = scmp.ne.s32.totalorder %s91, %s93
    %p97 = scmp.eq.s32.totalorder %s15, 0
    %p98 = por %p96, %p97
    %p99 = scmp.ne.s32.totalorder %s91, %s93
    %p100 = scmp.eq.s32.totalorder %s20, 1
    %p101 = por %p99, %p100
    %p102 = scmp.ne.s32.totalorder %s93, %s94
    %p103 = scmp.eq.s32.totalorder %s20, 0
    %p104 = por %p102, %p103
    %p105 = scmp.ne.s32.totalorder %s93, %s94
    %p106 = scmp.eq.s32.totalorder %s21, 1
    %p107 = por %p105, %p106
    %p109 = scmp.ne.s32.totalorder %s94, %s108
    %p110 = scmp.eq.s32.totalorder %s21, 0
    %p111 = por %p109, %p110
    %s113 = sadd.s32 %s112, 1
    %p116 = scmp.eq.s32.totalorder %s15, 1
    %p117 = scmp.ne.s32.totalorder %s112, %s114
    %p118 = scmp.eq.s32.totalorder %s15, 0
    %p119 = por %p117, %p118
    %p120 = scmp.ne.s32.totalorder %s112, %s114
    %p121 = scmp.eq.s32.totalorder %s20, 1
    %p122 = por %p120, %p121
    %p123 = scmp.ne.s32.totalorder %s114, %s115
    %p124 = scmp.eq.s32.totalorder %s20, 0
    %p125 = por %p123, %p124
    %p126 = scmp.ne.s32.totalorder %s114, %s115
    %p127 = scmp.eq.s32.totalorder %s21, 1
    %p128 = por %p126, %p127
    %p130 = scmp.ne.s32.totalorder %s115, %s129
    %p131 = scmp.eq.s32.totalorder %s21, 0
    %p132 = por %p130, %p131
    %s134 = sadd.s32 %s133, 1
    %p137 = scmp.eq.s32.totalorder %s15, 1
    %p138 = scmp.ne.s32.totalorder %s133, %s135
    %p139 = scmp.eq.s32.totalorder %s15, 0
    %p140 = por %p138, %p139
    %p141 = scmp.ne.s32.totalorder %s133, %s135
    %p142 = scmp.eq.s32.totalorder %s20, 1
    %p143 = por %p141, %p142
    %p144 = scmp.ne.s32.totalorder %s135, %s136
    %p145 = scmp.eq.s32.totalorder %s20, 0
    %p146 = por %p144, %p145
    %p147 = scmp.ne.s32.totalorder %s135, %s136
    %p148 = scmp.eq.s32.totalorder %s21, 1
    %p149 = por %p147, %p148
    %p151 = scmp.ne.s32.totalorder %s136, %s150
    %p152 = scmp.eq.s32.totalorder %s21, 0
    %p153 = por %p151, %p152
    %s155 = sadd.s32 %s154, 1
    %p158 = scmp.eq.s32.totalorder %s15, 1
    %p159 = scmp.ne.s32.totalorder %s154, %s156
    %p160 = scmp.eq.s32.totalorder %s15, 0
    %p161 = por %p159, %p160
    %p162 = scmp.ne.s32.totalorder %s154, %s156
    %p163 = scmp.eq.s32.totalorder %s20, 1
    %p164 = por %p162, %p163
    %p165 = scmp.ne.s32.totalorder %s156, %s157
    %p166 = scmp.eq.s32.totalorder %s20, 0
    %p167 = por %p165, %p166
    %p168 = scmp.ne.s32.totalorder %s156, %s157
    %p169 = scmp.eq.s32.totalorder %s21, 1
    %p170 = por %p168, %p169
    %p172 = scmp.ne.s32.totalorder %s157, %s171
    %p173 = scmp.eq.s32.totalorder %s21, 0
    %p174 = por %p172, %p173
    %s176 = sadd.s32 %s175, 1
    %p179 = scmp.eq.s32.totalorder %s15, 1
    %p180 = scmp.ne.s32.totalorder %s175, %s177
    %p181 = scmp.eq.s32.totalorder %s15, 0
    %p182 = por %p180, %p181
    %p183 = scmp.ne.s32.totalorder %s175, %s177
    %p184 = scmp.eq.s32.totalorder %s20, 1
    %p185 = por %p183, %p184
    %p186 = scmp.ne.s32.totalorder %s177, %s178
    %p187 = scmp.eq.s32.totalorder %s20, 0
    %p188 = por %p186, %p187
    %p189 = scmp.ne.s32.totalorder %s177, %s178
    %p190 = scmp.eq.s32.totalorder %s21, 1
    %p191 = por %p189, %p190
    %p193 = scmp.ne.s32.totalorder %s178, %s192
    %p194 = scmp.eq.s32.totalorder %s21, 0
    %p195 = por %p193, %p194
    %s197 = sadd.s32 %s196, 1
    %p200 = scmp.eq.s32.totalorder %s15, 1
    %p201 = scmp.ne.s32.totalorder %s196, %s198
    %p202 = scmp.eq.s32.totalorder %s15, 0
    %p203 = por %p201, %p202
    %p204 = scmp.ne.s32.totalorder %s196, %s198
    %p205 = scmp.eq.s32.totalorder %s20, 1
    %p206 = por %p204, %p205
    %p207 = scmp.ne.s32.totalorder %s198, %s199
    %p208 = scmp.eq.s32.totalorder %s20, 0
    %p209 = por %p207, %p208
    %p210 = scmp.ne.s32.totalorder %s198, %s199
    %p211 = scmp.eq.s32.totalorder %s21, 1
    %p212 = por %p210, %p211
    %p214 = scmp.ne.s32.totalorder %s199, %s213
    %p215 = scmp.eq.s32.totalorder %s21, 0
    %p216 = por %p214, %p215
    %s217 = ssub.s32 %s15, %s22
    %p218 = scmp.eq.s32.totalorder %s217, 0
    %s220 = sadd.s32 %s219, 1
    %s221 = scalar_select %p218, %s219, %s220
    %p224 = pneg %p218
    %p225 = scmp.eq.s32.totalorder %s15, 1
    %p226 = por %p224, %p225
    %p227 = scmp.ne.s32.totalorder %s219, %s222
    %p228 = scmp.eq.s32.totalorder %s15, 0
    %p229 = por %p227, %p228
    %p230 = scmp.ne.s32.totalorder %s219, %s222
    %p231 = scmp.eq.s32.totalorder %s20, 1
    %p232 = por %p230, %p231
    %p233 = scmp.ne.s32.totalorder %s222, %s223
    %p234 = scmp.eq.s32.totalorder %s20, 0
    %p235 = por %p233, %p234
    %p236 = scmp.ne.s32.totalorder %s222, %s223
    %p237 = scmp.eq.s32.totalorder %s21, 1
    %p238 = por %p236, %p237
    %p240 = scmp.ne.s32.totalorder %s223, %s239
    %p241 = scmp.eq.s32.totalorder %s21, 0
    %p242 = por %p240, %p241
    %p243 = scmp.le.s32.totalorder 1, %s15
    %p244 = scmp.lt.s32.totalorder %s15, 3
    %p245 = pnand %p243, %p244
    %p246 = pneg %p245
    // Predicated region
    $region9: #{decoder_forward_pallas.1} parent=5 // pred_check
      _
    $region10: #{decoder_forward_pallas.1} parent=5 // pred_check_branch
      %248 = sbr.rel (%p245) target = $region12
    $region11: #{decoder_forward_pallas.1} parent=5 // pred_region
      %s249 = ssub.s32 %s15, 1
      // Predicated region
      $region13: #{decoder_forward_pallas.1} parent=11 // pred_check
        %p250 = pneg %p62
      $region14: #{decoder_forward_pallas.1} parent=11 // pred_check_branch
        %252 = sbr.rel (%p250) target = $region16
      $region15: #{decoder_forward_pallas.1} parent=11 // pred_region
        _
      $region16: #{decoder_forward_pallas.1} parent=11 // pred_fallthru
        _
      // Predicated region
      $region17: #{decoder_forward_pallas.1} parent=11 // pred_check
        %p253 = pneg %p83
      $region18: #{decoder_forward_pallas.1} parent=11 // pred_check_branch
        %255 = sbr.rel (%p253) target = $region20
      $region19: #{decoder_forward_pallas.1} parent=11 // pred_region
        _
      $region20: #{decoder_forward_pallas.1} parent=11 // pred_fallthru
        _
      // Predicated region
      $region21: #{decoder_forward_pallas.1} parent=11 // pred_check
        %p256 = pneg %p104
      $region22: #{decoder_forward_pallas.1} parent=11 // pred_check_branch
        %258 = sbr.rel (%p256) target = $region24
      $region23: #{decoder_forward_pallas.1} parent=11 // pred_region
        _
      $region24: #{decoder_forward_pallas.1} parent=11 // pred_fallthru
        _
      // Predicated region
      $region25: #{decoder_forward_pallas.1} parent=11 // pred_check
        %p259 = pneg %p125
      $region26: #{decoder_forward_pallas.1} parent=11 // pred_check_branch
        %261 = sbr.rel (%p259) target = $region28
      $region27: #{decoder_forward_pallas.1} parent=11 // pred_region
        _
      $region28: #{decoder_forward_pallas.1} parent=11 // pred_fallthru
        _
      // Predicated region
      $region29: #{decoder_forward_pallas.1} parent=11 // pred_check
        %p262 = pneg %p146
      $region30: #{decoder_forward_pallas.1} parent=11 // pred_check_branch
        %264 = sbr.rel (%p262) target = $region32
      $region31: #{decoder_forward_pallas.1} parent=11 // pred_region
        _
      $region32: #{decoder_forward_pallas.1} parent=11 // pred_fallthru
        _
      // Predicated region
      $region33: #{decoder_forward_pallas.1} parent=11 // pred_check
        %p265 = pneg %p167
      $region34: #{decoder_forward_pallas.1} parent=11 // pred_check_branch
        %267 = sbr.rel (%p265) target = $region36
      $region35: #{decoder_forward_pallas.1} parent=11 // pred_region
        _
      $region36: #{decoder_forward_pallas.1} parent=11 // pred_fallthru
        _
      // Predicated region
      $region37: #{decoder_forward_pallas.1} parent=11 // pred_check
        %p268 = pneg %p188
      $region38: #{decoder_forward_pallas.1} parent=11 // pred_check_branch
        %270 = sbr.rel (%p268) target = $region40
      $region39: #{decoder_forward_pallas.1} parent=11 // pred_region
        _
      $region40: #{decoder_forward_pallas.1} parent=11 // pred_fallthru
        _
      // Predicated region
      $region41: #{decoder_forward_pallas.1} parent=11 // pred_check
        %p271 = pneg %p209
      $region42: #{decoder_forward_pallas.1} parent=11 // pred_check_branch
        %273 = sbr.rel (%p271) target = $region44
      $region43: #{decoder_forward_pallas.1} parent=11 // pred_region
        _
      $region44: #{decoder_forward_pallas.1} parent=11 // pred_fallthru
        _
    $region12: #{decoder_forward_pallas.1} parent=5 // pred_fallthru
      _
    %p274 = scmp.lt.s32.totalorder %s15, 2
    // Predicated region
    $region45: #{decoder_forward_pallas.1} parent=5 // pred_check
      %p275 = pneg %p274
    $region46: #{decoder_forward_pallas.1} parent=5 // pred_check_branch
      %277 = sbr.rel (%p275) target = $region48
    $region47: #{decoder_forward_pallas.1} parent=5 // pred_region
      // Predicated region
      $region49: #{decoder_forward_pallas.1} parent=47 // pred_check
        %p278 = pneg %p35
      $region50: #{decoder_forward_pallas.1} parent=47 // pred_check_branch
        %280 = sbr.rel (%p278) target = $region52
      $region51: #{decoder_forward_pallas.1} parent=47 // pred_region
        %p281 = scmp.lt.s32.totalorder %s15, 1
        %s282 = scalar_select %p281, %s15, 1
        %s283 = smul.addr %s282, 20
        %s284 = smul.addr %s283, 8
        %s285 = scalar_lea.vmem %s0, %s284
      $region52: #{decoder_forward_pallas.1} parent=47 // pred_fallthru
        _
    $region48: #{decoder_forward_pallas.1} parent=5 // pred_fallthru
      _
    %p286 = scmp.le.s32.totalorder 1, %s15
    %p287 = scmp.lt.s32.totalorder %s15, 3
    %p288 = pnand %p286, %p287
    %p289 = pneg %p288
    // Predicated region
    $region53: #{decoder_forward_pallas.1} parent=5 // pred_check
      _
    $region54: #{decoder_forward_pallas.1} parent=5 // pred_check_branch
      %291 = sbr.rel (%p288) target = $region56
    $region55: #{decoder_forward_pallas.1} parent=5 // pred_region
      %s292 = ssub.s32 %s15, 1
      %p293 = scmp.lt.s32.totalorder %s20, 1
      %s294 = scalar_select %p293, %s20, 1
      %s295 = smul.addr %s294, 20
      %s296 = smul.addr %s295, 8
      %s297 = scalar_lea.vmem %s0, %s296
      %p298 = pneg %p41
      %p299 = pneg %p38
      %p300 = pneg %p62
      %p301 = pneg %p59
      %p302 = pneg %p83
      %p303 = pneg %p80
      %p304 = pneg %p104
      %p305 = pneg %p101
      %p306 = pneg %p125
      %p307 = pneg %p122
      %p308 = pneg %p146
      %p309 = pneg %p143
      %p310 = pneg %p167
      %p311 = pneg %p164
      %p312 = pneg %p188
      %p313 = pneg %p185
      %p314 = pneg %p209
      %p315 = pneg %p206
      %p316 = pneg %p235
      %p317 = pneg %p232
      %p318 = scmp.lt.s32.totalorder %s20, 1
      %s319 = scalar_select %p318, %s20, 1
      %s320 = smul.addr %s319, 8
      %s321 = smul.addr %s320, 8
      %s322 = scalar_lea.vmem %s9, %s321
      %p323 = scmp.lt.s32.totalorder %s20, 1
      %s324 = scalar_select %p323, %s20, 1
      %s325 = smul.addr %s324, 20
      %s326 = smul.addr %s325, 8
      %s327 = scalar_lea.vmem %s0, %s326
      %p328 = scmp.lt.s32.totalorder %s20, 1
      %s329 = scalar_select %p328, %s20, 1
      %s330 = smul.addr %s329, 8
      %s331 = smul.addr %s330, 8
      %s332 = scalar_lea.vmem %s9, %s331
      %vm334 = vcmask 261120
      %335 = vst.msk [vmem:[#allocation2] sm:$0xff] %vm334, 0.0
      %336 = vst.msk [vmem:[#allocation2 + $0x8] sm:$0xff] %vm334, 0.0
      %337 = vst.msk [vmem:[#allocation2 + $0x10] sm:$0xff] %vm334, 0.0
      %s338 = scalar_lea.vmem [#allocation2], 216
      %339 = vst.msk [vmem:[%s338] sm:$0xff] %vm334, 0.0
      %340 = vst.msk [vmem:[%s338 + $0x8] sm:$0xff] %vm334, 0.0
      %341 = vst.msk [vmem:[%s338 + $0x10] sm:$0xff] %vm334, 0.0
      %s342 = scalar_lea.vmem [#allocation2], 24
      %343 = vst.msk [vmem:[%s342] sm:$0xff] %vm334, 0.0
      %344 = vst.msk [vmem:[%s342 + $0x18] sm:$0xff] %vm334, 0.0
      %345 = vst.msk [vmem:[%s342 + $0x30] sm:$0xff] %vm334, 0.0
      %346 = vst.msk [vmem:[%s342 + $0x48] sm:$0xff] %vm334, 0.0
      %347 = vst.msk [vmem:[%s342 + $0x60] sm:$0xff] %vm334, 0.0
      %348 = vst.msk [vmem:[%s342 + $0x78] sm:$0xff] %vm334, 0.0
      %349 = vst.msk [vmem:[%s342 + $0x90] sm:$0xff] %vm334, 0.0
      %350 = vst.msk [vmem:[%s342 + $0xa8] sm:$0xff] %vm334, 0.0
      %351 = vst.msk [vmem:[%s342 + $0x10] sm:$0xff] %vm334, 0.0
      %352 = vst.msk [vmem:[%s342 + $0x28] sm:$0xff] %vm334, 0.0
      %353 = vst.msk [vmem:[%s342 + $0x40] sm:$0xff] %vm334, 0.0
      %354 = vst.msk [vmem:[%s342 + $0x58] sm:$0xff] %vm334, 0.0
      %355 = vst.msk [vmem:[%s342 + $0x70] sm:$0xff] %vm334, 0.0
      %356 = vst.msk [vmem:[%s342 + $0x88] sm:$0xff] %vm334, 0.0
      %357 = vst.msk [vmem:[%s342 + $0xa0] sm:$0xff] %vm334, 0.0
      %358 = vst.msk [vmem:[%s342 + $0xb8] sm:$0xff] %vm334, 0.0
      %vm359 = vcmask 523264
      %360 = vst.msk [vmem:[#allocation3] sm:$0xff] %vm359, 0.0
      %361 = vst.msk [vmem:[#allocation3 + $0x8] sm:$0xff] %vm359, 0.0
      %362 = vst.msk [vmem:[#allocation3 + $0x10] sm:$0xff] %vm359, 0.0
      %s363 = scalar_lea.vmem [#allocation3], 216
      %364 = vst.msk [vmem:[%s363] sm:$0xff] %vm359, 0.0
      %365 = vst.msk [vmem:[%s363 + $0x8] sm:$0xff] %vm359, 0.0
      %366 = vst.msk [vmem:[%s363 + $0x10] sm:$0xff] %vm359, 0.0
      %s367 = scalar_lea.vmem [#allocation3], 24
      %368 = vst.msk [vmem:[%s367] sm:$0xff] %vm359, 0.0
      %369 = vst.msk [vmem:[%s367 + $0x18] sm:$0xff] %vm359, 0.0
      %370 = vst.msk [vmem:[%s367 + $0x30] sm:$0xff] %vm359, 0.0
      %371 = vst.msk [vmem:[%s367 + $0x48] sm:$0xff] %vm359, 0.0
      %372 = vst.msk [vmem:[%s367 + $0x60] sm:$0xff] %vm359, 0.0
      %373 = vst.msk [vmem:[%s367 + $0x78] sm:$0xff] %vm359, 0.0
      %374 = vst.msk [vmem:[%s367 + $0x90] sm:$0xff] %vm359, 0.0
      %375 = vst.msk [vmem:[%s367 + $0xa8] sm:$0xff] %vm359, 0.0
      %376 = vst.msk [vmem:[%s367 + $0x10] sm:$0xff] %vm359, 0.0
      %377 = vst.msk [vmem:[%s367 + $0x28] sm:$0xff] %vm359, 0.0
      %378 = vst.msk [vmem:[%s367 + $0x40] sm:$0xff] %vm359, 0.0
      %379 = vst.msk [vmem:[%s367 + $0x58] sm:$0xff] %vm359, 0.0
      %380 = vst.msk [vmem:[%s367 + $0x70] sm:$0xff] %vm359, 0.0
      %381 = vst.msk [vmem:[%s367 + $0x88] sm:$0xff] %vm359, 0.0
      %382 = vst.msk [vmem:[%s367 + $0xa0] sm:$0xff] %vm359, 0.0
      %383 = vst.msk [vmem:[%s367 + $0xb8] sm:$0xff] %vm359, 0.0
      %v384 = vld [vmem:[%s327] sm:$0xff]
      %v385 = vld [vmem:[%s327 + $0x8] sm:$0x3]
      %v386 = vld [vmem:[%s327 + $0x10] sm:$0xff]
      %v387 = vld [vmem:[%s327 + $0x18] sm:$0x3]
      %v388 = vld [vmem:[%s327 + $0x20] sm:$0xff]
      %v389 = vld [vmem:[%s327 + $0x28] sm:$0x3]
      %v390 = vld [vmem:[%s327 + $0x30] sm:$0xff]
      %v391 = vld [vmem:[%s327 + $0x38] sm:$0x3]
      %v392 = vld [vmem:[%s327 + $0x40] sm:$0xff]
      %v393 = vld [vmem:[%s327 + $0x48] sm:$0x3]
      %v394 = vld [vmem:[%s327 + $0x50] sm:$0xff]
      %v395 = vld [vmem:[%s327 + $0x58] sm:$0x3]
      %v396 = vld [vmem:[%s327 + $0x60] sm:$0xff]
      %v397 = vld [vmem:[%s327 + $0x68] sm:$0x3]
      %v398 = vld [vmem:[%s327 + $0x70] sm:$0xff]
      %v399 = vld [vmem:[%s327 + $0x78] sm:$0x3]
      %v400 = vld [vmem:[%s327 + $0x80] sm:$0xff]
      %v401 = vld [vmem:[%s327 + $0x88] sm:$0x3]
      %v402 = vld [vmem:[%s327 + $0x90] sm:$0xff]
      %v403 = vld [vmem:[%s327 + $0x98] sm:$0x3]
      %vm420 = vcmask 1046528
      %v421 = vrot.slane %v384, 1
      %v422 = vrot.slane %v385, 1
      %v423 = vsel %vm420, %v421, %v422
      %v424 = vrot.slane %v386, 1
      %v425 = vrot.slane %v387, 1
      %v426 = vsel %vm420, %v424, %v425
      %v427 = vrot.slane %v388, 1
      %v428 = vrot.slane %v389, 1
      %v429 = vsel %vm420, %v427, %v428
      %v430 = vrot.slane %v390, 1
      %v431 = vrot.slane %v391, 1
      %v432 = vsel %vm420, %v430, %v431
      %v433 = vrot.slane %v392, 1
      %v434 = vrot.slane %v393, 1
      %v435 = vsel %vm420, %v433, %v434
      %v436 = vrot.slane %v394, 1
      %v437 = vrot.slane %v395, 1
      %v438 = vsel %vm420, %v436, %v437
      %v439 = vrot.slane %v396, 1
      %v440 = vrot.slane %v397, 1
      %v441 = vsel %vm420, %v439, %v440
      %v442 = vrot.slane %v398, 1
      %v443 = vrot.slane %v399, 1
      %v444 = vsel %vm420, %v442, %v443
      %vm445 = vcmask 1045504
      %v446 = vrot.slane %v384, 2
      %v447 = vrot.slane %v385, 2
      %v448 = vsel %vm445, %v446, %v447
      %v449 = vrot.slane %v386, 2
      %v450 = vrot.slane %v387, 2
      %v451 = vsel %vm445, %v449, %v450
      %v452 = vrot.slane %v388, 2
      %v453 = vrot.slane %v389, 2
      %v454 = vsel %vm445, %v452, %v453
      %v455 = vrot.slane %v390, 2
      %v456 = vrot.slane %v391, 2
      %v457 = vsel %vm445, %v455, %v456
      %v458 = vrot.slane %v392, 2
      %v459 = vrot.slane %v393, 2
      %v460 = vsel %vm445, %v458, %v459
      %v461 = vrot.slane %v394, 2
      %v462 = vrot.slane %v395, 2
      %v463 = vsel %vm445, %v461, %v462
      %v464 = vrot.slane %v396, 2
      %v465 = vrot.slane %v397, 2
      %v466 = vsel %vm445, %v464, %v465
      %v467 = vrot.slane %v398, 2
      %v468 = vrot.slane %v399, 2
      %v469 = vsel %vm445, %v467, %v468
      %v472 = vrot.slane %v400, 1
      %v473 = vrot.slane %v401, 1
      %v474 = vsel %vm420, %v472, %v473
      %v475 = vrot.slane %v400, 2
      %v476 = vrot.slane %v401, 2
      %v477 = vsel %vm445, %v475, %v476
      %v480 = vrot.slane %v402, 1
      %v481 = vrot.slane %v403, 1
      %v482 = vsel %vm420, %v480, %v481
      %v483 = vrot.slane %v402, 2
      %v484 = vrot.slane %v403, 2
      %v485 = vsel %vm445, %v483, %v484
      %486 = vrot.lane.b32.xlu0 %v423, 8
      %v487 = vpop.permute.xlu0 %486
      %488 = vrot.lane.b32.xlu0 %v426, 8
      %v489 = vpop.permute.xlu0 %488
      %490 = vrot.lane.b32.xlu0 %v429, 8
      %v491 = vpop.permute.xlu0 %490
      %492 = vrot.lane.b32.xlu0 %v432, 8
      %v493 = vpop.permute.xlu0 %492
      %494 = vrot.lane.b32.xlu0 %v435, 8
      %v495 = vpop.permute.xlu0 %494
      %496 = vrot.lane.b32.xlu0 %v438, 8
      %v497 = vpop.permute.xlu0 %496
      %498 = vrot.lane.b32.xlu0 %v441, 8
      %v499 = vpop.permute.xlu0 %498
      %500 = vrot.lane.b32.xlu0 %v444, 8
      %v501 = vpop.permute.xlu0 %500
      %510 = vrot.lane.b32.xlu0 %v448, 16
      %v511 = vpop.permute.xlu0 %510
      %512 = vrot.lane.b32.xlu0 %v451, 16
      %v513 = vpop.permute.xlu0 %512
      %514 = vrot.lane.b32.xlu0 %v454, 16
      %v515 = vpop.permute.xlu0 %514
      %516 = vrot.lane.b32.xlu0 %v457, 16
      %v517 = vpop.permute.xlu0 %516
      %518 = vrot.lane.b32.xlu0 %v460, 16
      %v519 = vpop.permute.xlu0 %518
      %520 = vrot.lane.b32.xlu0 %v463, 16
      %v521 = vpop.permute.xlu0 %520
      %522 = vrot.lane.b32.xlu0 %v466, 16
      %v523 = vpop.permute.xlu0 %522
      %524 = vrot.lane.b32.xlu0 %v469, 16
      %v525 = vpop.permute.xlu0 %524
      %534 = vrot.lane.b32.xlu0 %v386, 24
      %v535 = vpop.permute.xlu0 %534
      %536 = vrot.lane.b32.xlu0 %v388, 24
      %v537 = vpop.permute.xlu0 %536
      %538 = vrot.lane.b32.xlu0 %v390, 24
      %v539 = vpop.permute.xlu0 %538
      %540 = vrot.lane.b32.xlu0 %v392, 24
      %v541 = vpop.permute.xlu0 %540
      %542 = vrot.lane.b32.xlu0 %v394, 24
      %v543 = vpop.permute.xlu0 %542
      %544 = vrot.lane.b32.xlu0 %v396, 24
      %v545 = vpop.permute.xlu0 %544
      %546 = vrot.lane.b32.xlu0 %v398, 24
      %v547 = vpop.permute.xlu0 %546
      %548 = vrot.lane.b32.xlu0 %v400, 24
      %v549 = vpop.permute.xlu0 %548
      %558 = vrot.lane.b32.xlu0 %v426, 32
      %v559 = vpop.permute.xlu0 %558
      %560 = vrot.lane.b32.xlu0 %v429, 32
      %v561 = vpop.permute.xlu0 %560
      %562 = vrot.lane.b32.xlu0 %v432, 32
      %v563 = vpop.permute.xlu0 %562
      %564 = vrot.lane.b32.xlu0 %v435, 32
      %v565 = vpop.permute.xlu0 %564
      %566 = vrot.lane.b32.xlu0 %v438, 32
      %v567 = vpop.permute.xlu0 %566
      %568 = vrot.lane.b32.xlu0 %v441, 32
      %v569 = vpop.permute.xlu0 %568
      %570 = vrot.lane.b32.xlu0 %v444, 32
      %v571 = vpop.permute.xlu0 %570
      %572 = vrot.lane.b32.xlu0 %v474, 32
      %v573 = vpop.permute.xlu0 %572
      %582 = vrot.lane.b32.xlu0 %v451, 40
      %v583 = vpop.permute.xlu0 %582
      %584 = vrot.lane.b32.xlu0 %v454, 40
      %v585 = vpop.permute.xlu0 %584
      %586 = vrot.lane.b32.xlu0 %v457, 40
      %v587 = vpop.permute.xlu0 %586
      %588 = vrot.lane.b32.xlu0 %v460, 40
      %v589 = vpop.permute.xlu0 %588
      %590 = vrot.lane.b32.xlu0 %v463, 40
      %v591 = vpop.permute.xlu0 %590
      %592 = vrot.lane.b32.xlu0 %v466, 40
      %v593 = vpop.permute.xlu0 %592
      %594 = vrot.lane.b32.xlu0 %v469, 40
      %v595 = vpop.permute.xlu0 %594
      %596 = vrot.lane.b32.xlu0 %v477, 40
      %v597 = vpop.permute.xlu0 %596
      %606 = vrot.lane.b32.xlu0 %v388, 48
      %v607 = vpop.permute.xlu0 %606
      %608 = vrot.lane.b32.xlu0 %v390, 48
      %v609 = vpop.permute.xlu0 %608
      %610 = vrot.lane.b32.xlu0 %v392, 48
      %v611 = vpop.permute.xlu0 %610
      %612 = vrot.lane.b32.xlu0 %v394, 48
      %v613 = vpop.permute.xlu0 %612
      %614 = vrot.lane.b32.xlu0 %v396, 48
      %v615 = vpop.permute.xlu0 %614
      %616 = vrot.lane.b32.xlu0 %v398, 48
      %v617 = vpop.permute.xlu0 %616
      %618 = vrot.lane.b32.xlu0 %v400, 48
      %v619 = vpop.permute.xlu0 %618
      %620 = vrot.lane.b32.xlu0 %v402, 48
      %v621 = vpop.permute.xlu0 %620
      %630 = vrot.lane.b32.xlu0 %v429, 56
      %v631 = vpop.permute.xlu0 %630
      %632 = vrot.lane.b32.xlu0 %v432, 56
      %v633 = vpop.permute.xlu0 %632
      %634 = vrot.lane.b32.xlu0 %v435, 56
      %v635 = vpop.permute.xlu0 %634
      %636 = vrot.lane.b32.xlu0 %v438, 56
      %v637 = vpop.permute.xlu0 %636
      %638 = vrot.lane.b32.xlu0 %v441, 56
      %v639 = vpop.permute.xlu0 %638
      %640 = vrot.lane.b32.xlu0 %v444, 56
      %v641 = vpop.permute.xlu0 %640
      %642 = vrot.lane.b32.xlu0 %v474, 56
      %v643 = vpop.permute.xlu0 %642
      %644 = vrot.lane.b32.xlu0 %v482, 56
      %v645 = vpop.permute.xlu0 %644
      %654 = vrot.lane.b32.xlu0 %v454, 64
      %v655 = vpop.permute.xlu0 %654
      %656 = vrot.lane.b32.xlu0 %v457, 64
      %v657 = vpop.permute.xlu0 %656
      %658 = vrot.lane.b32.xlu0 %v460, 64
      %v659 = vpop.permute.xlu0 %658
      %660 = vrot.lane.b32.xlu0 %v463, 64
      %v661 = vpop.permute.xlu0 %660
      %662 = vrot.lane.b32.xlu0 %v466, 64
      %v663 = vpop.permute.xlu0 %662
      %664 = vrot.lane.b32.xlu0 %v469, 64
      %v665 = vpop.permute.xlu0 %664
      %666 = vrot.lane.b32.xlu0 %v477, 64
      %v667 = vpop.permute.xlu0 %666
      %668 = vrot.lane.b32.xlu0 %v485, 64
      %v669 = vpop.permute.xlu0 %668
      %vm678 = vcmask 64512
      %v679 = vsel %vm678, %v384, %v487
      %v680 = vsel %vm678, %v386, %v489
      %v681 = vsel %vm678, %v388, %v491
      %v682 = vsel %vm678, %v390, %v493
      %v683 = vsel %vm678, %v392, %v495
      %v684 = vsel %vm678, %v394, %v497
      %v685 = vsel %vm678, %v396, %v499
      %v686 = vsel %vm678, %v398, %v501
      %vm687 = vcmask 130048
      %v688 = vsel %vm687, %v679, %v511
      %v689 = vsel %vm687, %v680, %v513
      %v690 = vsel %vm687, %v681, %v515
      %v691 = vsel %vm687, %v682, %v517
      %v692 = vsel %vm687, %v683, %v519
      %v693 = vsel %vm687, %v684, %v521
      %v694 = vsel %vm687, %v685, %v523
      %v695 = vsel %vm687, %v686, %v525
      %vm696 = vcmask 195584
      %v697 = vsel %vm696, %v688, %v535
      %v698 = vsel %vm696, %v689, %v537
      %v699 = vsel %vm696, %v690, %v539
      %v700 = vsel %vm696, %v691, %v541
      %v701 = vsel %vm696, %v692, %v543
      %v702 = vsel %vm696, %v693, %v545
      %v703 = vsel %vm696, %v694, %v547
      %v704 = vsel %vm696, %v695, %v549
      %v705 = vsel %vm334, %v697, %v559
      %v706 = vsel %vm334, %v698, %v561
      %v707 = vsel %vm334, %v699, %v563
      %v708 = vsel %vm334, %v700, %v565
      %v709 = vsel %vm334, %v701, %v567
      %v710 = vsel %vm334, %v702, %v569
      %v711 = vsel %vm334, %v703, %v571
      %v712 = vsel %vm334, %v704, %v573
      %vm713 = vcmask 326656
      %v714 = vsel %vm713, %v705, %v583
      %v715 = vsel %vm713, %v706, %v585
      %v716 = vsel %vm713, %v707, %v587
      %v717 = vsel %vm713, %v708, %v589
      %v718 = vsel %vm713, %v709, %v591
      %v719 = vsel %vm713, %v710, %v593
      %v720 = vsel %vm713, %v711, %v595
      %v721 = vsel %vm713, %v712, %v597
      %vm722 = vcmask 392192
      %v723 = vsel %vm722, %v714, %v607
      %v724 = vsel %vm722, %v715, %v609
      %v725 = vsel %vm722, %v716, %v611
      %v726 = vsel %vm722, %v717, %v613
      %v727 = vsel %vm722, %v718, %v615
      %v728 = vsel %vm722, %v719, %v617
      %v729 = vsel %vm722, %v720, %v619
      %v730 = vsel %vm722, %v721, %v621
      %vm731 = vcmask 457728
      %v732 = vsel %vm731, %v723, %v631
      %v733 = vsel %vm731, %v724, %v633
      %v734 = vsel %vm731, %v725, %v635
      %v735 = vsel %vm731, %v726, %v637
      %v736 = vsel %vm731, %v727, %v639
      %v737 = vsel %vm731, %v728, %v641
      %v738 = vsel %vm731, %v729, %v643
      %v739 = vsel %vm731, %v730, %v645
      %v740 = vsel %vm359, %v732, %v655
      %v741 = vsel %vm359, %v733, %v657
      %v742 = vsel %vm359, %v734, %v659
      %v743 = vsel %vm359, %v735, %v661
      %v744 = vsel %vm359, %v736, %v663
      %v745 = vsel %vm359, %v737, %v665
      %v746 = vsel %vm359, %v738, %v667
      %v747 = vsel %vm359, %v739, %v669
      %v748 = vpack.c.bf16 %v741, %v740
      %v749 = vpack.c.bf16 %v743, %v742
      %v750 = vpack.c.bf16 %v745, %v744
      %v751 = vpack.c.bf16 %v747, %v746
      %v752 = vld [vmem:[%s1] sm:$0xf]
      %v753 = vld [vmem:[%s1 + $0x4] sm:$0xf]
      %v754 = vld [vmem:[%s1 + $0x8] sm:$0xf]
      %v755 = vld [vmem:[%s1 + $0xc] sm:$0xf]
      %v756 = vld [vmem:[%s1 + $0x10] sm:$0xf]
      %v757 = vld [vmem:[%s1 + $0x14] sm:$0xf]
      %v758 = vld [vmem:[%s1 + $0x18] sm:$0xf]
      %v759 = vld [vmem:[%s1 + $0x1c] sm:$0xf]
      %v760 = vld [vmem:[%s1 + $0x20] sm:$0xf]
      %v761 = vld [vmem:[%s2] sm:$0x1]
      %v763 = vperm.slane %v761, 0
      %v774 = vunpack.c.l.b16 %v752
      %v775 = vunpack.c.l.b16 %v753
      %v776 = vunpack.c.l.b16 %v754
      %v777 = vunpack.c.l.b16 %v755
      %v778 = vunpack.c.l.b16 %v756
      %v779 = vunpack.c.l.b16 %v757
      %v780 = vunpack.c.l.b16 %v758
      %v781 = vunpack.c.l.b16 %v759
      %v782 = vunpack.c.l.b16 %v760
      %v783 = vpack.c.b16 %v775, %v774
      %v784 = vpack.c.b16 %v777, %v776
      %v785 = vpack.c.b16 %v779, %v778
      %v786 = vpack.c.b16 %v781, %v780
      %v787 = vpack.c.b16 %v782, %v782
      %vm792 = vcmask 588800
      %v794 = vsel %vm792, %v748, 0
      %v797 = vsel %vm792, %v749, 0
      %v800 = vsel %vm792, %v750, 0
      %v803 = vsel %vm792, %v751, 0
      %vm805 = vcmask 1043456
      %v807 = vsel %vm805, %v787, 0
      %809 = vmatpush.bf16.msra.mxu0 0
      %810 = vmatpush.bf16.msra.mxu0 0
      %811 = vmatpush.bf16.msra.mxu0 0
      %812 = vmatpush.bf16.msra.mxu0 %v807
      %813 = vmatpush.bf16.msra.mxu0 %v786
      %814 = vmatpush.bf16.msra.mxu0 %v785
      %815 = vmatpush.bf16.msra.mxu0 %v784
      %816 = vmatpush.bf16.msra.mxu0 %v783
      %817 = vmatmul.bf16.gmra.mxu0 %v794
      %v818 = vpop.f32.mrf.mxu0
      %v819 = vadd.f32 %v763, %v818
      %v820 = vpop.f32.mrf.mxu0
      %v821 = vadd.f32 %v763, %v820
      %822 = vmatmul.bf16.gmra.mxu0 %v797
      %v823 = vpop.f32.mrf.mxu0
      %v824 = vadd.f32 %v763, %v823
      %v825 = vpop.f32.mrf.mxu0
      %v826 = vadd.f32 %v763, %v825
      %827 = vmatmul.bf16.gmra.mxu0 %v800
      %v828 = vpop.f32.mrf.mxu0
      %v829 = vadd.f32 %v763, %v828
      %v830 = vpop.f32.mrf.mxu0
      %v831 = vadd.f32 %v763, %v830
      %832 = vmatmul.bf16.gmra.mxu0 %v803
      %v833 = vpop.f32.mrf.mxu0
      %v834 = vadd.f32 %v763, %v833
      %v835 = vpop.f32.mrf.mxu0
      %v836 = vadd.f32 %v763, %v835
      %837 = vdwg.mxu0
      %v838 = vmax.f32 %v819, 0.0
      %v839 = vmax.f32 %v821, 0.0
      %v840 = vmax.f32 %v824, 0.0
      %v841 = vmax.f32 %v826, 0.0
      %v842 = vmax.f32 %v829, 0.0
      %v843 = vmax.f32 %v831, 0.0
      %v844 = vmax.f32 %v834, 0.0
      %v845 = vmax.f32 %v836, 0.0
      %846 = vst.msk [vmem:[%s342 + $0x8] sm:$0xff] %vm334, %v838
      %847 = vst.msk [vmem:[%s342 + $0x20] sm:$0xff] %vm334, %v839
      %848 = vst.msk [vmem:[%s342 + $0x38] sm:$0xff] %vm334, %v840
      %849 = vst.msk [vmem:[%s342 + $0x50] sm:$0xff] %vm334, %v841
      %850 = vst.msk [vmem:[%s342 + $0x68] sm:$0xff] %vm334, %v842
      %851 = vst.msk [vmem:[%s342 + $0x80] sm:$0xff] %vm334, %v843
      %852 = vst.msk [vmem:[%s342 + $0x98] sm:$0xff] %vm334, %v844
      %853 = vst.msk [vmem:[%s342 + $0xb0] sm:$0xff] %vm334, %v845
      %v854 = vld [vmem:[#allocation2 + $0x7] sm:$0xff]
      %v855 = vld [vmem:[#allocation2 + $0x1f] sm:$0xff]
      %v856 = vld [vmem:[#allocation2 + $0x37] sm:$0xff]
      %v857 = vld [vmem:[#allocation2 + $0x4f] sm:$0xff]
      %v858 = vld [vmem:[#allocation2 + $0x67] sm:$0xff]
      %v859 = vld [vmem:[#allocation2 + $0x7f] sm:$0xff]
      %v860 = vld [vmem:[#allocation2 + $0x97] sm:$0xff]
      %v861 = vld [vmem:[#allocation2 + $0xaf] sm:$0xff]
      %v862 = vld [vmem:[#allocation2 + $0x8] sm:$0xff]
      %v863 = vld [vmem:[#allocation2 + $0x20] sm:$0xff]
      %v864 = vld [vmem:[#allocation2 + $0x38] sm:$0xff]
      %v865 = vld [vmem:[#allocation2 + $0x50] sm:$0xff]
      %v866 = vld [vmem:[#allocation2 + $0x68] sm:$0xff]
      %v867 = vld [vmem:[#allocation2 + $0x80] sm:$0xff]
      %v868 = vld [vmem:[#allocation2 + $0x98] sm:$0xff]
      %v869 = vld [vmem:[#allocation2 + $0xb0] sm:$0xff]
      %v870 = vld [vmem:[#allocation2 + $0x9] sm:$0xff]
      %v871 = vld [vmem:[#allocation2 + $0x21] sm:$0xff]
      %v872 = vld [vmem:[#allocation2 + $0x39] sm:$0xff]
      %v873 = vld [vmem:[#allocation2 + $0x51] sm:$0xff]
      %v874 = vld [vmem:[#allocation2 + $0x69] sm:$0xff]
      %v875 = vld [vmem:[#allocation2 + $0x81] sm:$0xff]
      %v876 = vld [vmem:[#allocation2 + $0x99] sm:$0xff]
      %v877 = vld [vmem:[#allocation2 + $0xb1] sm:$0xff]
      %v878 = vld [vmem:[%s342 + $0x7] sm:$0xff]
      %v879 = vld [vmem:[%s342 + $0x1f] sm:$0xff]
      %v880 = vld [vmem:[%s342 + $0x37] sm:$0xff]
      %v881 = vld [vmem:[%s342 + $0x4f] sm:$0xff]
      %v882 = vld [vmem:[%s342 + $0x67] sm:$0xff]
      %v883 = vld [vmem:[%s342 + $0x7f] sm:$0xff]
      %v884 = vld [vmem:[%s342 + $0x97] sm:$0xff]
      %v885 = vld [vmem:[%s342 + $0xaf] sm:$0xff]
      %v886 = vld [vmem:[%s342 + $0x8] sm:$0xff]
      %v887 = vld [vmem:[%s342 + $0x20] sm:$0xff]
      %v888 = vld [vmem:[%s342 + $0x38] sm:$0xff]
      %v889 = vld [vmem:[%s342 + $0x50] sm:$0xff]
      %v890 = vld [vmem:[%s342 + $0x68] sm:$0xff]
      %v891 = vld [vmem:[%s342 + $0x80] sm:$0xff]
      %v892 = vld [vmem:[%s342 + $0x98] sm:$0xff]
      %v893 = vld [vmem:[%s342 + $0xb0] sm:$0xff]
      %v894 = vld [vmem:[%s342 + $0x9] sm:$0xff]
      %v895 = vld [vmem:[%s342 + $0x21] sm:$0xff]
      %v896 = vld [vmem:[%s342 + $0x39] sm:$0xff]
      %v897 = vld [vmem:[%s342 + $0x51] sm:$0xff]
      %v898 = vld [vmem:[%s342 + $0x69] sm:$0xff]
      %v899 = vld [vmem:[%s342 + $0x81] sm:$0xff]
      %v900 = vld [vmem:[%s342 + $0x99] sm:$0xff]
      %v901 = vld [vmem:[%s342 + $0xb1] sm:$0xff]
      %s902 = scalar_lea.vmem [#allocation2], 48
      %v903 = vld [vmem:[%s902 + $0x7] sm:$0xff]
      %v904 = vld [vmem:[%s902 + $0x1f] sm:$0xff]
      %v905 = vld [vmem:[%s902 + $0x37] sm:$0xff]
      %v906 = vld [vmem:[%s902 + $0x4f] sm:$0xff]
      %v907 = vld [vmem:[%s902 + $0x67] sm:$0xff]
      %v908 = vld [vmem:[%s902 + $0x7f] sm:$0xff]
      %v909 = vld [vmem:[%s902 + $0x97] sm:$0xff]
      %v910 = vld [vmem:[%s902 + $0xaf] sm:$0xff]
      %v911 = vld [vmem:[%s902 + $0x8] sm:$0xff]
      %v912 = vld [vmem:[%s902 + $0x20] sm:$0xff]
      %v913 = vld [vmem:[%s902 + $0x38] sm:$0xff]
      %v914 = vld [vmem:[%s902 + $0x50] sm:$0xff]
      %v915 = vld [vmem:[%s902 + $0x68] sm:$0xff]
      %v916 = vld [vmem:[%s902 + $0x80] sm:$0xff]
      %v917 = vld [vmem:[%s902 + $0x98] sm:$0xff]
      %v918 = vld [vmem:[%s902 + $0xb0] sm:$0xff]
      %v919 = vld [vmem:[%s902 + $0x9] sm:$0xff]
      %v920 = vld [vmem:[%s902 + $0x21] sm:$0xff]
      %v921 = vld [vmem:[%s902 + $0x39] sm:$0xff]
      %v922 = vld [vmem:[%s902 + $0x51] sm:$0xff]
      %v923 = vld [vmem:[%s902 + $0x69] sm:$0xff]
      %v924 = vld [vmem:[%s902 + $0x81] sm:$0xff]
      %v925 = vld [vmem:[%s902 + $0x99] sm:$0xff]
      %v926 = vld [vmem:[%s902 + $0xb1] sm:$0xff]
      %935 = vrot.lane.b32.xlu0 %v862, 32
      %v936 = vpop.permute.xlu0 %935
      %937 = vrot.lane.b32.xlu0 %v863, 32
      %v938 = vpop.permute.xlu0 %937
      %939 = vrot.lane.b32.xlu0 %v864, 32
      %v940 = vpop.permute.xlu0 %939
      %941 = vrot.lane.b32.xlu0 %v865, 32
      %v942 = vpop.permute.xlu0 %941
      %943 = vrot.lane.b32.xlu0 %v866, 32
      %v944 = vpop.permute.xlu0 %943
      %945 = vrot.lane.b32.xlu0 %v867, 32
      %v946 = vpop.permute.xlu0 %945
      %947 = vrot.lane.b32.xlu0 %v868, 32
      %v948 = vpop.permute.xlu0 %947
      %949 = vrot.lane.b32.xlu0 %v869, 32
      %v950 = vpop.permute.xlu0 %949
      %967 = vrot.lane.b32.xlu0 %v870, 64
      %v968 = vpop.permute.xlu0 %967
      %969 = vrot.lane.b32.xlu0 %v871, 64
      %v970 = vpop.permute.xlu0 %969
      %971 = vrot.lane.b32.xlu0 %v872, 64
      %v972 = vpop.permute.xlu0 %971
      %973 = vrot.lane.b32.xlu0 %v873, 64
      %v974 = vpop.permute.xlu0 %973
      %975 = vrot.lane.b32.xlu0 %v874, 64
      %v976 = vpop.permute.xlu0 %975
      %977 = vrot.lane.b32.xlu0 %v875, 64
      %v978 = vpop.permute.xlu0 %977
      %979 = vrot.lane.b32.xlu0 %v876, 64
      %v980 = vpop.permute.xlu0 %979
      %981 = vrot.lane.b32.xlu0 %v877, 64
      %v982 = vpop.permute.xlu0 %981
      %999 = vrot.lane.b32.xlu0 %v878, 96
      %v1000 = vpop.permute.xlu0 %999
      %1001 = vrot.lane.b32.xlu0 %v879, 96
      %v1002 = vpop.permute.xlu0 %1001
      %1003 = vrot.lane.b32.xlu0 %v880, 96
      %v1004 = vpop.permute.xlu0 %1003
      %1005 = vrot.lane.b32.xlu0 %v881, 96
      %v1006 = vpop.permute.xlu0 %1005
      %1007 = vrot.lane.b32.xlu0 %v882, 96
      %v1008 = vpop.permute.xlu0 %1007
      %1009 = vrot.lane.b32.xlu0 %v883, 96
      %v1010 = vpop.permute.xlu0 %1009
      %1011 = vrot.lane.b32.xlu0 %v884, 96
      %v1012 = vpop.permute.xlu0 %1011
      %1013 = vrot.lane.b32.xlu0 %v885, 96
      %v1014 = vpop.permute.xlu0 %1013
      %1031 = vrot.lane.b32.xlu0 %v894, 32
      %v1032 = vpop.permute.xlu0 %1031
      %1033 = vrot.lane.b32.xlu0 %v895, 32
      %v1034 = vpop.permute.xlu0 %1033
      %1035 = vrot.lane.b32.xlu0 %v896, 32
      %v1036 = vpop.permute.xlu0 %1035
      %1037 = vrot.lane.b32.xlu0 %v897, 32
      %v1038 = vpop.permute.xlu0 %1037
      %1039 = vrot.lane.b32.xlu0 %v898, 32
      %v1040 = vpop.permute.xlu0 %1039
      %1041 = vrot.lane.b32.xlu0 %v899, 32
      %v1042 = vpop.permute.xlu0 %1041
      %1043 = vrot.lane.b32.xlu0 %v900, 32
      %v1044 = vpop.permute.xlu0 %1043
      %1045 = vrot.lane.b32.xlu0 %v901, 32
      %v1046 = vpop.permute.xlu0 %1045
      %1063 = vrot.lane.b32.xlu0 %v903, 64
      %v1064 = vpop.permute.xlu0 %1063
      %1065 = vrot.lane.b32.xlu0 %v904, 64
      %v1066 = vpop.permute.xlu0 %1065
      %1067 = vrot.lane.b32.xlu0 %v905, 64
      %v1068 = vpop.permute.xlu0 %1067
      %1069 = vrot.lane.b32.xlu0 %v906, 64
      %v1070 = vpop.permute.xlu0 %1069
      %1071 = vrot.lane.b32.xlu0 %v907, 64
      %v1072 = vpop.permute.xlu0 %1071
      %1073 = vrot.lane.b32.xlu0 %v908, 64
      %v1074 = vpop.permute.xlu0 %1073
      %1075 = vrot.lane.b32.xlu0 %v909, 64
      %v1076 = vpop.permute.xlu0 %1075
      %1077 = vrot.lane.b32.xlu0 %v910, 64
      %v1078 = vpop.permute.xlu0 %1077
      %1095 = vrot.lane.b32.xlu0 %v911, 96
      %v1096 = vpop.permute.xlu0 %1095
      %1097 = vrot.lane.b32.xlu0 %v912, 96
      %v1098 = vpop.permute.xlu0 %1097
      %1099 = vrot.lane.b32.xlu0 %v913, 96
      %v1100 = vpop.permute.xlu0 %1099
      %1101 = vrot.lane.b32.xlu0 %v914, 96
      %v1102 = vpop.permute.xlu0 %1101
      %1103 = vrot.lane.b32.xlu0 %v915, 96
      %v1104 = vpop.permute.xlu0 %1103
      %1105 = vrot.lane.b32.xlu0 %v916, 96
      %v1106 = vpop.permute.xlu0 %1105
      %1107 = vrot.lane.b32.xlu0 %v917, 96
      %v1108 = vpop.permute.xlu0 %1107
      %1109 = vrot.lane.b32.xlu0 %v918, 96
      %v1110 = vpop.permute.xlu0 %1109
      %v1119 = vsel %vm334, %v854, %v936
      %v1120 = vsel %vm334, %v855, %v938
      %v1121 = vsel %vm334, %v856, %v940
      %v1122 = vsel %vm334, %v857, %v942
      %v1123 = vsel %vm334, %v858, %v944
      %v1124 = vsel %vm334, %v859, %v946
      %v1125 = vsel %vm334, %v860, %v948
      %v1126 = vsel %vm334, %v861, %v950
      %v1127 = vsel %vm359, %v1119, %v968
      %v1128 = vsel %vm359, %v1120, %v970
      %v1129 = vsel %vm359, %v1121, %v972
      %v1130 = vsel %vm359, %v1122, %v974
      %v1131 = vsel %vm359, %v1123, %v976
      %v1132 = vsel %vm359, %v1124, %v978
      %v1133 = vsel %vm359, %v1125, %v980
      %v1134 = vsel %vm359, %v1126, %v982
      %vm1135 = vcmask 785408
      %v1136 = vsel %vm1135, %v1127, %v1000
      %v1137 = vsel %vm1135, %v1128, %v1002
      %v1138 = vsel %vm1135, %v1129, %v1004
      %v1139 = vsel %vm1135, %v1130, %v1006
      %v1140 = vsel %vm1135, %v1131, %v1008
      %v1141 = vsel %vm1135, %v1132, %v1010
      %v1142 = vsel %vm1135, %v1133, %v1012
      %v1143 = vsel %vm1135, %v1134, %v1014
      %v1144 = vsel %vm334, %v886, %v1032
      %v1145 = vsel %vm334, %v887, %v1034
      %v1146 = vsel %vm334, %v888, %v1036
      %v1147 = vsel %vm334, %v889, %v1038
      %v1148 = vsel %vm334, %v890, %v1040
      %v1149 = vsel %vm334, %v891, %v1042
      %v1150 = vsel %vm334, %v892, %v1044
      %v1151 = vsel %vm334, %v893, %v1046
      %v1152 = vsel %vm359, %v1144, %v1064
      %v1153 = vsel %vm359, %v1145, %v1066
      %v1154 = vsel %vm359, %v1146, %v1068
      %v1155 = vsel %vm359, %v1147, %v1070
      %v1156 = vsel %vm359, %v1148, %v1072
      %v1157 = vsel %vm359, %v1149, %v1074
      %v1158 = vsel %vm359, %v1150, %v1076
      %v1159 = vsel %vm359, %v1151, %v1078
      %v1160 = vsel %vm1135, %v1152, %v1096
      %v1161 = vsel %vm1135, %v1153, %v1098
      %v1162 = vsel %vm1135, %v1154, %v1100
      %v1163 = vsel %vm1135, %v1155, %v1102
      %v1164 = vsel %vm1135, %v1156, %v1104
      %v1165 = vsel %vm1135, %v1157, %v1106
      %v1166 = vsel %vm1135, %v1158, %v1108
      %v1167 = vsel %vm1135, %v1159, %v1110
      %v1168 = vpack.c.bf16 %v1137, %v1136
      %v1169 = vpack.c.bf16 %v1161, %v1160
      %v1170 = vpack.c.bf16 %v920, %v919
      %v1171 = vpack.c.bf16 %v1139, %v1138
      %v1172 = vpack.c.bf16 %v1163, %v1162
      %v1173 = vpack.c.bf16 %v922, %v921
      %v1174 = vpack.c.bf16 %v1141, %v1140
      %v1175 = vpack.c.bf16 %v1165, %v1164
      %v1176 = vpack.c.bf16 %v924, %v923
      %v1177 = vpack.c.bf16 %v1143, %v1142
      %v1178 = vpack.c.bf16 %v1167, %v1166
      %v1179 = vpack.c.bf16 %v926, %v925
      %v1180 = vld [vmem:[%s3] sm:$0xf]
      %v1181 = vld [vmem:[%s3 + $0x4] sm:$0xf]
      %v1182 = vld [vmem:[%s3 + $0x8] sm:$0xf]
      %v1183 = vld [vmem:[%s3 + $0xc] sm:$0xf]
      %v1184 = vld [vmem:[%s3 + $0x10] sm:$0xf]
      %v1185 = vld [vmem:[%s3 + $0x14] sm:$0xf]
      %v1186 = vld [vmem:[%s3 + $0x18] sm:$0xf]
      %v1187 = vld [vmem:[%s3 + $0x1c] sm:$0xf]
      %v1188 = vld [vmem:[%s3 + $0x20] sm:$0xf]
      %v1189 = vld [vmem:[%s3 + $0x24] sm:$0xf]
      %v1190 = vld [vmem:[%s3 + $0x28] sm:$0xf]
      %v1191 = vld [vmem:[%s3 + $0x2c] sm:$0xf]
      %v1192 = vld [vmem:[%s3 + $0x30] sm:$0xf]
      %v1193 = vld [vmem:[%s3 + $0x34] sm:$0xf]
      %v1194 = vld [vmem:[%s3 + $0x38] sm:$0xf]
      %v1195 = vld [vmem:[%s3 + $0x3c] sm:$0xf]
      %v1196 = vld [vmem:[%s3 + $0x40] sm:$0xf]
      %v1197 = vld [vmem:[%s3 + $0x44] sm:$0xf]
      %v1198 = vld [vmem:[%s3 + $0x48] sm:$0xf]
      %v1199 = vld [vmem:[%s3 + $0x4c] sm:$0xf]
      %v1200 = vld [vmem:[%s3 + $0x50] sm:$0xf]
      %v1201 = vld [vmem:[%s3 + $0x54] sm:$0xf]
      %v1202 = vld [vmem:[%s3 + $0x58] sm:$0xf]
      %v1203 = vld [vmem:[%s3 + $0x5c] sm:$0xf]
      %v1204 = vld [vmem:[%s3 + $0x60] sm:$0xf]
      %v1205 = vld [vmem:[%s3 + $0x64] sm:$0xf]
      %v1206 = vld [vmem:[%s3 + $0x68] sm:$0xf]
      %v1207 = vld [vmem:[%s3 + $0x6c] sm:$0xf]
      %v1208 = vld [vmem:[%s3 + $0x70] sm:$0xf]
      %v1209 = vld [vmem:[%s3 + $0x74] sm:$0xf]
      %v1210 = vld [vmem:[%s3 + $0x78] sm:$0xf]
      %v1211 = vld [vmem:[%s3 + $0x7c] sm:$0xf]
      %v1212 = vld [vmem:[%s3 + $0x80] sm:$0xf]
      %v1213 = vld [vmem:[%s3 + $0x84] sm:$0xf]
      %v1214 = vld [vmem:[%s3 + $0x88] sm:$0xf]
      %v1215 = vld [vmem:[%s3 + $0x8c] sm:$0xf]
      %v1252 = vunpack.c.l.b16 %v1180
      %v1253 = vunpack.c.l.b16 %v1181
      %v1254 = vunpack.c.l.b16 %v1182
      %v1255 = vunpack.c.l.b16 %v1183
      %v1256 = vunpack.c.l.b16 %v1184
      %v1257 = vunpack.c.l.b16 %v1185
      %v1258 = vunpack.c.l.b16 %v1186
      %v1259 = vunpack.c.l.b16 %v1187
      %v1260 = vunpack.c.l.b16 %v1188
      %v1261 = vunpack.c.l.b16 %v1189
      %v1262 = vunpack.c.l.b16 %v1190
      %v1263 = vunpack.c.l.b16 %v1191
      %v1264 = vunpack.c.l.b16 %v1192
      %v1265 = vunpack.c.l.b16 %v1193
      %v1266 = vunpack.c.l.b16 %v1194
      %v1267 = vunpack.c.l.b16 %v1195
      %v1268 = vunpack.c.l.b16 %v1196
      %v1269 = vunpack.c.l.b16 %v1197
      %v1270 = vunpack.c.l.b16 %v1198
      %v1271 = vunpack.c.l.b16 %v1199
      %v1272 = vunpack.c.l.b16 %v1200
      %v1273 = vunpack.c.l.b16 %v1201
      %v1274 = vunpack.c.l.b16 %v1202
      %v1275 = vunpack.c.l.b16 %v1203
      %v1276 = vunpack.c.l.b16 %v1204
      %v1277 = vunpack.c.l.b16 %v1205
      %v1278 = vunpack.c.l.b16 %v1206
      %v1279 = vunpack.c.l.b16 %v1207
      %v1280 = vunpack.c.l.b16 %v1208
      %v1281 = vunpack.c.l.b16 %v1209
      %v1282 = vunpack.c.l.b16 %v1210
      %v1283 = vunpack.c.l.b16 %v1211
      %v1284 = vunpack.c.l.b16 %v1212
      %v1285 = vunpack.c.l.b16 %v1213
      %v1286 = vunpack.c.l.b16 %v1214
      %v1287 = vunpack.c.l.b16 %v1215
      %v1288 = vpack.c.b16 %v1253, %v1252
      %v1289 = vpack.c.b16 %v1255, %v1254
      %v1290 = vpack.c.b16 %v1257, %v1256
      %v1291 = vpack.c.b16 %v1259, %v1258
      %v1292 = vpack.c.b16 %v1261, %v1260
      %v1293 = vpack.c.b16 %v1263, %v1262
      %v1294 = vpack.c.b16 %v1265, %v1264
      %v1295 = vpack.c.b16 %v1267, %v1266
      %v1296 = vpack.c.b16 %v1269, %v1268
      %v1297 = vpack.c.b16 %v1271, %v1270
      %v1298 = vpack.c.b16 %v1273, %v1272
      %v1299 = vpack.c.b16 %v1275, %v1274
      %v1300 = vpack.c.b16 %v1277, %v1276
      %v1301 = vpack.c.b16 %v1279, %v1278
      %v1302 = vpack.c.b16 %v1281, %v1280
      %v1303 = vpack.c.b16 %v1283, %v1282
      %v1304 = vpack.c.b16 %v1285, %v1284
      %v1305 = vpack.c.b16 %v1287, %v1286
      %v1325 = vsel %vm334, %v1170, 0
      %v1328 = vsel %vm334, %v1173, 0
      %v1331 = vsel %vm334, %v1176, 0
      %v1334 = vsel %vm334, %v1179, 0
      %1336 = vmatpush.bf16.msra.mxu0 %v1295
      %1337 = vmatpush.bf16.msra.mxu0 %v1294
      %1338 = vmatpush.bf16.msra.mxu0 %v1293
      %1339 = vmatpush.bf16.msra.mxu0 %v1292
      %1340 = vmatpush.bf16.msra.mxu0 %v1291
      %1341 = vmatpush.bf16.msra.mxu0 %v1290
      %1342 = vmatpush.bf16.msra.mxu0 %v1289
      %1343 = vmatpush.bf16.msra.mxu0 %v1288
      %1344 = vmatmul.bf16.gmra.mxu0 %v1168
      %v1345 = vpop.f32.mrf.mxu0
      %v1346 = vadd.f32 0.0, %v1345
      %v1347 = vpop.f32.mrf.mxu0
      %v1348 = vadd.f32 0.0, %v1347
      %1349 = vmatmul.bf16.gmra.mxu0 %v1171
      %v1350 = vpop.f32.mrf.mxu0
      %v1351 = vadd.f32 0.0, %v1350
      %v1352 = vpop.f32.mrf.mxu0
      %v1353 = vadd.f32 0.0, %v1352
      %1354 = vmatmul.bf16.gmra.mxu0 %v1174
      %v1355 = vpop.f32.mrf.mxu0
      %v1356 = vadd.f32 0.0, %v1355
      %v1357 = vpop.f32.mrf.mxu0
      %v1358 = vadd.f32 0.0, %v1357
      %1359 = vmatmul.bf16.gmra.mxu0 %v1177
      %v1360 = vpop.f32.mrf.mxu0
      %v1361 = vadd.f32 0.0, %v1360
      %v1362 = vpop.f32.mrf.mxu0
      %v1363 = vadd.f32 0.0, %v1362
      %1364 = vdwg.mxu0
      %1365 = vmatpush.bf16.msra.mxu0 %v1303
      %1366 = vmatpush.bf16.msra.mxu0 %v1302
      %1367 = vmatpush.bf16.msra.mxu0 %v1301
      %1368 = vmatpush.bf16.msra.mxu0 %v1300
      %1369 = vmatpush.bf16.msra.mxu0 %v1299
      %1370 = vmatpush.bf16.msra.mxu0 %v1298
      %1371 = vmatpush.bf16.msra.mxu0 %v1297
      %1372 = vmatpush.bf16.msra.mxu0 %v1296
      %1373 = vmatmul.bf16.gmra.mxu0 %v1169
      %v1374 = vpop.f32.mrf.mxu0
      %v1375 = vadd.f32 %v1346, %v1374
      %v1376 = vpop.f32.mrf.mxu0
      %v1377 = vadd.f32 %v1348, %v1376
      %1378 = vmatmul.bf16.gmra.mxu0 %v1172
      %v1379 = vpop.f32.mrf.mxu0
      %v1380 = vadd.f32 %v1351, %v1379
      %v1381 = vpop.f32.mrf.mxu0
      %v1382 = vadd.f32 %v1353, %v1381
      %1383 = vmatmul.bf16.gmra.mxu0 %v1175
      %v1384 = vpop.f32.mrf.mxu0
      %v1385 = vadd.f32 %v1356, %v1384
      %v1386 = vpop.f32.mrf.mxu0
      %v1387 = vadd.f32 %v1358, %v1386
      %1388 = vmatmul.bf16.gmra.mxu0 %v1178
      %v1389 = vpop.f32.mrf.mxu0
      %v1390 = vadd.f32 %v1361, %v1389
      %v1391 = vpop.f32.mrf.mxu0
      %v1392 = vadd.f32 %v1363, %v1391
      %1393 = vdwg.mxu0
      %1394 = vmatpush.bf16.msra.mxu0 0
      %1395 = vmatpush.bf16.msra.mxu0 0
      %1396 = vmatpush.bf16.msra.mxu0 0
      %1397 = vmatpush.bf16.msra.mxu0 0
      %1398 = vmatpush.bf16.msra.mxu0 0
      %1399 = vmatpush.bf16.msra.mxu0 0
      %1400 = vmatpush.bf16.msra.mxu0 %v1305
      %1401 = vmatpush.bf16.msra.mxu0 %v1304
      %1402 = vmatmul.bf16.gmra.mxu0 %v1325
      %v1403 = vpop.f32.mrf.mxu0
      %v1404 = vadd.f32 %v1375, %v1403
      %v1405 = vpop.f32.mrf.mxu0
      %v1406 = vadd.f32 %v1377, %v1405
      %1407 = vmatmul.bf16.gmra.mxu0 %v1328
      %v1408 = vpop.f32.mrf.mxu0
      %v1409 = vadd.f32 %v1380, %v1408
      %v1410 = vpop.f32.mrf.mxu0
      %v1411 = vadd.f32 %v1382, %v1410
      %1412 = vmatmul.bf16.gmra.mxu0 %v1331
      %v1413 = vpop.f32.mrf.mxu0
      %v1414 = vadd.f32 %v1385, %v1413
      %v1415 = vpop.f32.mrf.mxu0
      %v1416 = vadd.f32 %v1387, %v1415
      %1417 = vmatmul.bf16.gmra.mxu0 %v1334
      %v1418 = vpop.f32.mrf.mxu0
      %v1419 = vadd.f32 %v1390, %v1418
      %v1420 = vpop.f32.mrf.mxu0
      %v1421 = vadd.f32 %v1392, %v1420
      %1422 = vdwg.mxu0
      %v1423 = vmax.f32 %v1404, 0.0
      %v1424 = vmax.f32 %v1406, 0.0
      %v1425 = vmax.f32 %v1409, 0.0
      %v1426 = vmax.f32 %v1411, 0.0
      %v1427 = vmax.f32 %v1414, 0.0
      %v1428 = vmax.f32 %v1416, 0.0
      %v1429 = vmax.f32 %v1419, 0.0
      %v1430 = vmax.f32 %v1421, 0.0
      %v1431 = vpack.c.bf16 %v1424, %v1423
      %v1432 = vpack.c.bf16 %v1426, %v1425
      %v1433 = vpack.c.bf16 %v1428, %v1427
      %v1434 = vpack.c.bf16 %v1430, %v1429
      %v1435 = vld [vmem:[%s4] sm:$0xf]
      %v1436 = vld [vmem:[%s4 + $0x4] sm:$0xf]
      %v1439 = vunpack.c.l.b16 %v1435
      %v1440 = vunpack.c.l.b16 %v1436
      %v1441 = vpack.c.b16 %v1440, %v1439
      %v1444 = vsel %vm687, %v1431, 0
      %v1447 = vsel %vm687, %v1432, 0
      %v1450 = vsel %vm687, %v1433, 0
      %v1453 = vsel %vm687, %v1434, 0
      %1455 = vmatpush.bf16.msra.mxu0 0
      %1456 = vmatpush.bf16.msra.mxu0 0
      %1457 = vmatpush.bf16.msra.mxu0 0
      %1458 = vmatpush.bf16.msra.mxu0 0
      %1459 = vmatpush.bf16.msra.mxu0 0
      %1460 = vmatpush.bf16.msra.mxu0 0
      %1461 = vmatpush.bf16.msra.mxu0 0
      %1462 = vmatpush.bf16.msra.mxu0 %v1441
      %1463 = vmatmul.bf16.gmra.mxu0 %v1444
      %v1464 = vpop.f32.mrf.mxu0
      %v1465 = vadd.f32 0.0, %v1464
      %v1466 = vpop.f32.mrf.mxu0
      %v1467 = vadd.f32 0.0, %v1466
      %1468 = vmatmul.bf16.gmra.mxu0 %v1447
      %v1469 = vpop.f32.mrf.mxu0
      %v1470 = vadd.f32 0.0, %v1469
      %v1471 = vpop.f32.mrf.mxu0
      %v1472 = vadd.f32 0.0, %v1471
      %1473 = vmatmul.bf16.gmra.mxu0 %v1450
      %v1474 = vpop.f32.mrf.mxu0
      %v1475 = vadd.f32 0.0, %v1474
      %v1476 = vpop.f32.mrf.mxu0
      %v1477 = vadd.f32 0.0, %v1476
      %1478 = vmatmul.bf16.gmra.mxu0 %v1453
      %v1479 = vpop.f32.mrf.mxu0
      %v1480 = vadd.f32 0.0, %v1479
      %v1481 = vpop.f32.mrf.mxu0
      %v1482 = vadd.f32 0.0, %v1481
      %1483 = vdwg.mxu0
      %v1484 = vadd.f32 %v819, %v1465
      %v1485 = vadd.f32 %v821, %v1467
      %v1486 = vadd.f32 %v824, %v1470
      %v1487 = vadd.f32 %v826, %v1472
      %v1488 = vadd.f32 %v829, %v1475
      %v1489 = vadd.f32 %v831, %v1477
      %v1490 = vadd.f32 %v834, %v1480
      %v1491 = vadd.f32 %v836, %v1482
      %v1492 = vmax.f32 %v1484, 0.0
      %v1493 = vmax.f32 %v1485, 0.0
      %v1494 = vmax.f32 %v1486, 0.0
      %v1495 = vmax.f32 %v1487, 0.0
      %v1496 = vmax.f32 %v1488, 0.0
      %v1497 = vmax.f32 %v1489, 0.0
      %v1498 = vmax.f32 %v1490, 0.0
      %v1499 = vmax.f32 %v1491, 0.0
      %1500 = vst.msk [vmem:[%s342 + $0x8] sm:$0xff] %vm334, %v1492
      %1501 = vst.msk [vmem:[%s342 + $0x20] sm:$0xff] %vm334, %v1493
      %1502 = vst.msk [vmem:[%s342 + $0x38] sm:$0xff] %vm334, %v1494
      %1503 = vst.msk [vmem:[%s342 + $0x50] sm:$0xff] %vm334, %v1495
      %1504 = vst.msk [vmem:[%s342 + $0x68] sm:$0xff] %vm334, %v1496
      %1505 = vst.msk [vmem:[%s342 + $0x80] sm:$0xff] %vm334, %v1497
      %1506 = vst.msk [vmem:[%s342 + $0x98] sm:$0xff] %vm334, %v1498
      %1507 = vst.msk [vmem:[%s342 + $0xb0] sm:$0xff] %vm334, %v1499
      %v1508 = vld [vmem:[#allocation2 + $0x7] sm:$0xff]
      %v1509 = vld [vmem:[#allocation2 + $0x1f] sm:$0xff]
      %v1510 = vld [vmem:[#allocation2 + $0x37] sm:$0xff]
      %v1511 = vld [vmem:[#allocation2 + $0x4f] sm:$0xff]
      %v1512 = vld [vmem:[#allocation2 + $0x67] sm:$0xff]
      %v1513 = vld [vmem:[#allocation2 + $0x7f] sm:$0xff]
      %v1514 = vld [vmem:[#allocation2 + $0x97] sm:$0xff]
      %v1515 = vld [vmem:[#allocation2 + $0xaf] sm:$0xff]
      %v1516 = vld [vmem:[#allocation2 + $0x8] sm:$0xff]
      %v1517 = vld [vmem:[#allocation2 + $0x20] sm:$0xff]
      %v1518 = vld [vmem:[#allocation2 + $0x38] sm:$0xff]
      %v1519 = vld [vmem:[#allocation2 + $0x50] sm:$0xff]
      %v1520 = vld [vmem:[#allocation2 + $0x68] sm:$0xff]
      %v1521 = vld [vmem:[#allocation2 + $0x80] sm:$0xff]
      %v1522 = vld [vmem:[#allocation2 + $0x98] sm:$0xff]
      %v1523 = vld [vmem:[#allocation2 + $0xb0] sm:$0xff]
      %v1524 = vld [vmem:[#allocation2 + $0x9] sm:$0xff]
      %v1525 = vld [vmem:[#allocation2 + $0x21] sm:$0xff]
      %v1526 = vld [vmem:[#allocation2 + $0x39] sm:$0xff]
      %v1527 = vld [vmem:[#allocation2 + $0x51] sm:$0xff]
      %v1528 = vld [vmem:[#allocation2 + $0x69] sm:$0xff]
      %v1529 = vld [vmem:[#allocation2 + $0x81] sm:$0xff]
      %v1530 = vld [vmem:[#allocation2 + $0x99] sm:$0xff]
      %v1531 = vld [vmem:[#allocation2 + $0xb1] sm:$0xff]
      %v1532 = vld [vmem:[%s342 + $0x7] sm:$0xff]
      %v1533 = vld [vmem:[%s342 + $0x1f] sm:$0xff]
      %v1534 = vld [vmem:[%s342 + $0x37] sm:$0xff]
      %v1535 = vld [vmem:[%s342 + $0x4f] sm:$0xff]
      %v1536 = vld [vmem:[%s342 + $0x67] sm:$0xff]
      %v1537 = vld [vmem:[%s342 + $0x7f] sm:$0xff]
      %v1538 = vld [vmem:[%s342 + $0x97] sm:$0xff]
      %v1539 = vld [vmem:[%s342 + $0xaf] sm:$0xff]
      %v1540 = vld [vmem:[%s342 + $0x8] sm:$0xff]
      %v1541 = vld [vmem:[%s342 + $0x20] sm:$0xff]
      %v1542 = vld [vmem:[%s342 + $0x38] sm:$0xff]
      %v1543 = vld [vmem:[%s342 + $0x50] sm:$0xff]
      %v1544 = vld [vmem:[%s342 + $0x68] sm:$0xff]
      %v1545 = vld [vmem:[%s342 + $0x80] sm:$0xff]
      %v1546 = vld [vmem:[%s342 + $0x98] sm:$0xff]
      %v1547 = vld [vmem:[%s342 + $0xb0] sm:$0xff]
      %v1548 = vld [vmem:[%s342 + $0x9] sm:$0xff]
      %v1549 = vld [vmem:[%s342 + $0x21] sm:$0xff]
      %v1550 = vld [vmem:[%s342 + $0x39] sm:$0xff]
      %v1551 = vld [vmem:[%s342 + $0x51] sm:$0xff]
      %v1552 = vld [vmem:[%s342 + $0x69] sm:$0xff]
      %v1553 = vld [vmem:[%s342 + $0x81] sm:$0xff]
      %v1554 = vld [vmem:[%s342 + $0x99] sm:$0xff]
      %v1555 = vld [vmem:[%s342 + $0xb1] sm:$0xff]
      %v1556 = vld [vmem:[%s902 + $0x7] sm:$0xff]
      %v1557 = vld [vmem:[%s902 + $0x1f] sm:$0xff]
      %v1558 = vld [vmem:[%s902 + $0x37] sm:$0xff]
      %v1559 = vld [vmem:[%s902 + $0x4f] sm:$0xff]
      %v1560 = vld [vmem:[%s902 + $0x67] sm:$0xff]
      %v1561 = vld [vmem:[%s902 + $0x7f] sm:$0xff]
      %v1562 = vld [vmem:[%s902 + $0x97] sm:$0xff]
      %v1563 = vld [vmem:[%s902 + $0xaf] sm:$0xff]
      %v1564 = vld [vmem:[%s902 + $0x8] sm:$0xff]
      %v1565 = vld [vmem:[%s902 + $0x20] sm:$0xff]
      %v1566 = vld [vmem:[%s902 + $0x38] sm:$0xff]
      %v1567 = vld [vmem:[%s902 + $0x50] sm:$0xff]
      %v1568 = vld [vmem:[%s902 + $0x68] sm:$0xff]
      %v1569 = vld [vmem:[%s902 + $0x80] sm:$0xff]
      %v1570 = vld [vmem:[%s902 + $0x98] sm:$0xff]
      %v1571 = vld [vmem:[%s902 + $0xb0] sm:$0xff]
      %v1572 = vld [vmem:[%s902 + $0x9] sm:$0xff]
      %v1573 = vld [vmem:[%s902 + $0x21] sm:$0xff]
      %v1574 = vld [vmem:[%s902 + $0x39] sm:$0xff]
      %v1575 = vld [vmem:[%s902 + $0x51] sm:$0xff]
      %v1576 = vld [vmem:[%s902 + $0x69] sm:$0xff]
      %v1577 = vld [vmem:[%s902 + $0x81] sm:$0xff]
      %v1578 = vld [vmem:[%s902 + $0x99] sm:$0xff]
      %v1579 = vld [vmem:[%s902 + $0xb1] sm:$0xff]
      %1588 = vrot.lane.b32.xlu0 %v1516, 32
      %v1589 = vpop.permute.xlu0 %1588
      %1590 = vrot.lane.b32.xlu0 %v1517, 32
      %v1591 = vpop.permute.xlu0 %1590
      %1592 = vrot.lane.b32.xlu0 %v1518, 32
      %v1593 = vpop.permute.xlu0 %1592
      %1594 = vrot.lane.b32.xlu0 %v1519, 32
      %v1595 = vpop.permute.xlu0 %1594
      %1596 = vrot.lane.b32.xlu0 %v1520, 32
      %v1597 = vpop.permute.xlu0 %1596
      %1598 = vrot.lane.b32.xlu0 %v1521, 32
      %v1599 = vpop.permute.xlu0 %1598
      %1600 = vrot.lane.b32.xlu0 %v1522, 32
      %v1601 = vpop.permute.xlu0 %1600
      %1602 = vrot.lane.b32.xlu0 %v1523, 32
      %v1603 = vpop.permute.xlu0 %1602
      %1620 = vrot.lane.b32.xlu0 %v1524, 64
      %v1621 = vpop.permute.xlu0 %1620
      %1622 = vrot.lane.b32.xlu0 %v1525, 64
      %v1623 = vpop.permute.xlu0 %1622
      %1624 = vrot.lane.b32.xlu0 %v1526, 64
      %v1625 = vpop.permute.xlu0 %1624
      %1626 = vrot.lane.b32.xlu0 %v1527, 64
      %v1627 = vpop.permute.xlu0 %1626
      %1628 = vrot.lane.b32.xlu0 %v1528, 64
      %v1629 = vpop.permute.xlu0 %1628
      %1630 = vrot.lane.b32.xlu0 %v1529, 64
      %v1631 = vpop.permute.xlu0 %1630
      %1632 = vrot.lane.b32.xlu0 %v1530, 64
      %v1633 = vpop.permute.xlu0 %1632
      %1634 = vrot.lane.b32.xlu0 %v1531, 64
      %v1635 = vpop.permute.xlu0 %1634
      %1652 = vrot.lane.b32.xlu0 %v1532, 96
      %v1653 = vpop.permute.xlu0 %1652
      %1654 = vrot.lane.b32.xlu0 %v1533, 96
      %v1655 = vpop.permute.xlu0 %1654
      %1656 = vrot.lane.b32.xlu0 %v1534, 96
      %v1657 = vpop.permute.xlu0 %1656
      %1658 = vrot.lane.b32.xlu0 %v1535, 96
      %v1659 = vpop.permute.xlu0 %1658
      %1660 = vrot.lane.b32.xlu0 %v1536, 96
      %v1661 = vpop.permute.xlu0 %1660
      %1662 = vrot.lane.b32.xlu0 %v1537, 96
      %v1663 = vpop.permute.xlu0 %1662
      %1664 = vrot.lane.b32.xlu0 %v1538, 96
      %v1665 = vpop.permute.xlu0 %1664
      %1666 = vrot.lane.b32.xlu0 %v1539, 96
      %v1667 = vpop.permute.xlu0 %1666
      %1684 = vrot.lane.b32.xlu0 %v1548, 32
      %v1685 = vpop.permute.xlu0 %1684
      %1686 = vrot.lane.b32.xlu0 %v1549, 32
      %v1687 = vpop.permute.xlu0 %1686
      %1688 = vrot.lane.b32.xlu0 %v1550, 32
      %v1689 = vpop.permute.xlu0 %1688
      %1690 = vrot.lane.b32.xlu0 %v1551, 32
      %v1691 = vpop.permute.xlu0 %1690
      %1692 = vrot.lane.b32.xlu0 %v1552, 32
      %v1693 = vpop.permute.xlu0 %1692
      %1694 = vrot.lane.b32.xlu0 %v1553, 32
      %v1695 = vpop.permute.xlu0 %1694
      %1696 = vrot.lane.b32.xlu0 %v1554, 32
      %v1697 = vpop.permute.xlu0 %1696
      %1698 = vrot.lane.b32.xlu0 %v1555, 32
      %v1699 = vpop.permute.xlu0 %1698
      %1716 = vrot.lane.b32.xlu0 %v1556, 64
      %v1717 = vpop.permute.xlu0 %1716
      %1718 = vrot.lane.b32.xlu0 %v1557, 64
      %v1719 = vpop.permute.xlu0 %1718
      %1720 = vrot.lane.b32.xlu0 %v1558, 64
      %v1721 = vpop.permute.xlu0 %1720
      %1722 = vrot.lane.b32.xlu0 %v1559, 64
      %v1723 = vpop.permute.xlu0 %1722
      %1724 = vrot.lane.b32.xlu0 %v1560, 64
      %v1725 = vpop.permute.xlu0 %1724
      %1726 = vrot.lane.b32.xlu0 %v1561, 64
      %v1727 = vpop.permute.xlu0 %1726
      %1728 = vrot.lane.b32.xlu0 %v1562, 64
      %v1729 = vpop.permute.xlu0 %1728
      %1730 = vrot.lane.b32.xlu0 %v1563, 64
      %v1731 = vpop.permute.xlu0 %1730
      %1748 = vrot.lane.b32.xlu0 %v1564, 96
      %v1749 = vpop.permute.xlu0 %1748
      %1750 = vrot.lane.b32.xlu0 %v1565, 96
      %v1751 = vpop.permute.xlu0 %1750
      %1752 = vrot.lane.b32.xlu0 %v1566, 96
      %v1753 = vpop.permute.xlu0 %1752
      %1754 = vrot.lane.b32.xlu0 %v1567, 96
      %v1755 = vpop.permute.xlu0 %1754
      %1756 = vrot.lane.b32.xlu0 %v1568, 96
      %v1757 = vpop.permute.xlu0 %1756
      %1758 = vrot.lane.b32.xlu0 %v1569, 96
      %v1759 = vpop.permute.xlu0 %1758
      %1760 = vrot.lane.b32.xlu0 %v1570, 96
      %v1761 = vpop.permute.xlu0 %1760
      %1762 = vrot.lane.b32.xlu0 %v1571, 96
      %v1763 = vpop.permute.xlu0 %1762
      %v1772 = vsel %vm334, %v1508, %v1589
      %v1773 = vsel %vm334, %v1509, %v1591
      %v1774 = vsel %vm334, %v1510, %v1593
      %v1775 = vsel %vm334, %v1511, %v1595
      %v1776 = vsel %vm334, %v1512, %v1597
      %v1777 = vsel %vm334, %v1513, %v1599
      %v1778 = vsel %vm334, %v1514, %v1601
      %v1779 = vsel %vm334, %v1515, %v1603
      %v1780 = vsel %vm359, %v1772, %v1621
      %v1781 = vsel %vm359, %v1773, %v1623
      %v1782 = vsel %vm359, %v1774, %v1625
      %v1783 = vsel %vm359, %v1775, %v1627
      %v1784 = vsel %vm359, %v1776, %v1629
      %v1785 = vsel %vm359, %v1777, %v1631
      %v1786 = vsel %vm359, %v1778, %v1633
      %v1787 = vsel %vm359, %v1779, %v1635
      %v1788 = vsel %vm1135, %v1780, %v1653
      %v1789 = vsel %vm1135, %v1781, %v1655
      %v1790 = vsel %vm1135, %v1782, %v1657
      %v1791 = vsel %vm1135, %v1783, %v1659
      %v1792 = vsel %vm1135, %v1784, %v1661
      %v1793 = vsel %vm1135, %v1785, %v1663
      %v1794 = vsel %vm1135, %v1786, %v1665
      %v1795 = vsel %vm1135, %v1787, %v1667
      %v1796 = vsel %vm334, %v1540, %v1685
      %v1797 = vsel %vm334, %v1541, %v1687
      %v1798 = vsel %vm334, %v1542, %v1689
      %v1799 = vsel %vm334, %v1543, %v1691
      %v1800 = vsel %vm334, %v1544, %v1693
      %v1801 = vsel %vm334, %v1545, %v1695
      %v1802 = vsel %vm334, %v1546, %v1697
      %v1803 = vsel %vm334, %v1547, %v1699
      %v1804 = vsel %vm359, %v1796, %v1717
      %v1805 = vsel %vm359, %v1797, %v1719
      %v1806 = vsel %vm359, %v1798, %v1721
      %v1807 = vsel %vm359, %v1799, %v1723
      %v1808 = vsel %vm359, %v1800, %v1725
      %v1809 = vsel %vm359, %v1801, %v1727
      %v1810 = vsel %vm359, %v1802, %v1729
      %v1811 = vsel %vm359, %v1803, %v1731
      %v1812 = vsel %vm1135, %v1804, %v1749
      %v1813 = vsel %vm1135, %v1805, %v1751
      %v1814 = vsel %vm1135, %v1806, %v1753
      %v1815 = vsel %vm1135, %v1807, %v1755
      %v1816 = vsel %vm1135, %v1808, %v1757
      %v1817 = vsel %vm1135, %v1809, %v1759
      %v1818 = vsel %vm1135, %v1810, %v1761
      %v1819 = vsel %vm1135, %v1811, %v1763
      %v1820 = vpack.c.bf16 %v1789, %v1788
      %v1821 = vpack.c.bf16 %v1813, %v1812
      %v1822 = vpack.c.bf16 %v1573, %v1572
      %v1823 = vpack.c.bf16 %v1791, %v1790
      %v1824 = vpack.c.bf16 %v1815, %v1814
      %v1825 = vpack.c.bf16 %v1575, %v1574
      %v1826 = vpack.c.bf16 %v1793, %v1792
      %v1827 = vpack.c.bf16 %v1817, %v1816
      %v1828 = vpack.c.bf16 %v1577, %v1576
      %v1829 = vpack.c.bf16 %v1795, %v1794
      %v1830 = vpack.c.bf16 %v1819, %v1818
      %v1831 = vpack.c.bf16 %v1579, %v1578
      %s1832 = scalar_lea.vmem %s3, 144
      %v1833 = vld [vmem:[%s1832] sm:$0xf]
      %v1834 = vld [vmem:[%s1832 + $0x4] sm:$0xf]
      %v1835 = vld [vmem:[%s1832 + $0x8] sm:$0xf]
      %v1836 = vld [vmem:[%s1832 + $0xc] sm:$0xf]
      %v1837 = vld [vmem:[%s1832 + $0x10] sm:$0xf]
      %v1838 = vld [vmem:[%s1832 + $0x14] sm:$0xf]
      %v1839 = vld [vmem:[%s1832 + $0x18] sm:$0xf]
      %v1840 = vld [vmem:[%s1832 + $0x1c] sm:$0xf]
      %v1841 = vld [vmem:[%s1832 + $0x20] sm:$0xf]
      %v1842 = vld [vmem:[%s1832 + $0x24] sm:$0xf]
      %v1843 = vld [vmem:[%s1832 + $0x28] sm:$0xf]
      %v1844 = vld [vmem:[%s1832 + $0x2c] sm:$0xf]
      %v1845 = vld [vmem:[%s1832 + $0x30] sm:$0xf]
      %v1846 = vld [vmem:[%s1832 + $0x34] sm:$0xf]
      %v1847 = vld [vmem:[%s1832 + $0x38] sm:$0xf]
      %v1848 = vld [vmem:[%s1832 + $0x3c] sm:$0xf]
      %v1849 = vld [vmem:[%s1832 + $0x40] sm:$0xf]
      %v1850 = vld [vmem:[%s1832 + $0x44] sm:$0xf]
      %v1851 = vld [vmem:[%s1832 + $0x48] sm:$0xf]
      %v1852 = vld [vmem:[%s1832 + $0x4c] sm:$0xf]
      %v1853 = vld [vmem:[%s1832 + $0x50] sm:$0xf]
      %v1854 = vld [vmem:[%s1832 + $0x54] sm:$0xf]
      %v1855 = vld [vmem:[%s1832 + $0x58] sm:$0xf]
      %v1856 = vld [vmem:[%s1832 + $0x5c] sm:$0xf]
      %v1857 = vld [vmem:[%s1832 + $0x60] sm:$0xf]
      %v1858 = vld [vmem:[%s1832 + $0x64] sm:$0xf]
      %v1859 = vld [vmem:[%s1832 + $0x68] sm:$0xf]
      %v1860 = vld [vmem:[%s1832 + $0x6c] sm:$0xf]
      %v1861 = vld [vmem:[%s1832 + $0x70] sm:$0xf]
      %v1862 = vld [vmem:[%s1832 + $0x74] sm:$0xf]
      %v1863 = vld [vmem:[%s1832 + $0x78] sm:$0xf]
      %v1864 = vld [vmem:[%s1832 + $0x7c] sm:$0xf]
      %v1865 = vld [vmem:[%s1832 + $0x80] sm:$0xf]
      %v1866 = vld [vmem:[%s1832 + $0x84] sm:$0xf]
      %v1867 = vld [vmem:[%s1832 + $0x88] sm:$0xf]
      %v1868 = vld [vmem:[%s1832 + $0x8c] sm:$0xf]
      %v1905 = vunpack.c.l.b16 %v1833
      %v1906 = vunpack.c.l.b16 %v1834
      %v1907 = vunpack.c.l.b16 %v1835
      %v1908 = vunpack.c.l.b16 %v1836
      %v1909 = vunpack.c.l.b16 %v1837
      %v1910 = vunpack.c.l.b16 %v1838
      %v1911 = vunpack.c.l.b16 %v1839
      %v1912 = vunpack.c.l.b16 %v1840
      %v1913 = vunpack.c.l.b16 %v1841
      %v1914 = vunpack.c.l.b16 %v1842
      %v1915 = vunpack.c.l.b16 %v1843
      %v1916 = vunpack.c.l.b16 %v1844
      %v1917 = vunpack.c.l.b16 %v1845
      %v1918 = vunpack.c.l.b16 %v1846
      %v1919 = vunpack.c.l.b16 %v1847
      %v1920 = vunpack.c.l.b16 %v1848
      %v1921 = vunpack.c.l.b16 %v1849
      %v1922 = vunpack.c.l.b16 %v1850
      %v1923 = vunpack.c.l.b16 %v1851
      %v1924 = vunpack.c.l.b16 %v1852
      %v1925 = vunpack.c.l.b16 %v1853
      %v1926 = vunpack.c.l.b16 %v1854
      %v1927 = vunpack.c.l.b16 %v1855
      %v1928 = vunpack.c.l.b16 %v1856
      %v1929 = vunpack.c.l.b16 %v1857
      %v1930 = vunpack.c.l.b16 %v1858
      %v1931 = vunpack.c.l.b16 %v1859
      %v1932 = vunpack.c.l.b16 %v1860
      %v1933 = vunpack.c.l.b16 %v1861
      %v1934 = vunpack.c.l.b16 %v1862
      %v1935 = vunpack.c.l.b16 %v1863
      %v1936 = vunpack.c.l.b16 %v1864
      %v1937 = vunpack.c.l.b16 %v1865
      %v1938 = vunpack.c.l.b16 %v1866
      %v1939 = vunpack.c.l.b16 %v1867
      %v1940 = vunpack.c.l.b16 %v1868
      %v1941 = vpack.c.b16 %v1906, %v1905
      %v1942 = vpack.c.b16 %v1908, %v1907
      %v1943 = vpack.c.b16 %v1910, %v1909
      %v1944 = vpack.c.b16 %v1912, %v1911
      %v1945 = vpack.c.b16 %v1914, %v1913
      %v1946 = vpack.c.b16 %v1916, %v1915
      %v1947 = vpack.c.b16 %v1918, %v1917
      %v1948 = vpack.c.b16 %v1920, %v1919
      %v1949 = vpack.c.b16 %v1922, %v1921
      %v1950 = vpack.c.b16 %v1924, %v1923
      %v1951 = vpack.c.b16 %v1926, %v1925
      %v1952 = vpack.c.b16 %v1928, %v1927
      %v1953 = vpack.c.b16 %v1930, %v1929
      %v1954 = vpack.c.b16 %v1932, %v1931
      %v1955 = vpack.c.b16 %v1934, %v1933
      %v1956 = vpack.c.b16 %v1936, %v1935
      %v1957 = vpack.c.b16 %v1938, %v1937
      %v1958 = vpack.c.b16 %v1940, %v1939
      %v1978 = vsel %vm334, %v1822, 0
      %v1981 = vsel %vm334, %v1825, 0
      %v1984 = vsel %vm334, %v1828, 0
      %v1987 = vsel %vm334, %v1831, 0
      %1989 = vmatpush.bf16.msra.mxu0 %v1948
      %1990 = vmatpush.bf16.msra.mxu0 %v1947
      %1991 = vmatpush.bf16.msra.mxu0 %v1946
      %1992 = vmatpush.bf16.msra.mxu0 %v1945
      %1993 = vmatpush.bf16.msra.mxu0 %v1944
      %1994 = vmatpush.bf16.msra.mxu0 %v1943
      %1995 = vmatpush.bf16.msra.mxu0 %v1942
      %1996 = vmatpush.bf16.msra.mxu0 %v1941
      %1997 = vmatmul.bf16.gmra.mxu0 %v1820
      %v1998 = vpop.f32.mrf.mxu0
      %v1999 = vadd.f32 0.0, %v1998
      %v2000 = vpop.f32.mrf.mxu0
      %v2001 = vadd.f32 0.0, %v2000
      %2002 = vmatmul.bf16.gmra.mxu0 %v1823
      %v2003 = vpop.f32.mrf.mxu0
      %v2004 = vadd.f32 0.0, %v2003
      %v2005 = vpop.f32.mrf.mxu0
      %v2006 = vadd.f32 0.0, %v2005
      %2007 = vmatmul.bf16.gmra.mxu0 %v1826
      %v2008 = vpop.f32.mrf.mxu0
      %v2009 = vadd.f32 0.0, %v2008
      %v2010 = vpop.f32.mrf.mxu0
      %v2011 = vadd.f32 0.0, %v2010
      %2012 = vmatmul.bf16.gmra.mxu0 %v1829
      %v2013 = vpop.f32.mrf.mxu0
      %v2014 = vadd.f32 0.0, %v2013
      %v2015 = vpop.f32.mrf.mxu0
      %v2016 = vadd.f32 0.0, %v2015
      %2017 = vdwg.mxu0
      %2018 = vmatpush.bf16.msra.mxu0 %v1956
      %2019 = vmatpush.bf16.msra.mxu0 %v1955
      %2020 = vmatpush.bf16.msra.mxu0 %v1954
      %2021 = vmatpush.bf16.msra.mxu0 %v1953
      %2022 = vmatpush.bf16.msra.mxu0 %v1952
      %2023 = vmatpush.bf16.msra.mxu0 %v1951
      %2024 = vmatpush.bf16.msra.mxu0 %v1950
      %2025 = vmatpush.bf16.msra.mxu0 %v1949
      %2026 = vmatmul.bf16.gmra.mxu0 %v1821
      %v2027 = vpop.f32.mrf.mxu0
      %v2028 = vadd.f32 %v1999, %v2027
      %v2029 = vpop.f32.mrf.mxu0
      %v2030 = vadd.f32 %v2001, %v2029
      %2031 = vmatmul.bf16.gmra.mxu0 %v1824
      %v2032 = vpop.f32.mrf.mxu0
      %v2033 = vadd.f32 %v2004, %v2032
      %v2034 = vpop.f32.mrf.mxu0
      %v2035 = vadd.f32 %v2006, %v2034
      %2036 = vmatmul.bf16.gmra.mxu0 %v1827
      %v2037 = vpop.f32.mrf.mxu0
      %v2038 = vadd.f32 %v2009, %v2037
      %v2039 = vpop.f32.mrf.mxu0
      %v2040 = vadd.f32 %v2011, %v2039
      %2041 = vmatmul.bf16.gmra.mxu0 %v1830
      %v2042 = vpop.f32.mrf.mxu0
      %v2043 = vadd.f32 %v2014, %v2042
      %v2044 = vpop.f32.mrf.mxu0
      %v2045 = vadd.f32 %v2016, %v2044
      %2046 = vdwg.mxu0
      %2047 = vmatpush.bf16.msra.mxu0 0
      %2048 = vmatpush.bf16.msra.mxu0 0
      %2049 = vmatpush.bf16.msra.mxu0 0
      %2050 = vmatpush.bf16.msra.mxu0 0
      %2051 = vmatpush.bf16.msra.mxu0 0
      %2052 = vmatpush.bf16.msra.mxu0 0
      %2053 = vmatpush.bf16.msra.mxu0 %v1958
      %2054 = vmatpush.bf16.msra.mxu0 %v1957
      %2055 = vmatmul.bf16.gmra.mxu0 %v1978
      %v2056 = vpop.f32.mrf.mxu0
      %v2057 = vadd.f32 %v2028, %v2056
      %v2058 = vpop.f32.mrf.mxu0
      %v2059 = vadd.f32 %v2030, %v2058
      %2060 = vmatmul.bf16.gmra.mxu0 %v1981
      %v2061 = vpop.f32.mrf.mxu0
      %v2062 = vadd.f32 %v2033, %v2061
      %v2063 = vpop.f32.mrf.mxu0
      %v2064 = vadd.f32 %v2035, %v2063
      %2065 = vmatmul.bf16.gmra.mxu0 %v1984
      %v2066 = vpop.f32.mrf.mxu0
      %v2067 = vadd.f32 %v2038, %v2066
      %v2068 = vpop.f32.mrf.mxu0
      %v2069 = vadd.f32 %v2040, %v2068
      %2070 = vmatmul.bf16.gmra.mxu0 %v1987
      %v2071 = vpop.f32.mrf.mxu0
      %v2072 = vadd.f32 %v2043, %v2071
      %v2073 = vpop.f32.mrf.mxu0
      %v2074 = vadd.f32 %v2045, %v2073
      %2075 = vdwg.mxu0
      %v2076 = vmax.f32 %v2057, 0.0
      %v2077 = vmax.f32 %v2059, 0.0
      %v2078 = vmax.f32 %v2062, 0.0
      %v2079 = vmax.f32 %v2064, 0.0
      %v2080 = vmax.f32 %v2067, 0.0
      %v2081 = vmax.f32 %v2069, 0.0
      %v2082 = vmax.f32 %v2072, 0.0
      %v2083 = vmax.f32 %v2074, 0.0
      %v2084 = vpack.c.bf16 %v2077, %v2076
      %v2085 = vpack.c.bf16 %v2079, %v2078
      %v2086 = vpack.c.bf16 %v2081, %v2080
      %v2087 = vpack.c.bf16 %v2083, %v2082
      %s2088 = scalar_lea.vmem %s4, 8
      %v2089 = vld [vmem:[%s2088] sm:$0xf]
      %v2090 = vld [vmem:[%s2088 + $0x4] sm:$0xf]
      %v2093 = vunpack.c.l.b16 %v2089
      %v2094 = vunpack.c.l.b16 %v2090
      %v2095 = vpack.c.b16 %v2094, %v2093
      %v2098 = vsel %vm687, %v2084, 0
      %v2101 = vsel %vm687, %v2085, 0
      %v2104 = vsel %vm687, %v2086, 0
      %v2107 = vsel %vm687, %v2087, 0
      %2109 = vmatpush.bf16.msra.mxu0 0
      %2110 = vmatpush.bf16.msra.mxu0 0
      %2111 = vmatpush.bf16.msra.mxu0 0
      %2112 = vmatpush.bf16.msra.mxu0 0
      %2113 = vmatpush.bf16.msra.mxu0 0
      %2114 = vmatpush.bf16.msra.mxu0 0
      %2115 = vmatpush.bf16.msra.mxu0 0
      %2116 = vmatpush.bf16.msra.mxu0 %v2095
      %2117 = vmatmul.bf16.gmra.mxu0 %v2098
      %v2118 = vpop.f32.mrf.mxu0
      %v2119 = vadd.f32 0.0, %v2118
      %v2120 = vpop.f32.mrf.mxu0
      %v2121 = vadd.f32 0.0, %v2120
      %2122 = vmatmul.bf16.gmra.mxu0 %v2101
      %v2123 = vpop.f32.mrf.mxu0
      %v2124 = vadd.f32 0.0, %v2123
      %v2125 = vpop.f32.mrf.mxu0
      %v2126 = vadd.f32 0.0, %v2125
      %2127 = vmatmul.bf16.gmra.mxu0 %v2104
      %v2128 = vpop.f32.mrf.mxu0
      %v2129 = vadd.f32 0.0, %v2128
      %v2130 = vpop.f32.mrf.mxu0
      %v2131 = vadd.f32 0.0, %v2130
      %2132 = vmatmul.bf16.gmra.mxu0 %v2107
      %v2133 = vpop.f32.mrf.mxu0
      %v2134 = vadd.f32 0.0, %v2133
      %v2135 = vpop.f32.mrf.mxu0
      %v2136 = vadd.f32 0.0, %v2135
      %2137 = vdwg.mxu0
      %v2138 = vadd.f32 %v1484, %v2119
      %v2139 = vadd.f32 %v1485, %v2121
      %v2140 = vadd.f32 %v1486, %v2124
      %v2141 = vadd.f32 %v1487, %v2126
      %v2142 = vadd.f32 %v1488, %v2129
      %v2143 = vadd.f32 %v1489, %v2131
      %v2144 = vadd.f32 %v1490, %v2134
      %v2145 = vadd.f32 %v1491, %v2136
      %v2146 = vmax.f32 %v2138, 0.0
      %v2147 = vmax.f32 %v2139, 0.0
      %v2148 = vmax.f32 %v2140, 0.0
      %v2149 = vmax.f32 %v2141, 0.0
      %v2150 = vmax.f32 %v2142, 0.0
      %v2151 = vmax.f32 %v2143, 0.0
      %v2152 = vmax.f32 %v2144, 0.0
      %v2153 = vmax.f32 %v2145, 0.0
      %2154 = vst.msk [vmem:[%s342 + $0x8] sm:$0xff] %vm334, %v2146
      %2155 = vst.msk [vmem:[%s342 + $0x20] sm:$0xff] %vm334, %v2147
      %2156 = vst.msk [vmem:[%s342 + $0x38] sm:$0xff] %vm334, %v2148
      %2157 = vst.msk [vmem:[%s342 + $0x50] sm:$0xff] %vm334, %v2149
      %2158 = vst.msk [vmem:[%s342 + $0x68] sm:$0xff] %vm334, %v2150
      %2159 = vst.msk [vmem:[%s342 + $0x80] sm:$0xff] %vm334, %v2151
      %2160 = vst.msk [vmem:[%s342 + $0x98] sm:$0xff] %vm334, %v2152
      %2161 = vst.msk [vmem:[%s342 + $0xb0] sm:$0xff] %vm334, %v2153
      %v2162 = vld [vmem:[#allocation2 + $0x7] sm:$0xff]
      %v2163 = vld [vmem:[#allocation2 + $0x1f] sm:$0xff]
      %v2164 = vld [vmem:[#allocation2 + $0x37] sm:$0xff]
      %v2165 = vld [vmem:[#allocation2 + $0x4f] sm:$0xff]
      %v2166 = vld [vmem:[#allocation2 + $0x67] sm:$0xff]
      %v2167 = vld [vmem:[#allocation2 + $0x7f] sm:$0xff]
      %v2168 = vld [vmem:[#allocation2 + $0x97] sm:$0xff]
      %v2169 = vld [vmem:[#allocation2 + $0xaf] sm:$0xff]
      %v2170 = vld [vmem:[#allocation2 + $0x8] sm:$0xff]
      %v2171 = vld [vmem:[#allocation2 + $0x20] sm:$0xff]
      %v2172 = vld [vmem:[#allocation2 + $0x38] sm:$0xff]
      %v2173 = vld [vmem:[#allocation2 + $0x50] sm:$0xff]
      %v2174 = vld [vmem:[#allocation2 + $0x68] sm:$0xff]
      %v2175 = vld [vmem:[#allocation2 + $0x80] sm:$0xff]
      %v2176 = vld [vmem:[#allocation2 + $0x98] sm:$0xff]
      %v2177 = vld [vmem:[#allocation2 + $0xb0] sm:$0xff]
      %v2178 = vld [vmem:[#allocation2 + $0x9] sm:$0xff]
      %v2179 = vld [vmem:[#allocation2 + $0x21] sm:$0xff]
      %v2180 = vld [vmem:[#allocation2 + $0x39] sm:$0xff]
      %v2181 = vld [vmem:[#allocation2 + $0x51] sm:$0xff]
      %v2182 = vld [vmem:[#allocation2 + $0x69] sm:$0xff]
      %v2183 = vld [vmem:[#allocation2 + $0x81] sm:$0xff]
      %v2184 = vld [vmem:[#allocation2 + $0x99] sm:$0xff]
      %v2185 = vld [vmem:[#allocation2 + $0xb1] sm:$0xff]
      %v2186 = vld [vmem:[%s342 + $0x7] sm:$0xff]
      %v2187 = vld [vmem:[%s342 + $0x1f] sm:$0xff]
      %v2188 = vld [vmem:[%s342 + $0x37] sm:$0xff]
      %v2189 = vld [vmem:[%s342 + $0x4f] sm:$0xff]
      %v2190 = vld [vmem:[%s342 + $0x67] sm:$0xff]
      %v2191 = vld [vmem:[%s342 + $0x7f] sm:$0xff]
      %v2192 = vld [vmem:[%s342 + $0x97] sm:$0xff]
      %v2193 = vld [vmem:[%s342 + $0xaf] sm:$0xff]
      %v2194 = vld [vmem:[%s342 + $0x8] sm:$0xff]
      %v2195 = vld [vmem:[%s342 + $0x20] sm:$0xff]
      %v2196 = vld [vmem:[%s342 + $0x38] sm:$0xff]
      %v2197 = vld [vmem:[%s342 + $0x50] sm:$0xff]
      %v2198 = vld [vmem:[%s342 + $0x68] sm:$0xff]
      %v2199 = vld [vmem:[%s342 + $0x80] sm:$0xff]
      %v2200 = vld [vmem:[%s342 + $0x98] sm:$0xff]
      %v2201 = vld [vmem:[%s342 + $0xb0] sm:$0xff]
      %v2202 = vld [vmem:[%s342 + $0x9] sm:$0xff]
      %v2203 = vld [vmem:[%s342 + $0x21] sm:$0xff]
      %v2204 = vld [vmem:[%s342 + $0x39] sm:$0xff]
      %v2205 = vld [vmem:[%s342 + $0x51] sm:$0xff]
      %v2206 = vld [vmem:[%s342 + $0x69] sm:$0xff]
      %v2207 = vld [vmem:[%s342 + $0x81] sm:$0xff]
      %v2208 = vld [vmem:[%s342 + $0x99] sm:$0xff]
      %v2209 = vld [vmem:[%s342 + $0xb1] sm:$0xff]
      %v2210 = vld [vmem:[%s902 + $0x7] sm:$0xff]
      %v2211 = vld [vmem:[%s902 + $0x1f] sm:$0xff]
      %v2212 = vld [vmem:[%s902 + $0x37] sm:$0xff]
      %v2213 = vld [vmem:[%s902 + $0x4f] sm:$0xff]
      %v2214 = vld [vmem:[%s902 + $0x67] sm:$0xff]
      %v2215 = vld [vmem:[%s902 + $0x7f] sm:$0xff]
      %v2216 = vld [vmem:[%s902 + $0x97] sm:$0xff]
      %v2217 = vld [vmem:[%s902 + $0xaf] sm:$0xff]
      %v2218 = vld [vmem:[%s902 + $0x8] sm:$0xff]
      %v2219 = vld [vmem:[%s902 + $0x20] sm:$0xff]
      %v2220 = vld [vmem:[%s902 + $0x38] sm:$0xff]
      %v2221 = vld [vmem:[%s902 + $0x50] sm:$0xff]
      %v2222 = vld [vmem:[%s902 + $0x68] sm:$0xff]
      %v2223 = vld [vmem:[%s902 + $0x80] sm:$0xff]
      %v2224 = vld [vmem:[%s902 + $0x98] sm:$0xff]
      %v2225 = vld [vmem:[%s902 + $0xb0] sm:$0xff]
      %v2226 = vld [vmem:[%s902 + $0x9] sm:$0xff]
      %v2227 = vld [vmem:[%s902 + $0x21] sm:$0xff]
      %v2228 = vld [vmem:[%s902 + $0x39] sm:$0xff]
      %v2229 = vld [vmem:[%s902 + $0x51] sm:$0xff]
      %v2230 = vld [vmem:[%s902 + $0x69] sm:$0xff]
      %v2231 = vld [vmem:[%s902 + $0x81] sm:$0xff]
      %v2232 = vld [vmem:[%s902 + $0x99] sm:$0xff]
      %v2233 = vld [vmem:[%s902 + $0xb1] sm:$0xff]
      %2242 = vrot.lane.b32.xlu0 %v2170, 32
      %v2243 = vpop.permute.xlu0 %2242
      %2244 = vrot.lane.b32.xlu0 %v2171, 32
      %v2245 = vpop.permute.xlu0 %2244
      %2246 = vrot.lane.b32.xlu0 %v2172, 32
      %v2247 = vpop.permute.xlu0 %2246
      %2248 = vrot.lane.b32.xlu0 %v2173, 32
      %v2249 = vpop.permute.xlu0 %2248
      %2250 = vrot.lane.b32.xlu0 %v2174, 32
      %v2251 = vpop.permute.xlu0 %2250
      %2252 = vrot.lane.b32.xlu0 %v2175, 32
      %v2253 = vpop.permute.xlu0 %2252
      %2254 = vrot.lane.b32.xlu0 %v2176, 32
      %v2255 = vpop.permute.xlu0 %2254
      %2256 = vrot.lane.b32.xlu0 %v2177, 32
      %v2257 = vpop.permute.xlu0 %2256
      %2274 = vrot.lane.b32.xlu0 %v2178, 64
      %v2275 = vpop.permute.xlu0 %2274
      %2276 = vrot.lane.b32.xlu0 %v2179, 64
      %v2277 = vpop.permute.xlu0 %2276
      %2278 = vrot.lane.b32.xlu0 %v2180, 64
      %v2279 = vpop.permute.xlu0 %2278
      %2280 = vrot.lane.b32.xlu0 %v2181, 64
      %v2281 = vpop.permute.xlu0 %2280
      %2282 = vrot.lane.b32.xlu0 %v2182, 64
      %v2283 = vpop.permute.xlu0 %2282
      %2284 = vrot.lane.b32.xlu0 %v2183, 64
      %v2285 = vpop.permute.xlu0 %2284
      %2286 = vrot.lane.b32.xlu0 %v2184, 64
      %v2287 = vpop.permute.xlu0 %2286
      %2288 = vrot.lane.b32.xlu0 %v2185, 64
      %v2289 = vpop.permute.xlu0 %2288
      %2306 = vrot.lane.b32.xlu0 %v2186, 96
      %v2307 = vpop.permute.xlu0 %2306
      %2308 = vrot.lane.b32.xlu0 %v2187, 96
      %v2309 = vpop.permute.xlu0 %2308
      %2310 = vrot.lane.b32.xlu0 %v2188, 96
      %v2311 = vpop.permute.xlu0 %2310
      %2312 = vrot.lane.b32.xlu0 %v2189, 96
      %v2313 = vpop.permute.xlu0 %2312
      %2314 = vrot.lane.b32.xlu0 %v2190, 96
      %v2315 = vpop.permute.xlu0 %2314
      %2316 = vrot.lane.b32.xlu0 %v2191, 96
      %v2317 = vpop.permute.xlu0 %2316
      %2318 = vrot.lane.b32.xlu0 %v2192, 96
      %v2319 = vpop.permute.xlu0 %2318
      %2320 = vrot.lane.b32.xlu0 %v2193, 96
      %v2321 = vpop.permute.xlu0 %2320
      %2338 = vrot.lane.b32.xlu0 %v2202, 32
      %v2339 = vpop.permute.xlu0 %2338
      %2340 = vrot.lane.b32.xlu0 %v2203, 32
      %v2341 = vpop.permute.xlu0 %2340
      %2342 = vrot.lane.b32.xlu0 %v2204, 32
      %v2343 = vpop.permute.xlu0 %2342
      %2344 = vrot.lane.b32.xlu0 %v2205, 32
      %v2345 = vpop.permute.xlu0 %2344
      %2346 = vrot.lane.b32.xlu0 %v2206, 32
      %v2347 = vpop.permute.xlu0 %2346
      %2348 = vrot.lane.b32.xlu0 %v2207, 32
      %v2349 = vpop.permute.xlu0 %2348
      %2350 = vrot.lane.b32.xlu0 %v2208, 32
      %v2351 = vpop.permute.xlu0 %2350
      %2352 = vrot.lane.b32.xlu0 %v2209, 32
      %v2353 = vpop.permute.xlu0 %2352
      %2370 = vrot.lane.b32.xlu0 %v2210, 64
      %v2371 = vpop.permute.xlu0 %2370
      %2372 = vrot.lane.b32.xlu0 %v2211, 64
      %v2373 = vpop.permute.xlu0 %2372
      %2374 = vrot.lane.b32.xlu0 %v2212, 64
      %v2375 = vpop.permute.xlu0 %2374
      %2376 = vrot.lane.b32.xlu0 %v2213, 64
      %v2377 = vpop.permute.xlu0 %2376
      %2378 = vrot.lane.b32.xlu0 %v2214, 64
      %v2379 = vpop.permute.xlu0 %2378
      %2380 = vrot.lane.b32.xlu0 %v2215, 64
      %v2381 = vpop.permute.xlu0 %2380
      %2382 = vrot.lane.b32.xlu0 %v2216, 64
      %v2383 = vpop.permute.xlu0 %2382
      %2384 = vrot.lane.b32.xlu0 %v2217, 64
      %v2385 = vpop.permute.xlu0 %2384
      %2402 = vrot.lane.b32.xlu0 %v2218, 96
      %v2403 = vpop.permute.xlu0 %2402
      %2404 = vrot.lane.b32.xlu0 %v2219, 96
      %v2405 = vpop.permute.xlu0 %2404
      %2406 = vrot.lane.b32.xlu0 %v2220, 96
      %v2407 = vpop.permute.xlu0 %2406
      %2408 = vrot.lane.b32.xlu0 %v2221, 96
      %v2409 = vpop.permute.xlu0 %2408
      %2410 = vrot.lane.b32.xlu0 %v2222, 96
      %v2411 = vpop.permute.xlu0 %2410
      %2412 = vrot.lane.b32.xlu0 %v2223, 96
      %v2413 = vpop.permute.xlu0 %2412
      %2414 = vrot.lane.b32.xlu0 %v2224, 96
      %v2415 = vpop.permute.xlu0 %2414
      %2416 = vrot.lane.b32.xlu0 %v2225, 96
      %v2417 = vpop.permute.xlu0 %2416
      %v2426 = vsel %vm334, %v2162, %v2243
      %v2427 = vsel %vm334, %v2163, %v2245
      %v2428 = vsel %vm334, %v2164, %v2247
      %v2429 = vsel %vm334, %v2165, %v2249
      %v2430 = vsel %vm334, %v2166, %v2251
      %v2431 = vsel %vm334, %v2167, %v2253
      %v2432 = vsel %vm334, %v2168, %v2255
      %v2433 = vsel %vm334, %v2169, %v2257
      %v2434 = vsel %vm359, %v2426, %v2275
      %v2435 = vsel %vm359, %v2427, %v2277
      %v2436 = vsel %vm359, %v2428, %v2279
      %v2437 = vsel %vm359, %v2429, %v2281
      %v2438 = vsel %vm359, %v2430, %v2283
      %v2439 = vsel %vm359, %v2431, %v2285
      %v2440 = vsel %vm359, %v2432, %v2287
      %v2441 = vsel %vm359, %v2433, %v2289
      %v2442 = vsel %vm1135, %v2434, %v2307
      %v2443 = vsel %vm1135, %v2435, %v2309
      %v2444 = vsel %vm1135, %v2436, %v2311
      %v2445 = vsel %vm1135, %v2437, %v2313
      %v2446 = vsel %vm1135, %v2438, %v2315
      %v2447 = vsel %vm1135, %v2439, %v2317
      %v2448 = vsel %vm1135, %v2440, %v2319
      %v2449 = vsel %vm1135, %v2441, %v2321
      %v2450 = vsel %vm334, %v2194, %v2339
      %v2451 = vsel %vm334, %v2195, %v2341
      %v2452 = vsel %vm334, %v2196, %v2343
      %v2453 = vsel %vm334, %v2197, %v2345
      %v2454 = vsel %vm334, %v2198, %v2347
      %v2455 = vsel %vm334, %v2199, %v2349
      %v2456 = vsel %vm334, %v2200, %v2351
      %v2457 = vsel %vm334, %v2201, %v2353
      %v2458 = vsel %vm359, %v2450, %v2371
      %v2459 = vsel %vm359, %v2451, %v2373
      %v2460 = vsel %vm359, %v2452, %v2375
      %v2461 = vsel %vm359, %v2453, %v2377
      %v2462 = vsel %vm359, %v2454, %v2379
      %v2463 = vsel %vm359, %v2455, %v2381
      %v2464 = vsel %vm359, %v2456, %v2383
      %v2465 = vsel %vm359, %v2457, %v2385
      %v2466 = vsel %vm1135, %v2458, %v2403
      %v2467 = vsel %vm1135, %v2459, %v2405
      %v2468 = vsel %vm1135, %v2460, %v2407
      %v2469 = vsel %vm1135, %v2461, %v2409
      %v2470 = vsel %vm1135, %v2462, %v2411
      %v2471 = vsel %vm1135, %v2463, %v2413
      %v2472 = vsel %vm1135, %v2464, %v2415
      %v2473 = vsel %vm1135, %v2465, %v2417
      %v2474 = vpack.c.bf16 %v2443, %v2442
      %v2475 = vpack.c.bf16 %v2467, %v2466
      %v2476 = vpack.c.bf16 %v2227, %v2226
      %v2477 = vpack.c.bf16 %v2445, %v2444
      %v2478 = vpack.c.bf16 %v2469, %v2468
      %v2479 = vpack.c.bf16 %v2229, %v2228
      %v2480 = vpack.c.bf16 %v2447, %v2446
      %v2481 = vpack.c.bf16 %v2471, %v2470
      %v2482 = vpack.c.bf16 %v2231, %v2230
      %v2483 = vpack.c.bf16 %v2449, %v2448
      %v2484 = vpack.c.bf16 %v2473, %v2472
      %v2485 = vpack.c.bf16 %v2233, %v2232
      %v2486 = vld [vmem:[%s5] sm:$0xf]
      %v2487 = vld [vmem:[%s5 + $0x4] sm:$0xf]
      %v2488 = vld [vmem:[%s5 + $0x8] sm:$0xf]
      %v2489 = vld [vmem:[%s5 + $0xc] sm:$0xf]
      %v2490 = vld [vmem:[%s5 + $0x10] sm:$0xf]
      %v2491 = vld [vmem:[%s5 + $0x14] sm:$0xf]
      %v2492 = vld [vmem:[%s5 + $0x18] sm:$0xf]
      %v2493 = vld [vmem:[%s5 + $0x1c] sm:$0xf]
      %v2494 = vld [vmem:[%s5 + $0x20] sm:$0xf]
      %v2495 = vld [vmem:[%s5 + $0x24] sm:$0xf]
      %v2496 = vld [vmem:[%s5 + $0x28] sm:$0xf]
      %v2497 = vld [vmem:[%s5 + $0x2c] sm:$0xf]
      %v2498 = vld [vmem:[%s5 + $0x30] sm:$0xf]
      %v2499 = vld [vmem:[%s5 + $0x34] sm:$0xf]
      %v2500 = vld [vmem:[%s5 + $0x38] sm:$0xf]
      %v2501 = vld [vmem:[%s5 + $0x3c] sm:$0xf]
      %v2502 = vld [vmem:[%s5 + $0x40] sm:$0xf]
      %v2503 = vld [vmem:[%s5 + $0x44] sm:$0xf]
      %v2504 = vld [vmem:[%s5 + $0x48] sm:$0xf]
      %v2505 = vld [vmem:[%s5 + $0x4c] sm:$0xf]
      %v2506 = vld [vmem:[%s5 + $0x50] sm:$0xf]
      %v2507 = vld [vmem:[%s5 + $0x54] sm:$0xf]
      %v2508 = vld [vmem:[%s5 + $0x58] sm:$0xf]
      %v2509 = vld [vmem:[%s5 + $0x5c] sm:$0xf]
      %v2510 = vld [vmem:[%s5 + $0x60] sm:$0xf]
      %v2511 = vld [vmem:[%s5 + $0x64] sm:$0xf]
      %v2512 = vld [vmem:[%s5 + $0x68] sm:$0xf]
      %v2513 = vld [vmem:[%s5 + $0x6c] sm:$0xf]
      %v2514 = vld [vmem:[%s5 + $0x70] sm:$0xf]
      %v2515 = vld [vmem:[%s5 + $0x74] sm:$0xf]
      %v2516 = vld [vmem:[%s5 + $0x78] sm:$0xf]
      %v2517 = vld [vmem:[%s5 + $0x7c] sm:$0xf]
      %v2518 = vld [vmem:[%s5 + $0x80] sm:$0xf]
      %v2519 = vld [vmem:[%s5 + $0x84] sm:$0xf]
      %v2520 = vld [vmem:[%s5 + $0x88] sm:$0xf]
      %v2521 = vld [vmem:[%s5 + $0x8c] sm:$0xf]
      %v2522 = vld [vmem:[%s6] sm:$0x1]
      %v2524 = vperm.slane %v2522, 0
      %v2562 = vunpack.c.l.b16 %v2486
      %v2563 = vunpack.c.l.b16 %v2487
      %v2564 = vunpack.c.l.b16 %v2488
      %v2565 = vunpack.c.l.b16 %v2489
      %v2566 = vunpack.c.l.b16 %v2490
      %v2567 = vunpack.c.l.b16 %v2491
      %v2568 = vunpack.c.l.b16 %v2492
      %v2569 = vunpack.c.l.b16 %v2493
      %v2570 = vunpack.c.l.b16 %v2494
      %v2571 = vunpack.c.l.b16 %v2495
      %v2572 = vunpack.c.l.b16 %v2496
      %v2573 = vunpack.c.l.b16 %v2497
      %v2574 = vunpack.c.l.b16 %v2498
      %v2575 = vunpack.c.l.b16 %v2499
      %v2576 = vunpack.c.l.b16 %v2500
      %v2577 = vunpack.c.l.b16 %v2501
      %v2578 = vunpack.c.l.b16 %v2502
      %v2579 = vunpack.c.l.b16 %v2503
      %v2580 = vunpack.c.l.b16 %v2504
      %v2581 = vunpack.c.l.b16 %v2505
      %v2582 = vunpack.c.l.b16 %v2506
      %v2583 = vunpack.c.l.b16 %v2507
      %v2584 = vunpack.c.l.b16 %v2508
      %v2585 = vunpack.c.l.b16 %v2509
      %v2586 = vunpack.c.l.b16 %v2510
      %v2587 = vunpack.c.l.b16 %v2511
      %v2588 = vunpack.c.l.b16 %v2512
      %v2589 = vunpack.c.l.b16 %v2513
      %v2590 = vunpack.c.l.b16 %v2514
      %v2591 = vunpack.c.l.b16 %v2515
      %v2592 = vunpack.c.l.b16 %v2516
      %v2593 = vunpack.c.l.b16 %v2517
      %v2594 = vunpack.c.l.b16 %v2518
      %v2595 = vunpack.c.l.b16 %v2519
      %v2596 = vunpack.c.l.b16 %v2520
      %v2597 = vunpack.c.l.b16 %v2521
      %v2598 = vpack.c.b16 %v2563, %v2562
      %v2599 = vpack.c.b16 %v2565, %v2564
      %v2600 = vpack.c.b16 %v2567, %v2566
      %v2601 = vpack.c.b16 %v2569, %v2568
      %v2602 = vpack.c.b16 %v2571, %v2570
      %v2603 = vpack.c.b16 %v2573, %v2572
      %v2604 = vpack.c.b16 %v2575, %v2574
      %v2605 = vpack.c.b16 %v2577, %v2576
      %v2606 = vpack.c.b16 %v2579, %v2578
      %v2607 = vpack.c.b16 %v2581, %v2580
      %v2608 = vpack.c.b16 %v2583, %v2582
      %v2609 = vpack.c.b16 %v2585, %v2584
      %v2610 = vpack.c.b16 %v2587, %v2586
      %v2611 = vpack.c.b16 %v2589, %v2588
      %v2612 = vpack.c.b16 %v2591, %v2590
      %v2613 = vpack.c.b16 %v2593, %v2592
      %v2614 = vpack.c.b16 %v2595, %v2594
      %v2615 = vpack.c.b16 %v2597, %v2596
      %v2635 = vsel %vm334, %v2476, 0
      %v2638 = vsel %vm334, %v2479, 0
      %v2641 = vsel %vm334, %v2482, 0
      %v2644 = vsel %vm334, %v2485, 0
      %2646 = vmatpush.bf16.msra.mxu0 %v2605
      %2647 = vmatpush.bf16.msra.mxu0 %v2604
      %2648 = vmatpush.bf16.msra.mxu0 %v2603
      %2649 = vmatpush.bf16.msra.mxu0 %v2602
      %2650 = vmatpush.bf16.msra.mxu0 %v2601
      %2651 = vmatpush.bf16.msra.mxu0 %v2600
      %2652 = vmatpush.bf16.msra.mxu0 %v2599
      %2653 = vmatpush.bf16.msra.mxu0 %v2598
      %2654 = vmatmul.bf16.gmra.mxu0 %v2474
      %v2655 = vpop.f32.mrf.mxu0
      %v2656 = vadd.f32 %v2524, %v2655
      %v2657 = vpop.f32.mrf.mxu0
      %v2658 = vadd.f32 %v2524, %v2657
      %2659 = vmatmul.bf16.gmra.mxu0 %v2477
      %v2660 = vpop.f32.mrf.mxu0
      %v2661 = vadd.f32 %v2524, %v2660
      %v2662 = vpop.f32.mrf.mxu0
      %v2663 = vadd.f32 %v2524, %v2662
      %2664 = vmatmul.bf16.gmra.mxu0 %v2480
      %v2665 = vpop.f32.mrf.mxu0
      %v2666 = vadd.f32 %v2524, %v2665
      %v2667 = vpop.f32.mrf.mxu0
      %v2668 = vadd.f32 %v2524, %v2667
      %2669 = vmatmul.bf16.gmra.mxu0 %v2483
      %v2670 = vpop.f32.mrf.mxu0
      %v2671 = vadd.f32 %v2524, %v2670
      %v2672 = vpop.f32.mrf.mxu0
      %v2673 = vadd.f32 %v2524, %v2672
      %2674 = vdwg.mxu0
      %2675 = vmatpush.bf16.msra.mxu0 %v2613
      %2676 = vmatpush.bf16.msra.mxu0 %v2612
      %2677 = vmatpush.bf16.msra.mxu0 %v2611
      %2678 = vmatpush.bf16.msra.mxu0 %v2610
      %2679 = vmatpush.bf16.msra.mxu0 %v2609
      %2680 = vmatpush.bf16.msra.mxu0 %v2608
      %2681 = vmatpush.bf16.msra.mxu0 %v2607
      %2682 = vmatpush.bf16.msra.mxu0 %v2606
      %2683 = vmatmul.bf16.gmra.mxu0 %v2475
      %v2684 = vpop.f32.mrf.mxu0
      %v2685 = vadd.f32 %v2656, %v2684
      %v2686 = vpop.f32.mrf.mxu0
      %v2687 = vadd.f32 %v2658, %v2686
      %2688 = vmatmul.bf16.gmra.mxu0 %v2478
      %v2689 = vpop.f32.mrf.mxu0
      %v2690 = vadd.f32 %v2661, %v2689
      %v2691 = vpop.f32.mrf.mxu0
      %v2692 = vadd.f32 %v2663, %v2691
      %2693 = vmatmul.bf16.gmra.mxu0 %v2481
      %v2694 = vpop.f32.mrf.mxu0
      %v2695 = vadd.f32 %v2666, %v2694
      %v2696 = vpop.f32.mrf.mxu0
      %v2697 = vadd.f32 %v2668, %v2696
      %2698 = vmatmul.bf16.gmra.mxu0 %v2484
      %v2699 = vpop.f32.mrf.mxu0
      %v2700 = vadd.f32 %v2671, %v2699
      %v2701 = vpop.f32.mrf.mxu0
      %v2702 = vadd.f32 %v2673, %v2701
      %2703 = vdwg.mxu0
      %2704 = vmatpush.bf16.msra.mxu0 0
      %2705 = vmatpush.bf16.msra.mxu0 0
      %2706 = vmatpush.bf16.msra.mxu0 0
      %2707 = vmatpush.bf16.msra.mxu0 0
      %2708 = vmatpush.bf16.msra.mxu0 0
      %2709 = vmatpush.bf16.msra.mxu0 0
      %2710 = vmatpush.bf16.msra.mxu0 %v2615
      %2711 = vmatpush.bf16.msra.mxu0 %v2614
      %2712 = vmatmul.bf16.gmra.mxu0 %v2635
      %v2713 = vpop.f32.mrf.mxu0
      %v2714 = vadd.f32 %v2685, %v2713
      %v2715 = vpop.f32.mrf.mxu0
      %v2716 = vadd.f32 %v2687, %v2715
      %2717 = vmatmul.bf16.gmra.mxu0 %v2638
      %v2718 = vpop.f32.mrf.mxu0
      %v2719 = vadd.f32 %v2690, %v2718
      %v2720 = vpop.f32.mrf.mxu0
      %v2721 = vadd.f32 %v2692, %v2720
      %2722 = vmatmul.bf16.gmra.mxu0 %v2641
      %v2723 = vpop.f32.mrf.mxu0
      %v2724 = vadd.f32 %v2695, %v2723
      %v2725 = vpop.f32.mrf.mxu0
      %v2726 = vadd.f32 %v2697, %v2725
      %2727 = vmatmul.bf16.gmra.mxu0 %v2644
      %v2728 = vpop.f32.mrf.mxu0
      %v2729 = vadd.f32 %v2700, %v2728
      %v2730 = vpop.f32.mrf.mxu0
      %v2731 = vadd.f32 %v2702, %v2730
      %2732 = vdwg.mxu0
      %v2733 = vmax.f32 %v2714, 0.0
      %v2734 = vmax.f32 %v2716, 0.0
      %v2735 = vmax.f32 %v2719, 0.0
      %v2736 = vmax.f32 %v2721, 0.0
      %v2737 = vmax.f32 %v2724, 0.0
      %v2738 = vmax.f32 %v2726, 0.0
      %v2739 = vmax.f32 %v2729, 0.0
      %v2740 = vmax.f32 %v2731, 0.0
      %2741 = vst.msk [vmem:[%s367 + $0x8] sm:$0xff] %vm359, %v2733
      %2742 = vst.msk [vmem:[%s367 + $0x20] sm:$0xff] %vm359, %v2734
      %2743 = vst.msk [vmem:[%s367 + $0x38] sm:$0xff] %vm359, %v2735
      %2744 = vst.msk [vmem:[%s367 + $0x50] sm:$0xff] %vm359, %v2736
      %2745 = vst.msk [vmem:[%s367 + $0x68] sm:$0xff] %vm359, %v2737
      %2746 = vst.msk [vmem:[%s367 + $0x80] sm:$0xff] %vm359, %v2738
      %2747 = vst.msk [vmem:[%s367 + $0x98] sm:$0xff] %vm359, %v2739
      %2748 = vst.msk [vmem:[%s367 + $0xb0] sm:$0xff] %vm359, %v2740
      %v2749 = vld [vmem:[#allocation3 + $0x7] sm:$0xff]
      %v2750 = vld [vmem:[#allocation3 + $0x1f] sm:$0xff]
      %v2751 = vld [vmem:[#allocation3 + $0x37] sm:$0xff]
      %v2752 = vld [vmem:[#allocation3 + $0x4f] sm:$0xff]
      %v2753 = vld [vmem:[#allocation3 + $0x67] sm:$0xff]
      %v2754 = vld [vmem:[#allocation3 + $0x7f] sm:$0xff]
      %v2755 = vld [vmem:[#allocation3 + $0x97] sm:$0xff]
      %v2756 = vld [vmem:[#allocation3 + $0xaf] sm:$0xff]
      %v2757 = vld [vmem:[#allocation3 + $0x8] sm:$0xff]
      %v2758 = vld [vmem:[#allocation3 + $0x20] sm:$0xff]
      %v2759 = vld [vmem:[#allocation3 + $0x38] sm:$0xff]
      %v2760 = vld [vmem:[#allocation3 + $0x50] sm:$0xff]
      %v2761 = vld [vmem:[#allocation3 + $0x68] sm:$0xff]
      %v2762 = vld [vmem:[#allocation3 + $0x80] sm:$0xff]
      %v2763 = vld [vmem:[#allocation3 + $0x98] sm:$0xff]
      %v2764 = vld [vmem:[#allocation3 + $0xb0] sm:$0xff]
      %v2765 = vld [vmem:[#allocation3 + $0x9] sm:$0xff]
      %v2766 = vld [vmem:[#allocation3 + $0x21] sm:$0xff]
      %v2767 = vld [vmem:[#allocation3 + $0x39] sm:$0xff]
      %v2768 = vld [vmem:[#allocation3 + $0x51] sm:$0xff]
      %v2769 = vld [vmem:[#allocation3 + $0x69] sm:$0xff]
      %v2770 = vld [vmem:[#allocation3 + $0x81] sm:$0xff]
      %v2771 = vld [vmem:[#allocation3 + $0x99] sm:$0xff]
      %v2772 = vld [vmem:[#allocation3 + $0xb1] sm:$0xff]
      %v2773 = vld [vmem:[%s367 + $0x7] sm:$0xff]
      %v2774 = vld [vmem:[%s367 + $0x1f] sm:$0xff]
      %v2775 = vld [vmem:[%s367 + $0x37] sm:$0xff]
      %v2776 = vld [vmem:[%s367 + $0x4f] sm:$0xff]
      %v2777 = vld [vmem:[%s367 + $0x67] sm:$0xff]
      %v2778 = vld [vmem:[%s367 + $0x7f] sm:$0xff]
      %v2779 = vld [vmem:[%s367 + $0x97] sm:$0xff]
      %v2780 = vld [vmem:[%s367 + $0xaf] sm:$0xff]
      %v2781 = vld [vmem:[%s367 + $0x8] sm:$0xff]
      %v2782 = vld [vmem:[%s367 + $0x20] sm:$0xff]
      %v2783 = vld [vmem:[%s367 + $0x38] sm:$0xff]
      %v2784 = vld [vmem:[%s367 + $0x50] sm:$0xff]
      %v2785 = vld [vmem:[%s367 + $0x68] sm:$0xff]
      %v2786 = vld [vmem:[%s367 + $0x80] sm:$0xff]
      %v2787 = vld [vmem:[%s367 + $0x98] sm:$0xff]
      %v2788 = vld [vmem:[%s367 + $0xb0] sm:$0xff]
      %v2789 = vld [vmem:[%s367 + $0x9] sm:$0xff]
      %v2790 = vld [vmem:[%s367 + $0x21] sm:$0xff]
      %v2791 = vld [vmem:[%s367 + $0x39] sm:$0xff]
      %v2792 = vld [vmem:[%s367 + $0x51] sm:$0xff]
      %v2793 = vld [vmem:[%s367 + $0x69] sm:$0xff]
      %v2794 = vld [vmem:[%s367 + $0x81] sm:$0xff]
      %v2795 = vld [vmem:[%s367 + $0x99] sm:$0xff]
      %v2796 = vld [vmem:[%s367 + $0xb1] sm:$0xff]
      %s2797 = scalar_lea.vmem [#allocation3], 48
      %v2798 = vld [vmem:[%s2797 + $0x7] sm:$0xff]
      %v2799 = vld [vmem:[%s2797 + $0x1f] sm:$0xff]
      %v2800 = vld [vmem:[%s2797 + $0x37] sm:$0xff]
      %v2801 = vld [vmem:[%s2797 + $0x4f] sm:$0xff]
      %v2802 = vld [vmem:[%s2797 + $0x67] sm:$0xff]
      %v2803 = vld [vmem:[%s2797 + $0x7f] sm:$0xff]
      %v2804 = vld [vmem:[%s2797 + $0x97] sm:$0xff]
      %v2805 = vld [vmem:[%s2797 + $0xaf] sm:$0xff]
      %v2806 = vld [vmem:[%s2797 + $0x8] sm:$0xff]
      %v2807 = vld [vmem:[%s2797 + $0x20] sm:$0xff]
      %v2808 = vld [vmem:[%s2797 + $0x38] sm:$0xff]
      %v2809 = vld [vmem:[%s2797 + $0x50] sm:$0xff]
      %v2810 = vld [vmem:[%s2797 + $0x68] sm:$0xff]
      %v2811 = vld [vmem:[%s2797 + $0x80] sm:$0xff]
      %v2812 = vld [vmem:[%s2797 + $0x98] sm:$0xff]
      %v2813 = vld [vmem:[%s2797 + $0xb0] sm:$0xff]
      %v2814 = vld [vmem:[%s2797 + $0x9] sm:$0xff]
      %v2815 = vld [vmem:[%s2797 + $0x21] sm:$0xff]
      %v2816 = vld [vmem:[%s2797 + $0x39] sm:$0xff]
      %v2817 = vld [vmem:[%s2797 + $0x51] sm:$0xff]
      %v2818 = vld [vmem:[%s2797 + $0x69] sm:$0xff]
      %v2819 = vld [vmem:[%s2797 + $0x81] sm:$0xff]
      %v2820 = vld [vmem:[%s2797 + $0x99] sm:$0xff]
      %v2821 = vld [vmem:[%s2797 + $0xb1] sm:$0xff]
      %2830 = vrot.lane.b32.xlu0 %v2757, 64
      %v2831 = vpop.permute.xlu0 %2830
      %2832 = vrot.lane.b32.xlu0 %v2758, 64
      %v2833 = vpop.permute.xlu0 %2832
      %2834 = vrot.lane.b32.xlu0 %v2759, 64
      %v2835 = vpop.permute.xlu0 %2834
      %2836 = vrot.lane.b32.xlu0 %v2760, 64
      %v2837 = vpop.permute.xlu0 %2836
      %2838 = vrot.lane.b32.xlu0 %v2761, 64
      %v2839 = vpop.permute.xlu0 %2838
      %2840 = vrot.lane.b32.xlu0 %v2762, 64
      %v2841 = vpop.permute.xlu0 %2840
      %2842 = vrot.lane.b32.xlu0 %v2763, 64
      %v2843 = vpop.permute.xlu0 %2842
      %2844 = vrot.lane.b32.xlu0 %v2764, 64
      %v2845 = vpop.permute.xlu0 %2844
      %2862 = vrot.lane.b32.xlu0 %v2773, 64
      %v2863 = vpop.permute.xlu0 %2862
      %2864 = vrot.lane.b32.xlu0 %v2774, 64
      %v2865 = vpop.permute.xlu0 %2864
      %2866 = vrot.lane.b32.xlu0 %v2775, 64
      %v2867 = vpop.permute.xlu0 %2866
      %2868 = vrot.lane.b32.xlu0 %v2776, 64
      %v2869 = vpop.permute.xlu0 %2868
      %2870 = vrot.lane.b32.xlu0 %v2777, 64
      %v2871 = vpop.permute.xlu0 %2870
      %2872 = vrot.lane.b32.xlu0 %v2778, 64
      %v2873 = vpop.permute.xlu0 %2872
      %2874 = vrot.lane.b32.xlu0 %v2779, 64
      %v2875 = vpop.permute.xlu0 %2874
      %2876 = vrot.lane.b32.xlu0 %v2780, 64
      %v2877 = vpop.permute.xlu0 %2876
      %2894 = vrot.lane.b32.xlu0 %v2789, 64
      %v2895 = vpop.permute.xlu0 %2894
      %2896 = vrot.lane.b32.xlu0 %v2790, 64
      %v2897 = vpop.permute.xlu0 %2896
      %2898 = vrot.lane.b32.xlu0 %v2791, 64
      %v2899 = vpop.permute.xlu0 %2898
      %2900 = vrot.lane.b32.xlu0 %v2792, 64
      %v2901 = vpop.permute.xlu0 %2900
      %2902 = vrot.lane.b32.xlu0 %v2793, 64
      %v2903 = vpop.permute.xlu0 %2902
      %2904 = vrot.lane.b32.xlu0 %v2794, 64
      %v2905 = vpop.permute.xlu0 %2904
      %2906 = vrot.lane.b32.xlu0 %v2795, 64
      %v2907 = vpop.permute.xlu0 %2906
      %2908 = vrot.lane.b32.xlu0 %v2796, 64
      %v2909 = vpop.permute.xlu0 %2908
      %2926 = vrot.lane.b32.xlu0 %v2806, 64
      %v2927 = vpop.permute.xlu0 %2926
      %2928 = vrot.lane.b32.xlu0 %v2807, 64
      %v2929 = vpop.permute.xlu0 %2928
      %2930 = vrot.lane.b32.xlu0 %v2808, 64
      %v2931 = vpop.permute.xlu0 %2930
      %2932 = vrot.lane.b32.xlu0 %v2809, 64
      %v2933 = vpop.permute.xlu0 %2932
      %2934 = vrot.lane.b32.xlu0 %v2810, 64
      %v2935 = vpop.permute.xlu0 %2934
      %2936 = vrot.lane.b32.xlu0 %v2811, 64
      %v2937 = vpop.permute.xlu0 %2936
      %2938 = vrot.lane.b32.xlu0 %v2812, 64
      %v2939 = vpop.permute.xlu0 %2938
      %2940 = vrot.lane.b32.xlu0 %v2813, 64
      %v2941 = vpop.permute.xlu0 %2940
      %v2950 = vsel %vm359, %v2749, %v2831
      %v2951 = vsel %vm359, %v2750, %v2833
      %v2952 = vsel %vm359, %v2751, %v2835
      %v2953 = vsel %vm359, %v2752, %v2837
      %v2954 = vsel %vm359, %v2753, %v2839
      %v2955 = vsel %vm359, %v2754, %v2841
      %v2956 = vsel %vm359, %v2755, %v2843
      %v2957 = vsel %vm359, %v2756, %v2845
      %v2958 = vsel %vm359, %v2765, %v2863
      %v2959 = vsel %vm359, %v2766, %v2865
      %v2960 = vsel %vm359, %v2767, %v2867
      %v2961 = vsel %vm359, %v2768, %v2869
      %v2962 = vsel %vm359, %v2769, %v2871
      %v2963 = vsel %vm359, %v2770, %v2873
      %v2964 = vsel %vm359, %v2771, %v2875
      %v2965 = vsel %vm359, %v2772, %v2877
      %v2966 = vsel %vm359, %v2781, %v2895
      %v2967 = vsel %vm359, %v2782, %v2897
      %v2968 = vsel %vm359, %v2783, %v2899
      %v2969 = vsel %vm359, %v2784, %v2901
      %v2970 = vsel %vm359, %v2785, %v2903
      %v2971 = vsel %vm359, %v2786, %v2905
      %v2972 = vsel %vm359, %v2787, %v2907
      %v2973 = vsel %vm359, %v2788, %v2909
      %v2974 = vsel %vm359, %v2798, %v2927
      %v2975 = vsel %vm359, %v2799, %v2929
      %v2976 = vsel %vm359, %v2800, %v2931
      %v2977 = vsel %vm359, %v2801, %v2933
      %v2978 = vsel %vm359, %v2802, %v2935
      %v2979 = vsel %vm359, %v2803, %v2937
      %v2980 = vsel %vm359, %v2804, %v2939
      %v2981 = vsel %vm359, %v2805, %v2941
      %v2982 = vpack.c.bf16 %v2951, %v2950
      %v2983 = vpack.c.bf16 %v2959, %v2958
      %v2984 = vpack.c.bf16 %v2967, %v2966
      %v2985 = vpack.c.bf16 %v2975, %v2974
      %v2986 = vpack.c.bf16 %v2815, %v2814
      %v2987 = vpack.c.bf16 %v2953, %v2952
      %v2988 = vpack.c.bf16 %v2961, %v2960
      %v2989 = vpack.c.bf16 %v2969, %v2968
      %v2990 = vpack.c.bf16 %v2977, %v2976
      %v2991 = vpack.c.bf16 %v2817, %v2816
      %v2992 = vpack.c.bf16 %v2955, %v2954
      %v2993 = vpack.c.bf16 %v2963, %v2962
      %v2994 = vpack.c.bf16 %v2971, %v2970
      %v2995 = vpack.c.bf16 %v2979, %v2978
      %v2996 = vpack.c.bf16 %v2819, %v2818
      %v2997 = vpack.c.bf16 %v2957, %v2956
      %v2998 = vpack.c.bf16 %v2965, %v2964
      %v2999 = vpack.c.bf16 %v2973, %v2972
      %v3000 = vpack.c.bf16 %v2981, %v2980
      %v3001 = vpack.c.bf16 %v2821, %v2820
      %v3002 = vld [vmem:[%s7] sm:$0xf]
      %v3003 = vld [vmem:[%s7 + $0x4] sm:$0xf]
      %v3004 = vld [vmem:[%s7 + $0x8] sm:$0xf]
      %v3005 = vld [vmem:[%s7 + $0xc] sm:$0xf]
      %v3006 = vld [vmem:[%s7 + $0x10] sm:$0xf]
      %v3007 = vld [vmem:[%s7 + $0x14] sm:$0xf]
      %v3008 = vld [vmem:[%s7 + $0x18] sm:$0xf]
      %v3009 = vld [vmem:[%s7 + $0x1c] sm:$0xf]
      %v3010 = vld [vmem:[%s7 + $0x20] sm:$0xf]
      %v3011 = vld [vmem:[%s7 + $0x24] sm:$0xf]
      %v3012 = vld [vmem:[%s7 + $0x28] sm:$0xf]
      %v3013 = vld [vmem:[%s7 + $0x2c] sm:$0xf]
      %v3014 = vld [vmem:[%s7 + $0x30] sm:$0xf]
      %v3015 = vld [vmem:[%s7 + $0x34] sm:$0xf]
      %v3016 = vld [vmem:[%s7 + $0x38] sm:$0xf]
      %v3017 = vld [vmem:[%s7 + $0x3c] sm:$0xf]
      %v3018 = vld [vmem:[%s7 + $0x40] sm:$0xf]
      %v3019 = vld [vmem:[%s7 + $0x44] sm:$0xf]
      %v3020 = vld [vmem:[%s7 + $0x48] sm:$0xf]
      %v3021 = vld [vmem:[%s7 + $0x4c] sm:$0xf]
      %v3022 = vld [vmem:[%s7 + $0x50] sm:$0xf]
      %v3023 = vld [vmem:[%s7 + $0x54] sm:$0xf]
      %v3024 = vld [vmem:[%s7 + $0x58] sm:$0xf]
      %v3025 = vld [vmem:[%s7 + $0x5c] sm:$0xf]
      %v3026 = vld [vmem:[%s7 + $0x60] sm:$0xf]
      %v3027 = vld [vmem:[%s7 + $0x64] sm:$0xf]
      %v3028 = vld [vmem:[%s7 + $0x68] sm:$0xf]
      %v3029 = vld [vmem:[%s7 + $0x6c] sm:$0xf]
      %v3030 = vld [vmem:[%s7 + $0x70] sm:$0xf]
      %v3031 = vld [vmem:[%s7 + $0x74] sm:$0xf]
      %v3032 = vld [vmem:[%s7 + $0x78] sm:$0xf]
      %v3033 = vld [vmem:[%s7 + $0x7c] sm:$0xf]
      %v3034 = vld [vmem:[%s7 + $0x80] sm:$0xf]
      %v3035 = vld [vmem:[%s7 + $0x84] sm:$0xf]
      %v3036 = vld [vmem:[%s7 + $0x88] sm:$0xf]
      %v3037 = vld [vmem:[%s7 + $0x8c] sm:$0xf]
      %v3038 = vld [vmem:[%s7 + $0x90] sm:$0xf]
      %v3039 = vld [vmem:[%s7 + $0x94] sm:$0xf]
      %v3040 = vld [vmem:[%s7 + $0x98] sm:$0xf]
      %v3041 = vld [vmem:[%s7 + $0x9c] sm:$0xf]
      %v3042 = vld [vmem:[%s7 + $0xa0] sm:$0xf]
      %v3043 = vld [vmem:[%s7 + $0xa4] sm:$0xf]
      %v3044 = vld [vmem:[%s7 + $0xa8] sm:$0xf]
      %v3045 = vld [vmem:[%s7 + $0xac] sm:$0xf]
      %v3046 = vld [vmem:[%s7 + $0xb0] sm:$0xf]
      %v3047 = vld [vmem:[%s7 + $0xb4] sm:$0xf]
      %v3048 = vld [vmem:[%s7 + $0xb8] sm:$0xf]
      %v3049 = vld [vmem:[%s7 + $0xbc] sm:$0xf]
      %v3050 = vld [vmem:[%s7 + $0xc0] sm:$0xf]
      %v3051 = vld [vmem:[%s7 + $0xc4] sm:$0xf]
      %v3052 = vld [vmem:[%s7 + $0xc8] sm:$0xf]
      %v3053 = vld [vmem:[%s7 + $0xcc] sm:$0xf]
      %v3054 = vld [vmem:[%s7 + $0xd0] sm:$0xf]
      %v3055 = vld [vmem:[%s7 + $0xd4] sm:$0xf]
      %v3056 = vld [vmem:[%s7 + $0xd8] sm:$0xf]
      %v3057 = vld [vmem:[%s7 + $0xdc] sm:$0xf]
      %v3058 = vld [vmem:[%s7 + $0xe0] sm:$0xf]
      %v3059 = vld [vmem:[%s7 + $0xe4] sm:$0xf]
      %v3060 = vld [vmem:[%s7 + $0xe8] sm:$0xf]
      %v3061 = vld [vmem:[%s7 + $0xec] sm:$0xf]
      %v3062 = vld [vmem:[%s7 + $0xf0] sm:$0xf]
      %v3063 = vld [vmem:[%s7 + $0xf4] sm:$0xf]
      %v3064 = vld [vmem:[%s7 + $0xf8] sm:$0xf]
      %v3065 = vld [vmem:[%s7 + $0xfc] sm:$0xf]
      %v3066 = vld [vmem:[%s7 + $0x100] sm:$0xf]
      %v3067 = vld [vmem:[%s7 + $0x104] sm:$0xf]
      %v3068 = vld [vmem:[%s7 + $0x108] sm:$0xf]
      %v3069 = vld [vmem:[%s7 + $0x10c] sm:$0xf]
      %v3070 = vld [vmem:[%s7 + $0x110] sm:$0xf]
      %v3071 = vld [vmem:[%s7 + $0x114] sm:$0xf]
      %v3072 = vld [vmem:[%s7 + $0x118] sm:$0xf]
      %v3073 = vld [vmem:[%s7 + $0x11c] sm:$0xf]
      %v3074 = vld [vmem:[%s8] sm:$0x1]
      %v3076 = vperm.slane %v3074, 0
      %v3150 = vunpack.c.l.b16 %v3002
      %v3151 = vunpack.c.l.b16 %v3003
      %v3152 = vunpack.c.l.b16 %v3004
      %v3153 = vunpack.c.l.b16 %v3005
      %v3154 = vunpack.c.l.b16 %v3006
      %v3155 = vunpack.c.l.b16 %v3007
      %v3156 = vunpack.c.l.b16 %v3008
      %v3157 = vunpack.c.l.b16 %v3009
      %v3158 = vunpack.c.l.b16 %v3010
      %v3159 = vunpack.c.l.b16 %v3011
      %v3160 = vunpack.c.l.b16 %v3012
      %v3161 = vunpack.c.l.b16 %v3013
      %v3162 = vunpack.c.l.b16 %v3014
      %v3163 = vunpack.c.l.b16 %v3015
      %v3164 = vunpack.c.l.b16 %v3016
      %v3165 = vunpack.c.l.b16 %v3017
      %v3166 = vunpack.c.l.b16 %v3018
      %v3167 = vunpack.c.l.b16 %v3019
      %v3168 = vunpack.c.l.b16 %v3020
      %v3169 = vunpack.c.l.b16 %v3021
      %v3170 = vunpack.c.l.b16 %v3022
      %v3171 = vunpack.c.l.b16 %v3023
      %v3172 = vunpack.c.l.b16 %v3024
      %v3173 = vunpack.c.l.b16 %v3025
      %v3174 = vunpack.c.l.b16 %v3026
      %v3175 = vunpack.c.l.b16 %v3027
      %v3176 = vunpack.c.l.b16 %v3028
      %v3177 = vunpack.c.l.b16 %v3029
      %v3178 = vunpack.c.l.b16 %v3030
      %v3179 = vunpack.c.l.b16 %v3031
      %v3180 = vunpack.c.l.b16 %v3032
      %v3181 = vunpack.c.l.b16 %v3033
      %v3182 = vunpack.c.l.b16 %v3034
      %v3183 = vunpack.c.l.b16 %v3035
      %v3184 = vunpack.c.l.b16 %v3036
      %v3185 = vunpack.c.l.b16 %v3037
      %v3186 = vunpack.c.l.b16 %v3038
      %v3187 = vunpack.c.l.b16 %v3039
      %v3188 = vunpack.c.l.b16 %v3040
      %v3189 = vunpack.c.l.b16 %v3041
      %v3190 = vunpack.c.l.b16 %v3042
      %v3191 = vunpack.c.l.b16 %v3043
      %v3192 = vunpack.c.l.b16 %v3044
      %v3193 = vunpack.c.l.b16 %v3045
      %v3194 = vunpack.c.l.b16 %v3046
      %v3195 = vunpack.c.l.b16 %v3047
      %v3196 = vunpack.c.l.b16 %v3048
      %v3197 = vunpack.c.l.b16 %v3049
      %v3198 = vunpack.c.l.b16 %v3050
      %v3199 = vunpack.c.l.b16 %v3051
      %v3200 = vunpack.c.l.b16 %v3052
      %v3201 = vunpack.c.l.b16 %v3053
      %v3202 = vunpack.c.l.b16 %v3054
      %v3203 = vunpack.c.l.b16 %v3055
      %v3204 = vunpack.c.l.b16 %v3056
      %v3205 = vunpack.c.l.b16 %v3057
      %v3206 = vunpack.c.l.b16 %v3058
      %v3207 = vunpack.c.l.b16 %v3059
      %v3208 = vunpack.c.l.b16 %v3060
      %v3209 = vunpack.c.l.b16 %v3061
      %v3210 = vunpack.c.l.b16 %v3062
      %v3211 = vunpack.c.l.b16 %v3063
      %v3212 = vunpack.c.l.b16 %v3064
      %v3213 = vunpack.c.l.b16 %v3065
      %v3214 = vunpack.c.l.b16 %v3066
      %v3215 = vunpack.c.l.b16 %v3067
      %v3216 = vunpack.c.l.b16 %v3068
      %v3217 = vunpack.c.l.b16 %v3069
      %v3218 = vunpack.c.l.b16 %v3070
      %v3219 = vunpack.c.l.b16 %v3071
      %v3220 = vunpack.c.l.b16 %v3072
      %v3221 = vunpack.c.l.b16 %v3073
      %v3222 = vpack.c.b16 %v3151, %v3150
      %v3223 = vpack.c.b16 %v3153, %v3152
      %v3224 = vpack.c.b16 %v3155, %v3154
      %v3225 = vpack.c.b16 %v3157, %v3156
      %v3226 = vpack.c.b16 %v3159, %v3158
      %v3227 = vpack.c.b16 %v3161, %v3160
      %v3228 = vpack.c.b16 %v3163, %v3162
      %v3229 = vpack.c.b16 %v3165, %v3164
      %v3230 = vpack.c.b16 %v3167, %v3166
      %v3231 = vpack.c.b16 %v3169, %v3168
      %v3232 = vpack.c.b16 %v3171, %v3170
      %v3233 = vpack.c.b16 %v3173, %v3172
      %v3234 = vpack.c.b16 %v3175, %v3174
      %v3235 = vpack.c.b16 %v3177, %v3176
      %v3236 = vpack.c.b16 %v3179, %v3178
      %v3237 = vpack.c.b16 %v3181, %v3180
      %v3238 = vpack.c.b16 %v3183, %v3182
      %v3239 = vpack.c.b16 %v3185, %v3184
      %v3240 = vpack.c.b16 %v3187, %v3186
      %v3241 = vpack.c.b16 %v3189, %v3188
      %v3242 = vpack.c.b16 %v3191, %v3190
      %v3243 = vpack.c.b16 %v3193, %v3192
      %v3244 = vpack.c.b16 %v3195, %v3194
      %v3245 = vpack.c.b16 %v3197, %v3196
      %v3246 = vpack.c.b16 %v3199, %v3198
      %v3247 = vpack.c.b16 %v3201, %v3200
      %v3248 = vpack.c.b16 %v3203, %v3202
      %v3249 = vpack.c.b16 %v3205, %v3204
      %v3250 = vpack.c.b16 %v3207, %v3206
      %v3251 = vpack.c.b16 %v3209, %v3208
      %v3252 = vpack.c.b16 %v3211, %v3210
      %v3253 = vpack.c.b16 %v3213, %v3212
      %v3254 = vpack.c.b16 %v3215, %v3214
      %v3255 = vpack.c.b16 %v3217, %v3216
      %v3256 = vpack.c.b16 %v3219, %v3218
      %v3257 = vpack.c.b16 %v3221, %v3220
      %v3295 = vsel %vm359, %v2986, 0
      %v3298 = vsel %vm359, %v2991, 0
      %v3301 = vsel %vm359, %v2996, 0
      %v3304 = vsel %vm359, %v3001, 0
      %3306 = vmatpush.bf16.msra.mxu0 %v3229
      %3307 = vmatpush.bf16.msra.mxu0 %v3228
      %3308 = vmatpush.bf16.msra.mxu0 %v3227
      %3309 = vmatpush.bf16.msra.mxu0 %v3226
      %3310 = vmatpush.bf16.msra.mxu0 %v3225
      %3311 = vmatpush.bf16.msra.mxu0 %v3224
      %3312 = vmatpush.bf16.msra.mxu0 %v3223
      %3313 = vmatpush.bf16.msra.mxu0 %v3222
      %3314 = vmatmul.bf16.gmra.mxu0 %v2982
      %v3315 = vpop.f32.mrf.mxu0
      %v3316 = vadd.f32 %v3076, %v3315
      %v3317 = vpop.f32.mrf.mxu0
      %v3318 = vadd.f32 %v3076, %v3317
      %3319 = vmatmul.bf16.gmra.mxu0 %v2987
      %v3320 = vpop.f32.mrf.mxu0
      %v3321 = vadd.f32 %v3076, %v3320
      %v3322 = vpop.f32.mrf.mxu0
      %v3323 = vadd.f32 %v3076, %v3322
      %3324 = vmatmul.bf16.gmra.mxu0 %v2992
      %v3325 = vpop.f32.mrf.mxu0
      %v3326 = vadd.f32 %v3076, %v3325
      %v3327 = vpop.f32.mrf.mxu0
      %v3328 = vadd.f32 %v3076, %v3327
      %3329 = vmatmul.bf16.gmra.mxu0 %v2997
      %v3330 = vpop.f32.mrf.mxu0
      %v3331 = vadd.f32 %v3076, %v3330
      %v3332 = vpop.f32.mrf.mxu0
      %v3333 = vadd.f32 %v3076, %v3332
      %3334 = vdwg.mxu0
      %3335 = vmatpush.bf16.msra.mxu0 %v3237
      %3336 = vmatpush.bf16.msra.mxu0 %v3236
      %3337 = vmatpush.bf16.msra.mxu0 %v3235
      %3338 = vmatpush.bf16.msra.mxu0 %v3234
      %3339 = vmatpush.bf16.msra.mxu0 %v3233
      %3340 = vmatpush.bf16.msra.mxu0 %v3232
      %3341 = vmatpush.bf16.msra.mxu0 %v3231
      %3342 = vmatpush.bf16.msra.mxu0 %v3230
      %3343 = vmatmul.bf16.gmra.mxu0 %v2983
      %v3344 = vpop.f32.mrf.mxu0
      %v3345 = vadd.f32 %v3316, %v3344
      %v3346 = vpop.f32.mrf.mxu0
      %v3347 = vadd.f32 %v3318, %v3346
      %3348 = vmatmul.bf16.gmra.mxu0 %v2988
      %v3349 = vpop.f32.mrf.mxu0
      %v3350 = vadd.f32 %v3321, %v3349
      %v3351 = vpop.f32.mrf.mxu0
      %v3352 = vadd.f32 %v3323, %v3351
      %3353 = vmatmul.bf16.gmra.mxu0 %v2993
      %v3354 = vpop.f32.mrf.mxu0
      %v3355 = vadd.f32 %v3326, %v3354
      %v3356 = vpop.f32.mrf.mxu0
      %v3357 = vadd.f32 %v3328, %v3356
      %3358 = vmatmul.bf16.gmra.mxu0 %v2998
      %v3359 = vpop.f32.mrf.mxu0
      %v3360 = vadd.f32 %v3331, %v3359
      %v3361 = vpop.f32.mrf.mxu0
      %v3362 = vadd.f32 %v3333, %v3361
      %3363 = vdwg.mxu0
      %3364 = vmatpush.bf16.msra.mxu0 %v3245
      %3365 = vmatpush.bf16.msra.mxu0 %v3244
      %3366 = vmatpush.bf16.msra.mxu0 %v3243
      %3367 = vmatpush.bf16.msra.mxu0 %v3242
      %3368 = vmatpush.bf16.msra.mxu0 %v3241
      %3369 = vmatpush.bf16.msra.mxu0 %v3240
      %3370 = vmatpush.bf16.msra.mxu0 %v3239
      %3371 = vmatpush.bf16.msra.mxu0 %v3238
      %3372 = vmatmul.bf16.gmra.mxu0 %v2984
      %v3373 = vpop.f32.mrf.mxu0
      %v3374 = vadd.f32 %v3345, %v3373
      %v3375 = vpop.f32.mrf.mxu0
      %v3376 = vadd.f32 %v3347, %v3375
      %3377 = vmatmul.bf16.gmra.mxu0 %v2989
      %v3378 = vpop.f32.mrf.mxu0
      %v3379 = vadd.f32 %v3350, %v3378
      %v3380 = vpop.f32.mrf.mxu0
      %v3381 = vadd.f32 %v3352, %v3380
      %3382 = vmatmul.bf16.gmra.mxu0 %v2994
      %v3383 = vpop.f32.mrf.mxu0
      %v3384 = vadd.f32 %v3355, %v3383
      %v3385 = vpop.f32.mrf.mxu0
      %v3386 = vadd.f32 %v3357, %v3385
      %3387 = vmatmul.bf16.gmra.mxu0 %v2999
      %v3388 = vpop.f32.mrf.mxu0
      %v3389 = vadd.f32 %v3360, %v3388
      %v3390 = vpop.f32.mrf.mxu0
      %v3391 = vadd.f32 %v3362, %v3390
      %3392 = vdwg.mxu0
      %3393 = vmatpush.bf16.msra.mxu0 %v3253
      %3394 = vmatpush.bf16.msra.mxu0 %v3252
      %3395 = vmatpush.bf16.msra.mxu0 %v3251
      %3396 = vmatpush.bf16.msra.mxu0 %v3250
      %3397 = vmatpush.bf16.msra.mxu0 %v3249
      %3398 = vmatpush.bf16.msra.mxu0 %v3248
      %3399 = vmatpush.bf16.msra.mxu0 %v3247
      %3400 = vmatpush.bf16.msra.mxu0 %v3246
      %3401 = vmatmul.bf16.gmra.mxu0 %v2985
      %v3402 = vpop.f32.mrf.mxu0
      %v3403 = vadd.f32 %v3374, %v3402
      %v3404 = vpop.f32.mrf.mxu0
      %v3405 = vadd.f32 %v3376, %v3404
      %3406 = vmatmul.bf16.gmra.mxu0 %v2990
      %v3407 = vpop.f32.mrf.mxu0
      %v3408 = vadd.f32 %v3379, %v3407
      %v3409 = vpop.f32.mrf.mxu0
      %v3410 = vadd.f32 %v3381, %v3409
      %3411 = vmatmul.bf16.gmra.mxu0 %v2995
      %v3412 = vpop.f32.mrf.mxu0
      %v3413 = vadd.f32 %v3384, %v3412
      %v3414 = vpop.f32.mrf.mxu0
      %v3415 = vadd.f32 %v3386, %v3414
      %3416 = vmatmul.bf16.gmra.mxu0 %v3000
      %v3417 = vpop.f32.mrf.mxu0
      %v3418 = vadd.f32 %v3389, %v3417
      %v3419 = vpop.f32.mrf.mxu0
      %v3420 = vadd.f32 %v3391, %v3419
      %3421 = vdwg.mxu0
      %3422 = vmatpush.bf16.msra.mxu0 0
      %3423 = vmatpush.bf16.msra.mxu0 0
      %3424 = vmatpush.bf16.msra.mxu0 0
      %3425 = vmatpush.bf16.msra.mxu0 0
      %3426 = vmatpush.bf16.msra.mxu0 %v3257
      %3427 = vmatpush.bf16.msra.mxu0 %v3256
      %3428 = vmatpush.bf16.msra.mxu0 %v3255
      %3429 = vmatpush.bf16.msra.mxu0 %v3254
      %3430 = vmatmul.bf16.gmra.mxu0 %v3295
      %v3431 = vpop.f32.mrf.mxu0
      %v3432 = vadd.f32 %v3403, %v3431
      %v3433 = vpop.f32.mrf.mxu0
      %v3434 = vadd.f32 %v3405, %v3433
      %3435 = vmatmul.bf16.gmra.mxu0 %v3298
      %v3436 = vpop.f32.mrf.mxu0
      %v3437 = vadd.f32 %v3408, %v3436
      %v3438 = vpop.f32.mrf.mxu0
      %v3439 = vadd.f32 %v3410, %v3438
      %3440 = vmatmul.bf16.gmra.mxu0 %v3301
      %v3441 = vpop.f32.mrf.mxu0
      %v3442 = vadd.f32 %v3413, %v3441
      %v3443 = vpop.f32.mrf.mxu0
      %v3444 = vadd.f32 %v3415, %v3443
      %3445 = vmatmul.bf16.gmra.mxu0 %v3304
      %v3446 = vpop.f32.mrf.mxu0
      %v3447 = vadd.f32 %v3418, %v3446
      %v3448 = vpop.f32.mrf.mxu0
      %v3449 = vadd.f32 %v3420, %v3448
      %3450 = vdwg.mxu0
      %3451 = vst.msk [vmem:[%s332] sm:$0xff] %vm722, %v3432
      %3452 = vst.msk [vmem:[%s332 + $0x8] sm:$0xff] %vm722, %v3434
      %3453 = vst.msk [vmem:[%s332 + $0x10] sm:$0xff] %vm722, %v3437
      %3454 = vst.msk [vmem:[%s332 + $0x18] sm:$0xff] %vm722, %v3439
      %3455 = vst.msk [vmem:[%s332 + $0x20] sm:$0xff] %vm722, %v3442
      %3456 = vst.msk [vmem:[%s332 + $0x28] sm:$0xff] %vm722, %v3444
      %3457 = vst.msk [vmem:[%s332 + $0x30] sm:$0xff] %vm722, %v3447
      %3458 = vst.msk [vmem:[%s332 + $0x38] sm:$0xff] %vm722, %v3449
      %p3459 = scmp.lt.s32.totalorder %s20, 1
      %s3460 = scalar_select %p3459, %s20, 1
      %s3461 = smul.addr %s3460, 8
      %s3462 = smul.addr %s3461, 8
      %s3463 = scalar_lea.vmem %s9, %s3462
      // Predicated region
      $region57: #{decoder_forward_pallas.1} parent=55 // pred_check
        %p3464 = pneg %p232
      $region58: #{decoder_forward_pallas.1} parent=55 // pred_check_branch
        %3466 = sbr.rel (%p3464) target = $region60
      $region59: #{decoder_forward_pallas.1} parent=55 // pred_region
        _
      $region60: #{decoder_forward_pallas.1} parent=55 // pred_fallthru
        _
    $region56: #{decoder_forward_pallas.1} parent=5 // pred_fallthru
      _
    %p3467 = scmp.le.s32.totalorder 2, %s15
    // Predicated region
    $region61: #{decoder_forward_pallas.1} parent=5 // pred_check
      %p3468 = pneg %p3467
    $region62: #{decoder_forward_pallas.1} parent=5 // pred_check_branch
      %3470 = sbr.rel (%p3468) target = $region64
    $region63: #{decoder_forward_pallas.1} parent=5 // pred_region
      %s3471 = ssub.s32 %s15, 2
      // Predicated region
      $region65: #{decoder_forward_pallas.1} parent=63 // pred_check
        %p3472 = pneg %p238
      $region66: #{decoder_forward_pallas.1} parent=63 // pred_check_branch
        %3474 = sbr.rel (%p3472) target = $region68
      $region67: #{decoder_forward_pallas.1} parent=63 // pred_region
        %p3475 = scmp.lt.s32.totalorder %s21, 1
        %s3476 = scalar_select %p3475, %s21, 1
        %s3477 = smul.addr %s3476, 8
        %s3478 = smul.addr %s3477, 8
        %s3479 = scalar_lea.vmem %s9, %s3478
      $region68: #{decoder_forward_pallas.1} parent=63 // pred_fallthru
        _
    $region64: #{decoder_forward_pallas.1} parent=5 // pred_fallthru
      _
  $region6: #{decoder_forward_pallas.1} parent=0 // loop_footer
    %s19 = sadd.s32 1, %s15
  $region7: #{decoder_forward_pallas.1} parent=0 // loop_footer_branch
    %14 = sbr.rel target = $region3
  $region8: #{decoder_forward_pallas.1} parent=0 // loop_exit
    _

</llo_original>
